<compile_context>
chip_gen: v6e
topology: v6e:2x2x1
jax: 0.10.0
libtpu: 0.0.40
codegen_flags: <defaults>
</compile_context>

<pallas_src>
import jax
import jax.numpy as jnp
from jax.experimental import pallas as pl
from jax.experimental.pallas import tpu as pltpu


def _reflect_edges(pad_ref, H, W):
    """Fill the 1-pixel reflect halo of pad_ref.

    Assumes the (H, W) center pad_ref[1:H+1, 1:W+1, :] was already written.
    """
    # Left / right columns: reflect(-1) -> 1, reflect(W) -> W-2.
    pad_ref[1:H + 1, 0:1, :] = pad_ref[1:H + 1, 2:3, :]
    pad_ref[1:H + 1, W + 1:W + 2, :] = pad_ref[1:H + 1, W - 1:W, :]
    # Top / bottom rows (full width, so the four corners come along for free).
    pad_ref[0:1, :, :] = pad_ref[2:3, :, :]
    pad_ref[H + 1:H + 2, :, :] = pad_ref[H - 1:H, :, :]


def _conv3x3_im2col(pad_ref, patches_ref, w_mat, bias):
    """ReLU(conv3x3(pad) + bias) as ONE MXU dot.

    pad_ref     : (H+2, W+2, Cin)  VMEM, reflect-padded input
    patches_ref : (H, W, 9*Cin)    VMEM scratch for im2col patches
    w_mat       : (9*Cin, Cout)    weights, (kh, kw, ci) flattened on axis 0
    bias        : (1, 1, Cout)
    returns     : (H, W, Cout) float32
    """
    Hp, Wp, cin = pad_ref.shape
    H, W = Hp - 2, Wp - 2
    # Stage the 9 shifted taps side by side on the channel (lane) axis so the
    # whole (kh, kw, ci) contraction is a single K = 9*Cin matmul.
    for kh in range(3):
        for kw in range(3):
            k = kh * 3 + kw
            patches_ref[:, :, k * cin:(k + 1) * cin] = (
                pad_ref[kh:kh + H, kw:kw + W, :])
    patches = patches_ref[...]
    acc = jax.lax.dot_general(
        patches, w_mat,
        dimension_numbers=(((2,), (0,)), ((), ())),
        preferred_element_type=jnp.float32)
    return jnp.maximum(acc + bias, 0.0)


def _merge_kernel(x1_ref, x2_ref, w1_ref, b1_ref, w2_ref, b2_ref, o_ref,
                  pad_ref, patches_ref):
    """One batch element, fully fused Merge forward.

    x1_ref, x2_ref : (1, H, W, C)        VMEM
    w1_ref         : (9*2C, 2C)          VMEM (im2col weight matrix, conv1)
    b1_ref         : (1, 1, 2C)          VMEM
    w2_ref         : (9*2C, C)           VMEM (im2col weight matrix, conv2)
    b2_ref         : (1, 1, C)           VMEM
    o_ref          : (1, H, W, C)        VMEM
    pad_ref        : (H+2, W+2, 2C) f32  scratch (reused for x and y halos)
    patches_ref    : (H, W, 9*2C)   f32  scratch (reused by both convs)
    """
    H = o_ref.shape[1]
    W = o_ref.shape[2]
    C = x1_ref.shape[3]
    C2 = 2 * C

    # --- fused torch.cat + reflect pad of the input, entirely in VMEM ------
    pad_ref[1:H + 1, 1:W + 1, 0:C] = x1_ref[0].astype(jnp.float32)
    pad_ref[1:H + 1, 1:W + 1, C:C2] = x2_ref[0].astype(jnp.float32)
    _reflect_edges(pad_ref, H, W)

    # --- ResBlock (n_convs=1): y = x + ReLU(conv1(x) + b1) -----------------
    x_center = pad_ref[1:H + 1, 1:W + 1, :]            # read before reuse
    h1 = _conv3x3_im2col(pad_ref, patches_ref, w1_ref[...], b1_ref[...])
    y = h1 + x_center                                   # (H, W, 2C) f32

    # --- reflect pad of the intermediate (never touches HBM) ---------------
    pad_ref[1:H + 1, 1:W + 1, :] = y
    _reflect_edges(pad_ref, H, W)

    # --- out Conv: ReLU(conv2(y) + b2) --------------------------------------
    out = _conv3x3_im2col(pad_ref, patches_ref, w2_ref[...], b2_ref[...])
    o_ref[0] = out.astype(o_ref.dtype)


def merge_forward(x1, x2, w1, b1, w2, b2):
    """Merge.forward.

    x1, x2 : (N, C, H, W)  NCHW (PyTorch convention)
    w1     : (3, 3, 2C, 2C) HWIO,  b1: (2C,)
    w2     : (3, 3, 2C, C)  HWIO,  b2: (C,)
    """
    N, C, H, W = x1.shape
    C2 = 2 * C
    assert w1.shape == (3, 3, C2, C2) and w2.shape == (3, 3, C2, C)

    # NCHW -> NHWC so channels sit on the contraction (lane) axis in-kernel.
    x1_nhwc = jnp.transpose(x1, (0, 2, 3, 1))
    x2_nhwc = jnp.transpose(x2, (0, 2, 3, 1))

    # HWIO -> im2col weight matrices: row index = (kh*3 + kw)*Cin + ci.
    w1m = w1.reshape(9 * C2, C2)
    w2m = w2.reshape(9 * C2, C)
    b1r = b1.reshape(1, 1, C2)
    b2r = b2.reshape(1, 1, C)

    # Advisory cost / VMEM sizing.
    flops = 2 * N * H * W * 9 * C2 * (C2 + C)
    bytes_accessed = 4 * (3 * N * H * W * C            # x1, x2 in; out
                          + 9 * C2 * (C2 + C) + C2 + C)  # params
    vmem_need = 4 * (2 * (2 * H * W * C)                # x1/x2 blocks, dbl-buf
                     + 2 * (H * W * C)                  # out block, dbl-buf
                     + (H + 2) * (W + 2) * C2           # pad scratch
                     + 9 * C2 * H * W                   # patches scratch
                     + 9 * C2 * (C2 + C) + 2 * (C2 + C))
    vmem_limit = min(64 * 1024 * 1024, max(8 * 1024 * 1024, 2 * vmem_need))

    out_nhwc = pl.pallas_call(
        _merge_kernel,
        out_shape=jax.ShapeDtypeStruct((N, H, W, C), x1.dtype),
        grid=(N,),
        in_specs=[
            pl.BlockSpec((1, H, W, C), lambda n: (n, 0, 0, 0)),
            pl.BlockSpec((1, H, W, C), lambda n: (n, 0, 0, 0)),
            pl.BlockSpec((9 * C2, C2), lambda n: (0, 0)),
            pl.BlockSpec((1, 1, C2), lambda n: (0, 0, 0)),
            pl.BlockSpec((9 * C2, C), lambda n: (0, 0)),
            pl.BlockSpec((1, 1, C), lambda n: (0, 0, 0)),
        ],
        out_specs=pl.BlockSpec((1, H, W, C), lambda n: (n, 0, 0, 0)),
        scratch_shapes=[
            pltpu.VMEM((H + 2, W + 2, C2), jnp.float32),   # shared halo buffer
            pltpu.VMEM((H, W, 9 * C2), jnp.float32),        # shared im2col buf
        ],
        compiler_params=pltpu.CompilerParams(
            dimension_semantics=("parallel",),
            vmem_limit_bytes=int(vmem_limit)),
        cost_estimate=pl.CostEstimate(
            flops=flops, transcendentals=0, bytes_accessed=bytes_accessed),
    )(x1_nhwc, x2_nhwc, w1m, b1r, w2m, b2r)

    return jnp.transpose(out_nhwc, (0, 3, 1, 2))       # -> NCHW (N, C, H, W)


# ---------------------------------------------------------------------------
# Pure-JAX reference (for verification)
# ---------------------------------------------------------------------------
def _conv3x3_ref(x_nhwc, w, b):
    xpad = jnp.pad(x_nhwc, ((0, 0), (1, 1), (1, 1), (0, 0)), mode="reflect")
    y = jax.lax.conv_general_dilated(
        xpad, w, window_strides=(1, 1), padding="VALID",
        dimension_numbers=("NHWC", "HWIO", "NHWC"))
    return jax.nn.relu(y + b[None, None, None, :])


def merge_ref(x1, x2, w1, b1, w2, b2):
    x = jnp.concatenate([x1, x2], axis=1)
    x = jnp.transpose(x, (0, 2, 3, 1))
    x = x + _conv3x3_ref(x, w1, b1)
    out = _conv3x3_ref(x, w2, b2)
    return jnp.transpose(out, (0, 3, 1, 2))


if __name__ == "__main__":
    # Small deterministic shapes: Merge(channels=4) on (2, 4, 16, 16) inputs.
    N, C, H, W = 2, 4, 16, 16
    C2 = 2 * C

    key = jax.random.PRNGKey(0)
    k_x1, k_x2, k_w1, k_b1, k_w2, k_b2 = jax.random.split(key, 6)

    x1 = jax.random.normal(k_x1, (N, C, H, W), jnp.float32)
    x2 = jax.random.normal(k_x2, (N, C, H, W), jnp.float32)

    # Parameters stored directly as HWIO (kh, kw, Cin, Cout).
    w1 = jax.random.normal(k_w1, (3, 3, C2, C2), jnp.float32) * 0.1
    b1 = jax.random.normal(k_b1, (C2,), jnp.float32) * 0.1
    w2 = jax.random.normal(k_w2, (3, 3, C2, C), jnp.float32) * 0.1
    b2 = jax.random.normal(k_b2, (C,), jnp.float32) * 0.1

    out = jax.jit(merge_forward)(x1, x2, w1, b1, w2, b2)
    out = jax.block_until_ready(out)

    ref = jax.block_until_ready(merge_ref(x1, x2, w1, b1, w2, b2))

    assert out.shape == (N, C, H, W), out.shape
    assert jnp.allclose(out, ref, atol=1e-4, rtol=1e-4), (
        float(jnp.max(jnp.abs(out - ref))))

    print("KERNEL_OK")
</pallas_src>

<mosaic_0001>
module attributes {stable_mosaic.version = 11 : i64} {
  func.func @_merge_kernel(%arg0: i32, %arg1: memref<1x16x16x4xf32, #tpu.memory_space<vmem>>, %arg2: memref<1x16x16x4xf32, #tpu.memory_space<vmem>>, %arg3: memref<72x8xf32, #tpu.memory_space<vmem>>, %arg4: memref<1x1x8xf32, #tpu.memory_space<vmem>>, %arg5: memref<72x4xf32, #tpu.memory_space<vmem>>, %arg6: memref<1x1x4xf32, #tpu.memory_space<vmem>>, %arg7: memref<1x16x16x4xf32, #tpu.memory_space<vmem>>, %arg8: memref<18x18x8xf32, #tpu.memory_space<vmem>>, %arg9: memref<16x16x72xf32, #tpu.memory_space<vmem>>) attributes {dimension_semantics = [#tpu.dimension_semantics<parallel>], iteration_bounds = array<i64: 2>, scalar_prefetch = 0 : i64, scratch_operands = 2 : i64, tpu.core_type = #tpu.core_type<tc>, window_params = [{transform_indices = @transform_0, window_bounds = array<i64: 1, 16, 16, 4>}, {transform_indices = @transform_1, window_bounds = array<i64: 1, 16, 16, 4>}, {pipeline_mode = #tpu.pipeline_mode<synchronous>, transform_indices = @transform_2, window_bounds = array<i64: 72, 8>}, {pipeline_mode = #tpu.pipeline_mode<synchronous>, transform_indices = @transform_3, window_bounds = array<i64: 1, 1, 8>}, {pipeline_mode = #tpu.pipeline_mode<synchronous>, transform_indices = @transform_4, window_bounds = array<i64: 72, 4>}, {pipeline_mode = #tpu.pipeline_mode<synchronous>, transform_indices = @transform_5, window_bounds = array<i64: 1, 1, 4>}, {transform_indices = @transform_6, window_bounds = array<i64: 1, 16, 16, 4>}]} {
    %c0 = arith.constant 0 : index
    %c0_0 = arith.constant 0 : index
    %c0_1 = arith.constant 0 : index
    %c0_2 = arith.constant 0 : index
    %0 = vector.load %arg1[%c0, %c0_0, %c0_1, %c0_2] : memref<1x16x16x4xf32, #tpu.memory_space<vmem>>, vector<1x16x16x4xf32>
    %1 = vector.shape_cast %0 : vector<1x16x16x4xf32> to vector<16x16x4xf32>
    %c1 = arith.constant 1 : index
    %c1_3 = arith.constant 1 : index
    %c0_4 = arith.constant 0 : index
    %2 = vector.load %arg8[%c1, %c1_3, %c0_4] : memref<18x18x8xf32, #tpu.memory_space<vmem>>, vector<16x16x4xf32>
    tpu.vector_store %arg8[%c1, %c1_3, %c0_4], %1 {strides = array<i32>} : memref<18x18x8xf32, #tpu.memory_space<vmem>>, vector<16x16x4xf32>,
    %c0_5 = arith.constant 0 : index
    %c0_6 = arith.constant 0 : index
    %c0_7 = arith.constant 0 : index
    %c0_8 = arith.constant 0 : index
    %3 = vector.load %arg2[%c0_5, %c0_6, %c0_7, %c0_8] : memref<1x16x16x4xf32, #tpu.memory_space<vmem>>, vector<1x16x16x4xf32>
    %4 = vector.shape_cast %3 : vector<1x16x16x4xf32> to vector<16x16x4xf32>
    %c1_9 = arith.constant 1 : index
    %c1_10 = arith.constant 1 : index
    %c4 = arith.constant 4 : index
    %5 = vector.load %arg8[%c1_9, %c1_10, %c4] : memref<18x18x8xf32, #tpu.memory_space<vmem>>, vector<16x16x4xf32>
    tpu.vector_store %arg8[%c1_9, %c1_10, %c4], %4 {strides = array<i32>} : memref<18x18x8xf32, #tpu.memory_space<vmem>>, vector<16x16x4xf32>,
    %c1_11 = arith.constant 1 : index
    %c2 = arith.constant 2 : index
    %c0_12 = arith.constant 0 : index
    %6 = vector.load %arg8[%c1_11, %c2, %c0_12] : memref<18x18x8xf32, #tpu.memory_space<vmem>>, vector<16x1x8xf32>
    %c1_13 = arith.constant 1 : index
    %c0_14 = arith.constant 0 : index
    %c0_15 = arith.constant 0 : index
    %7 = vector.load %arg8[%c1_13, %c0_14, %c0_15] : memref<18x18x8xf32, #tpu.memory_space<vmem>>, vector<16x1x8xf32>
    tpu.vector_store %arg8[%c1_13, %c0_14, %c0_15], %6 {strides = array<i32>} : memref<18x18x8xf32, #tpu.memory_space<vmem>>, vector<16x1x8xf32>,
    %c1_16 = arith.constant 1 : index
    %c15 = arith.constant 15 : index
    %c0_17 = arith.constant 0 : index
    %8 = vector.load %arg8[%c1_16, %c15, %c0_17] : memref<18x18x8xf32, #tpu.memory_space<vmem>>, vector<16x1x8xf32>
    %c1_18 = arith.constant 1 : index
    %c17 = arith.constant 17 : index
    %c0_19 = arith.constant 0 : index
    %9 = vector.load %arg8[%c1_18, %c17, %c0_19] : memref<18x18x8xf32, #tpu.memory_space<vmem>>, vector<16x1x8xf32>
    tpu.vector_store %arg8[%c1_18, %c17, %c0_19], %8 {strides = array<i32>} : memref<18x18x8xf32, #tpu.memory_space<vmem>>, vector<16x1x8xf32>,
    %c2_20 = arith.constant 2 : index
    %c0_21 = arith.constant 0 : index
    %c0_22 = arith.constant 0 : index
    %10 = vector.load %arg8[%c2_20, %c0_21, %c0_22] : memref<18x18x8xf32, #tpu.memory_space<vmem>>, vector<1x18x8xf32>
    %c0_23 = arith.constant 0 : index
    %c0_24 = arith.constant 0 : index
    %c0_25 = arith.constant 0 : index
    %11 = vector.load %arg8[%c0_23, %c0_24, %c0_25] : memref<18x18x8xf32, #tpu.memory_space<vmem>>, vector<1x18x8xf32>
    tpu.vector_store %arg8[%c0_23, %c0_24, %c0_25], %10 {strides = array<i32>} : memref<18x18x8xf32, #tpu.memory_space<vmem>>, vector<1x18x8xf32>,
    %c15_26 = arith.constant 15 : index
    %c0_27 = arith.constant 0 : index
    %c0_28 = arith.constant 0 : index
    %12 = vector.load %arg8[%c15_26, %c0_27, %c0_28] : memref<18x18x8xf32, #tpu.memory_space<vmem>>, vector<1x18x8xf32>
    %c17_29 = arith.constant 17 : index
    %c0_30 = arith.constant 0 : index
    %c0_31 = arith.constant 0 : index
    %13 = vector.load %arg8[%c17_29, %c0_30, %c0_31] : memref<18x18x8xf32, #tpu.memory_space<vmem>>, vector<1x18x8xf32>
    tpu.vector_store %arg8[%c17_29, %c0_30, %c0_31], %12 {strides = array<i32>} : memref<18x18x8xf32, #tpu.memory_space<vmem>>, vector<1x18x8xf32>,
    %c1_32 = arith.constant 1 : index
    %c1_33 = arith.constant 1 : index
    %c0_34 = arith.constant 0 : index
    %14 = vector.load %arg8[%c1_32, %c1_33, %c0_34] : memref<18x18x8xf32, #tpu.memory_space<vmem>>, vector<16x16x8xf32>
    %c0_35 = arith.constant 0 : index
    %c0_36 = arith.constant 0 : index
    %15 = vector.load %arg3[%c0_35, %c0_36] : memref<72x8xf32, #tpu.memory_space<vmem>>, vector<72x8xf32>
    %c0_37 = arith.constant 0 : index
    %c0_38 = arith.constant 0 : index
    %c0_39 = arith.constant 0 : index
    %16 = vector.load %arg4[%c0_37, %c0_38, %c0_39] : memref<1x1x8xf32, #tpu.memory_space<vmem>>, vector<1x1x8xf32>
    %c0_40 = arith.constant 0 : index
    %c0_41 = arith.constant 0 : index
    %c0_42 = arith.constant 0 : index
    %17 = vector.load %arg8[%c0_40, %c0_41, %c0_42] : memref<18x18x8xf32, #tpu.memory_space<vmem>>, vector<16x16x8xf32>
    %c0_43 = arith.constant 0 : index
    %c0_44 = arith.constant 0 : index
    %c0_45 = arith.constant 0 : index
    %18 = vector.load %arg9[%c0_43, %c0_44, %c0_45] : memref<16x16x72xf32, #tpu.memory_space<vmem>>, vector<16x16x8xf32>
    tpu.vector_store %arg9[%c0_43, %c0_44, %c0_45], %17 {strides = array<i32>} : memref<16x16x72xf32, #tpu.memory_space<vmem>>, vector<16x16x8xf32>,
    %c0_46 = arith.constant 0 : index
    %c1_47 = arith.constant 1 : index
    %c0_48 = arith.constant 0 : index
    %19 = vector.load %arg8[%c0_46, %c1_47, %c0_48] : memref<18x18x8xf32, #tpu.memory_space<vmem>>, vector<16x16x8xf32>
    %c0_49 = arith.constant 0 : index
    %c0_50 = arith.constant 0 : index
    %c8 = arith.constant 8 : index
    %20 = vector.load %arg9[%c0_49, %c0_50, %c8] : memref<16x16x72xf32, #tpu.memory_space<vmem>>, vector<16x16x8xf32>
    tpu.vector_store %arg9[%c0_49, %c0_50, %c8], %19 {strides = array<i32>} : memref<16x16x72xf32, #tpu.memory_space<vmem>>, vector<16x16x8xf32>,
    %c0_51 = arith.constant 0 : index
    %c2_52 = arith.constant 2 : index
    %c0_53 = arith.constant 0 : index
    %21 = vector.load %arg8[%c0_51, %c2_52, %c0_53] : memref<18x18x8xf32, #tpu.memory_space<vmem>>, vector<16x16x8xf32>
    %c0_54 = arith.constant 0 : index
    %c0_55 = arith.constant 0 : index
    %c16 = arith.constant 16 : index
    %22 = vector.load %arg9[%c0_54, %c0_55, %c16] : memref<16x16x72xf32, #tpu.memory_space<vmem>>, vector<16x16x8xf32>
    tpu.vector_store %arg9[%c0_54, %c0_55, %c16], %21 {strides = array<i32>} : memref<16x16x72xf32, #tpu.memory_space<vmem>>, vector<16x16x8xf32>,
    %c1_56 = arith.constant 1 : index
    %c0_57 = arith.constant 0 : index
    %c0_58 = arith.constant 0 : index
    %23 = vector.load %arg8[%c1_56, %c0_57, %c0_58] : memref<18x18x8xf32, #tpu.memory_space<vmem>>, vector<16x16x8xf32>
    %c0_59 = arith.constant 0 : index
    %c0_60 = arith.constant 0 : index
    %c24 = arith.constant 24 : index
    %24 = vector.load %arg9[%c0_59, %c0_60, %c24] : memref<16x16x72xf32, #tpu.memory_space<vmem>>, vector<16x16x8xf32>
    tpu.vector_store %arg9[%c0_59, %c0_60, %c24], %23 {strides = array<i32>} : memref<16x16x72xf32, #tpu.memory_space<vmem>>, vector<16x16x8xf32>,
    %c1_61 = arith.constant 1 : index
    %c1_62 = arith.constant 1 : index
    %c0_63 = arith.constant 0 : index
    %25 = vector.load %arg8[%c1_61, %c1_62, %c0_63] : memref<18x18x8xf32, #tpu.memory_space<vmem>>, vector<16x16x8xf32>
    %c0_64 = arith.constant 0 : index
    %c0_65 = arith.constant 0 : index
    %c32 = arith.constant 32 : index
    %26 = vector.load %arg9[%c0_64, %c0_65, %c32] : memref<16x16x72xf32, #tpu.memory_space<vmem>>, vector<16x16x8xf32>
    tpu.vector_store %arg9[%c0_64, %c0_65, %c32], %25 {strides = array<i32>} : memref<16x16x72xf32, #tpu.memory_space<vmem>>, vector<16x16x8xf32>,
    %c1_66 = arith.constant 1 : index
    %c2_67 = arith.constant 2 : index
    %c0_68 = arith.constant 0 : index
    %27 = vector.load %arg8[%c1_66, %c2_67, %c0_68] : memref<18x18x8xf32, #tpu.memory_space<vmem>>, vector<16x16x8xf32>
    %c0_69 = arith.constant 0 : index
    %c0_70 = arith.constant 0 : index
    %c40 = arith.constant 40 : index
    %28 = vector.load %arg9[%c0_69, %c0_70, %c40] : memref<16x16x72xf32, #tpu.memory_space<vmem>>, vector<16x16x8xf32>
    tpu.vector_store %arg9[%c0_69, %c0_70, %c40], %27 {strides = array<i32>} : memref<16x16x72xf32, #tpu.memory_space<vmem>>, vector<16x16x8xf32>,
    %c2_71 = arith.constant 2 : index
    %c0_72 = arith.constant 0 : index
    %c0_73 = arith.constant 0 : index
    %29 = vector.load %arg8[%c2_71, %c0_72, %c0_73] : memref<18x18x8xf32, #tpu.memory_space<vmem>>, vector<16x16x8xf32>
    %c0_74 = arith.constant 0 : index
    %c0_75 = arith.constant 0 : index
    %c48 = arith.constant 48 : index
    %30 = vector.load %arg9[%c0_74, %c0_75, %c48] : memref<16x16x72xf32, #tpu.memory_space<vmem>>, vector<16x16x8xf32>
    tpu.vector_store %arg9[%c0_74, %c0_75, %c48], %29 {strides = array<i32>} : memref<16x16x72xf32, #tpu.memory_space<vmem>>, vector<16x16x8xf32>,
    %c2_76 = arith.constant 2 : index
    %c1_77 = arith.constant 1 : index
    %c0_78 = arith.constant 0 : index
    %31 = vector.load %arg8[%c2_76, %c1_77, %c0_78] : memref<18x18x8xf32, #tpu.memory_space<vmem>>, vector<16x16x8xf32>
    %c0_79 = arith.constant 0 : index
    %c0_80 = arith.constant 0 : index
    %c56 = arith.constant 56 : index
    %32 = vector.load %arg9[%c0_79, %c0_80, %c56] : memref<16x16x72xf32, #tpu.memory_space<vmem>>, vector<16x16x8xf32>
    tpu.vector_store %arg9[%c0_79, %c0_80, %c56], %31 {strides = array<i32>} : memref<16x16x72xf32, #tpu.memory_space<vmem>>, vector<16x16x8xf32>,
    %c2_81 = arith.constant 2 : index
    %c2_82 = arith.constant 2 : index
    %c0_83 = arith.constant 0 : index
    %33 = vector.load %arg8[%c2_81, %c2_82, %c0_83] : memref<18x18x8xf32, #tpu.memory_space<vmem>>, vector<16x16x8xf32>
    %c0_84 = arith.constant 0 : index
    %c0_85 = arith.constant 0 : index
    %c64 = arith.constant 64 : index
    %34 = vector.load %arg9[%c0_84, %c0_85, %c64] : memref<16x16x72xf32, #tpu.memory_space<vmem>>, vector<16x16x8xf32>
    tpu.vector_store %arg9[%c0_84, %c0_85, %c64], %33 {strides = array<i32>} : memref<16x16x72xf32, #tpu.memory_space<vmem>>, vector<16x16x8xf32>,
    %c0_86 = arith.constant 0 : index
    %c0_87 = arith.constant 0 : index
    %c0_88 = arith.constant 0 : index
    %35 = vector.load %arg9[%c0_86, %c0_87, %c0_88] : memref<16x16x72xf32, #tpu.memory_space<vmem>>, vector<16x16x72xf32>
    %cst = arith.constant dense<0.000000e+00> : vector<16x16x8xf32>
    %36 = tpu.matmul %35, %15, %cst {dimension_numbers = #tpu.dot_dimension_numbers<[2], [0], [0, 1], [1], [0, 0, 0, 1, 1, 1], [], []>} : vector<16x16x72xf32>, vector<72x8xf32>, vector<16x16x8xf32> -> vector<16x16x8xf32>
    %37 = vector.broadcast %16 : vector<1x1x8xf32> to vector<16x16x8xf32>
    %38 = arith.addf %36, %37 : vector<16x16x8xf32>
    %cst_89 = arith.constant 0.000000e+00 : f32
    %39 = vector.broadcast %cst_89 : f32 to vector<16x16x8xf32>
    %40 = arith.maximumf %38, %39 : vector<16x16x8xf32>
    %41 = arith.addf %40, %14 : vector<16x16x8xf32>
    %c1_90 = arith.constant 1 : index
    %c1_91 = arith.constant 1 : index
    %c0_92 = arith.constant 0 : index
    %42 = vector.load %arg8[%c1_90, %c1_91, %c0_92] : memref<18x18x8xf32, #tpu.memory_space<vmem>>, vector<16x16x8xf32>
    tpu.vector_store %arg8[%c1_90, %c1_91, %c0_92], %41 {strides = array<i32>} : memref<18x18x8xf32, #tpu.memory_space<vmem>>, vector<16x16x8xf32>,
    %c1_93 = arith.constant 1 : index
    %c2_94 = arith.constant 2 : index
    %c0_95 = arith.constant 0 : index
    %43 = vector.load %arg8[%c1_93, %c2_94, %c0_95] : memref<18x18x8xf32, #tpu.memory_space<vmem>>, vector<16x1x8xf32>
    %c1_96 = arith.constant 1 : index
    %c0_97 = arith.constant 0 : index
    %c0_98 = arith.constant 0 : index
    %44 = vector.load %arg8[%c1_96, %c0_97, %c0_98] : memref<18x18x8xf32, #tpu.memory_space<vmem>>, vector<16x1x8xf32>
    tpu.vector_store %arg8[%c1_96, %c0_97, %c0_98], %43 {strides = array<i32>} : memref<18x18x8xf32, #tpu.memory_space<vmem>>, vector<16x1x8xf32>,
    %c1_99 = arith.constant 1 : index
    %c15_100 = arith.constant 15 : index
    %c0_101 = arith.constant 0 : index
    %45 = vector.load %arg8[%c1_99, %c15_100, %c0_101] : memref<18x18x8xf32, #tpu.memory_space<vmem>>, vector<16x1x8xf32>
    %c1_102 = arith.constant 1 : index
    %c17_103 = arith.constant 17 : index
    %c0_104 = arith.constant 0 : index
    %46 = vector.load %arg8[%c1_102, %c17_103, %c0_104] : memref<18x18x8xf32, #tpu.memory_space<vmem>>, vector<16x1x8xf32>
    tpu.vector_store %arg8[%c1_102, %c17_103, %c0_104], %45 {strides = array<i32>} : memref<18x18x8xf32, #tpu.memory_space<vmem>>, vector<16x1x8xf32>,
    %c2_105 = arith.constant 2 : index
    %c0_106 = arith.constant 0 : index
    %c0_107 = arith.constant 0 : index
    %47 = vector.load %arg8[%c2_105, %c0_106, %c0_107] : memref<18x18x8xf32, #tpu.memory_space<vmem>>, vector<1x18x8xf32>
    %c0_108 = arith.constant 0 : index
    %c0_109 = arith.constant 0 : index
    %c0_110 = arith.constant 0 : index
    %48 = vector.load %arg8[%c0_108, %c0_109, %c0_110] : memref<18x18x8xf32, #tpu.memory_space<vmem>>, vector<1x18x8xf32>
    tpu.vector_store %arg8[%c0_108, %c0_109, %c0_110], %47 {strides = array<i32>} : memref<18x18x8xf32, #tpu.memory_space<vmem>>, vector<1x18x8xf32>,
    %c15_111 = arith.constant 15 : index
    %c0_112 = arith.constant 0 : index
    %c0_113 = arith.constant 0 : index
    %49 = vector.load %arg8[%c15_111, %c0_112, %c0_113] : memref<18x18x8xf32, #tpu.memory_space<vmem>>, vector<1x18x8xf32>
    %c17_114 = arith.constant 17 : index
    %c0_115 = arith.constant 0 : index
    %c0_116 = arith.constant 0 : index
    %50 = vector.load %arg8[%c17_114, %c0_115, %c0_116] : memref<18x18x8xf32, #tpu.memory_space<vmem>>, vector<1x18x8xf32>
    tpu.vector_store %arg8[%c17_114, %c0_115, %c0_116], %49 {strides = array<i32>} : memref<18x18x8xf32, #tpu.memory_space<vmem>>, vector<1x18x8xf32>,
    %c0_117 = arith.constant 0 : index
    %c0_118 = arith.constant 0 : index
    %51 = vector.load %arg5[%c0_117, %c0_118] : memref<72x4xf32, #tpu.memory_space<vmem>>, vector<72x4xf32>
    %c0_119 = arith.constant 0 : index
    %c0_120 = arith.constant 0 : index
    %c0_121 = arith.constant 0 : index
    %52 = vector.load %arg6[%c0_119, %c0_120, %c0_121] : memref<1x1x4xf32, #tpu.memory_space<vmem>>, vector<1x1x4xf32>
    %c0_122 = arith.constant 0 : index
    %c0_123 = arith.constant 0 : index
    %c0_124 = arith.constant 0 : index
    %53 = vector.load %arg8[%c0_122, %c0_123, %c0_124] : memref<18x18x8xf32, #tpu.memory_space<vmem>>, vector<16x16x8xf32>
    %c0_125 = arith.constant 0 : index
    %c0_126 = arith.constant 0 : index
    %c0_127 = arith.constant 0 : index
    %54 = vector.load %arg9[%c0_125, %c0_126, %c0_127] : memref<16x16x72xf32, #tpu.memory_space<vmem>>, vector<16x16x8xf32>
    tpu.vector_store %arg9[%c0_125, %c0_126, %c0_127], %53 {strides = array<i32>} : memref<16x16x72xf32, #tpu.memory_space<vmem>>, vector<16x16x8xf32>,
    %c0_128 = arith.constant 0 : index
    %c1_129 = arith.constant 1 : index
    %c0_130 = arith.constant 0 : index
    %55 = vector.load %arg8[%c0_128, %c1_129, %c0_130] : memref<18x18x8xf32, #tpu.memory_space<vmem>>, vector<16x16x8xf32>
    %c0_131 = arith.constant 0 : index
    %c0_132 = arith.constant 0 : index
    %c8_133 = arith.constant 8 : index
    %56 = vector.load %arg9[%c0_131, %c0_132, %c8_133] : memref<16x16x72xf32, #tpu.memory_space<vmem>>, vector<16x16x8xf32>
    tpu.vector_store %arg9[%c0_131, %c0_132, %c8_133], %55 {strides = array<i32>} : memref<16x16x72xf32, #tpu.memory_space<vmem>>, vector<16x16x8xf32>,
    %c0_134 = arith.constant 0 : index
    %c2_135 = arith.constant 2 : index
    %c0_136 = arith.constant 0 : index
    %57 = vector.load %arg8[%c0_134, %c2_135, %c0_136] : memref<18x18x8xf32, #tpu.memory_space<vmem>>, vector<16x16x8xf32>
    %c0_137 = arith.constant 0 : index
    %c0_138 = arith.constant 0 : index
    %c16_139 = arith.constant 16 : index
    %58 = vector.load %arg9[%c0_137, %c0_138, %c16_139] : memref<16x16x72xf32, #tpu.memory_space<vmem>>, vector<16x16x8xf32>
    tpu.vector_store %arg9[%c0_137, %c0_138, %c16_139], %57 {strides = array<i32>} : memref<16x16x72xf32, #tpu.memory_space<vmem>>, vector<16x16x8xf32>,
    %c1_140 = arith.constant 1 : index
    %c0_141 = arith.constant 0 : index
    %c0_142 = arith.constant 0 : index
    %59 = vector.load %arg8[%c1_140, %c0_141, %c0_142] : memref<18x18x8xf32, #tpu.memory_space<vmem>>, vector<16x16x8xf32>
    %c0_143 = arith.constant 0 : index
    %c0_144 = arith.constant 0 : index
    %c24_145 = arith.constant 24 : index
    %60 = vector.load %arg9[%c0_143, %c0_144, %c24_145] : memref<16x16x72xf32, #tpu.memory_space<vmem>>, vector<16x16x8xf32>
    tpu.vector_store %arg9[%c0_143, %c0_144, %c24_145], %59 {strides = array<i32>} : memref<16x16x72xf32, #tpu.memory_space<vmem>>, vector<16x16x8xf32>,
    %c1_146 = arith.constant 1 : index
    %c1_147 = arith.constant 1 : index
    %c0_148 = arith.constant 0 : index
    %61 = vector.load %arg8[%c1_146, %c1_147, %c0_148] : memref<18x18x8xf32, #tpu.memory_space<vmem>>, vector<16x16x8xf32>
    %c0_149 = arith.constant 0 : index
    %c0_150 = arith.constant 0 : index
    %c32_151 = arith.constant 32 : index
    %62 = vector.load %arg9[%c0_149, %c0_150, %c32_151] : memref<16x16x72xf32, #tpu.memory_space<vmem>>, vector<16x16x8xf32>
    tpu.vector_store %arg9[%c0_149, %c0_150, %c32_151], %61 {strides = array<i32>} : memref<16x16x72xf32, #tpu.memory_space<vmem>>, vector<16x16x8xf32>,
    %c1_152 = arith.constant 1 : index
    %c2_153 = arith.constant 2 : index
    %c0_154 = arith.constant 0 : index
    %63 = vector.load %arg8[%c1_152, %c2_153, %c0_154] : memref<18x18x8xf32, #tpu.memory_space<vmem>>, vector<16x16x8xf32>
    %c0_155 = arith.constant 0 : index
    %c0_156 = arith.constant 0 : index
    %c40_157 = arith.constant 40 : index
    %64 = vector.load %arg9[%c0_155, %c0_156, %c40_157] : memref<16x16x72xf32, #tpu.memory_space<vmem>>, vector<16x16x8xf32>
    tpu.vector_store %arg9[%c0_155, %c0_156, %c40_157], %63 {strides = array<i32>} : memref<16x16x72xf32, #tpu.memory_space<vmem>>, vector<16x16x8xf32>,
    %c2_158 = arith.constant 2 : index
    %c0_159 = arith.constant 0 : index
    %c0_160 = arith.constant 0 : index
    %65 = vector.load %arg8[%c2_158, %c0_159, %c0_160] : memref<18x18x8xf32, #tpu.memory_space<vmem>>, vector<16x16x8xf32>
    %c0_161 = arith.constant 0 : index
    %c0_162 = arith.constant 0 : index
    %c48_163 = arith.constant 48 : index
    %66 = vector.load %arg9[%c0_161, %c0_162, %c48_163] : memref<16x16x72xf32, #tpu.memory_space<vmem>>, vector<16x16x8xf32>
    tpu.vector_store %arg9[%c0_161, %c0_162, %c48_163], %65 {strides = array<i32>} : memref<16x16x72xf32, #tpu.memory_space<vmem>>, vector<16x16x8xf32>,
    %c2_164 = arith.constant 2 : index
    %c1_165 = arith.constant 1 : index
    %c0_166 = arith.constant 0 : index
    %67 = vector.load %arg8[%c2_164, %c1_165, %c0_166] : memref<18x18x8xf32, #tpu.memory_space<vmem>>, vector<16x16x8xf32>
    %c0_167 = arith.constant 0 : index
    %c0_168 = arith.constant 0 : index
    %c56_169 = arith.constant 56 : index
    %68 = vector.load %arg9[%c0_167, %c0_168, %c56_169] : memref<16x16x72xf32, #tpu.memory_space<vmem>>, vector<16x16x8xf32>
    tpu.vector_store %arg9[%c0_167, %c0_168, %c56_169], %67 {strides = array<i32>} : memref<16x16x72xf32, #tpu.memory_space<vmem>>, vector<16x16x8xf32>,
    %c2_170 = arith.constant 2 : index
    %c2_171 = arith.constant 2 : index
    %c0_172 = arith.constant 0 : index
    %69 = vector.load %arg8[%c2_170, %c2_171, %c0_172] : memref<18x18x8xf32, #tpu.memory_space<vmem>>, vector<16x16x8xf32>
    %c0_173 = arith.constant 0 : index
    %c0_174 = arith.constant 0 : index
    %c64_175 = arith.constant 64 : index
    %70 = vector.load %arg9[%c0_173, %c0_174, %c64_175] : memref<16x16x72xf32, #tpu.memory_space<vmem>>, vector<16x16x8xf32>
    tpu.vector_store %arg9[%c0_173, %c0_174, %c64_175], %69 {strides = array<i32>} : memref<16x16x72xf32, #tpu.memory_space<vmem>>, vector<16x16x8xf32>,
    %c0_176 = arith.constant 0 : index
    %c0_177 = arith.constant 0 : index
    %c0_178 = arith.constant 0 : index
    %71 = vector.load %arg9[%c0_176, %c0_177, %c0_178] : memref<16x16x72xf32, #tpu.memory_space<vmem>>, vector<16x16x72xf32>
    %cst_179 = arith.constant dense<0.000000e+00> : vector<16x16x4xf32>
    %72 = tpu.matmul %71, %51, %cst_179 {dimension_numbers = #tpu.dot_dimension_numbers<[2], [0], [0, 1], [1], [0, 0, 0, 1, 1, 1], [], []>} : vector<16x16x72xf32>, vector<72x4xf32>, vector<16x16x4xf32> -> vector<16x16x4xf32>
    %73 = vector.broadcast %52 : vector<1x1x4xf32> to vector<16x16x4xf32>
    %74 = arith.addf %72, %73 : vector<16x16x4xf32>
    %cst_180 = arith.constant 0.000000e+00 : f32
    %75 = vector.broadcast %cst_180 : f32 to vector<16x16x4xf32>
    %76 = arith.maximumf %74, %75 : vector<16x16x4xf32>
    %c0_181 = arith.constant 0 : index
    %c0_182 = arith.constant 0 : index
    %c0_183 = arith.constant 0 : index
    %c0_184 = arith.constant 0 : index
    %77 = vector.load %arg7[%c0_181, %c0_182, %c0_183, %c0_184] : memref<1x16x16x4xf32, #tpu.memory_space<vmem>>, vector<1x16x16x4xf32>
    %78 = vector.shape_cast %77 : vector<1x16x16x4xf32> to vector<16x16x4xf32>
    %79 = vector.shape_cast %76 : vector<16x16x4xf32> to vector<1x16x16x4xf32>
    tpu.vector_store %arg7[%c0_181, %c0_182, %c0_183, %c0_184], %79 {strides = array<i32>} : memref<1x16x16x4xf32, #tpu.memory_space<vmem>>, vector<1x16x16x4xf32>,
    return
  }
  func.func @transform_0(%arg0: i32) -> (i32, i32, i32, i32) {
    %c0_i32 = arith.constant 0 : i32
    %c0_i32_0 = arith.constant 0 : i32
    %c0_i32_1 = arith.constant 0 : i32
    %c0_i32_2 = arith.constant 0 : i32
    return %arg0, %c0_i32, %c0_i32_0, %c0_i32_1 : i32, i32, i32, i32
  }
  func.func @transform_1(%arg0: i32) -> (i32, i32, i32, i32) {
    %c0_i32 = arith.constant 0 : i32
    %c0_i32_0 = arith.constant 0 : i32
    %c0_i32_1 = arith.constant 0 : i32
    %c0_i32_2 = arith.constant 0 : i32
    return %arg0, %c0_i32, %c0_i32_0, %c0_i32_1 : i32, i32, i32, i32
  }
  func.func @transform_2(%arg0: i32) -> (i32, i32) {
    %c0_i32 = arith.constant 0 : i32
    %c0_i32_0 = arith.constant 0 : i32
    %c0_i32_1 = arith.constant 0 : i32
    return %c0_i32, %c0_i32_0 : i32, i32
  }
  func.func @transform_3(%arg0: i32) -> (i32, i32, i32) {
    %c0_i32 = arith.constant 0 : i32
    %c0_i32_0 = arith.constant 0 : i32
    %c0_i32_1 = arith.constant 0 : i32
    %c0_i32_2 = arith.constant 0 : i32
    return %c0_i32, %c0_i32_0, %c0_i32_1 : i32, i32, i32
  }
  func.func @transform_4(%arg0: i32) -> (i32, i32) {
    %c0_i32 = arith.constant 0 : i32
    %c0_i32_0 = arith.constant 0 : i32
    %c0_i32_1 = arith.constant 0 : i32
    return %c0_i32, %c0_i32_0 : i32, i32
  }
  func.func @transform_5(%arg0: i32) -> (i32, i32, i32) {
    %c0_i32 = arith.constant 0 : i32
    %c0_i32_0 = arith.constant 0 : i32
    %c0_i32_1 = arith.constant 0 : i32
    %c0_i32_2 = arith.constant 0 : i32
    return %c0_i32, %c0_i32_0, %c0_i32_1 : i32, i32, i32
  }
  func.func @transform_6(%arg0: i32) -> (i32, i32, i32, i32) {
    %c0_i32 = arith.constant 0 : i32
    %c0_i32_0 = arith.constant 0 : i32
    %c0_i32_1 = arith.constant 0 : i32
    %c0_i32_2 = arith.constant 0 : i32
    return %arg0, %c0_i32, %c0_i32_0, %c0_i32_1 : i32, i32, i32, i32
  }
}

</mosaic_0001>

<llo_original>
// kernel: merge_forward.1
$region0: #{merge_forward.1}
  #allocation0 [shape = 'u32[]', space=smem, size = 0x4, offset = 0x4, fixed_abs, tag = 'smem constant byte address 0x4 - core index']
  #allocation1 [shape = 'u32[144,128]{1,0:T(1,128)}', space=vmem, size = 0x12000, scoped, tag = 'internal scratch']
  #allocation2 [shape = 'f32[18,18,8]{2,1,0:T(8,128)}', space=vmem, size = 0x36000, scoped, tag = 'scratch operand']
  #allocation3 [shape = 'f32[16,16,72]{2,1,0:T(8,128)}', space=vmem, size = 0x20000, scoped, tag = 'scratch operand']
  %s0 = inlined_call_operand.vmem [shape: f32[2,16,16,4], index: 0, kind: input, shape index: {}]
  %s1 = inlined_call_operand.vmem [shape: f32[2,16,16,4], index: 1, kind: input, shape index: {}]
  %s2 = inlined_call_operand.vmem [shape: f32[72,8], index: 2, kind: input, shape index: {}]
  %s3 = inlined_call_operand.vmem [shape: f32[1,1,8], index: 3, kind: input, shape index: {}]
  %s4 = inlined_call_operand.vmem [shape: f32[72,4], index: 4, kind: input, shape index: {}]
  %s5 = inlined_call_operand.vmem [shape: f32[1,1,4], index: 5, kind: input, shape index: {}]
  %s6 = inlined_call_operand.vmem [shape: f32[2,16,16,4], index: 6, kind: output, shape index: {}]
  %s7 = sld [smem:[#allocation0]]
  $region57: #{merge_forward.1} parent=0
    _
  %s9 = ssub.s32 1, %s7
  %s10 = scalar_select 0, %s9, %s7
  loop: start=0, step=1, limit=4
  $region2: #{merge_forward.1} parent=0 // loop_pre_header
    _
  $region3: #{merge_forward.1} parent=0 // loop_header
    %s12 = sphi 0, %s16
    %p13 = scmp.ge.s32.totalorder %s12, 4
    %s22 = sphi 0, %s24
    %s25 = sphi 0, %s22
    %s26 = sphi 0, %s25
    %s42 = sphi 0, %s26
    %s48 = sphi 0, %s50
    %s51 = sphi 0, %s48
    %s52 = sphi 0, %s51
    %s68 = sphi 0, %s52
    %s72 = sphi 0, %s72
    %s74 = sphi 0, %s72
    %s75 = sphi 0, %s74
    %s89 = sphi 0, %s75
    %s93 = sphi 0, %s93
    %s95 = sphi 0, %s93
    %s96 = sphi 0, %s95
    %s110 = sphi 0, %s96
    %s114 = sphi 0, %s114
    %s116 = sphi 0, %s114
    %s117 = sphi 0, %s116
    %s131 = sphi 0, %s117
    %s135 = sphi 0, %s135
    %s137 = sphi 0, %s135
    %s138 = sphi 0, %s137
    %s152 = sphi 0, %s138
    %s158 = sphi 0, %s160
    %s161 = sphi 0, %s158
    %s162 = sphi 0, %s161
    %s178 = sphi 0, %s162
  $region4: #{merge_forward.1} parent=0 // loop_header_branch
    %15 = sbr.rel (%p13) target = $region8
  $region5: #{merge_forward.1} parent=0 // loop_body
    %s17 = ssub.s32 %s12, 1
    %s18 = ssub.s32 %s12, 2
    %s19 = sadd.s32 %s12, 1
    %s20 = ssub.s32 %s12, %s19
    %p21 = scmp.eq.s32.totalorder %s20, 0
    %s23 = sadd.s32 %s22, 1
    %s24 = scalar_select %p21, %s22, %s23
    %p27 = pneg %p21
    %p28 = scmp.eq.s32.totalorder %s12, 1
    %p29 = por %p27, %p28
    %p30 = scmp.ne.s32.totalorder %s22, %s25
    %p31 = scmp.eq.s32.totalorder %s12, 0
    %p32 = por %p30, %p31
    %p33 = scmp.ne.s32.totalorder %s22, %s25
    %p34 = scmp.eq.s32.totalorder %s17, 1
    %p35 = por %p33, %p34
    %p36 = scmp.ne.s32.totalorder %s25, %s26
    %p37 = scmp.eq.s32.totalorder %s17, 0
    %p38 = por %p36, %p37
    %p39 = scmp.ne.s32.totalorder %s25, %s26
    %p40 = scmp.eq.s32.totalorder %s18, 1
    %p41 = por %p39, %p40
    %p43 = scmp.ne.s32.totalorder %s26, %s42
    %p44 = scmp.eq.s32.totalorder %s18, 0
    %p45 = por %p43, %p44
    %s46 = ssub.s32 %s12, %s19
    %p47 = scmp.eq.s32.totalorder %s46, 0
    %s49 = sadd.s32 %s48, 1
    %s50 = scalar_select %p47, %s48, %s49
    %p53 = pneg %p47
    %p54 = scmp.eq.s32.totalorder %s12, 1
    %p55 = por %p53, %p54
    %p56 = scmp.ne.s32.totalorder %s48, %s51
    %p57 = scmp.eq.s32.totalorder %s12, 0
    %p58 = por %p56, %p57
    %p59 = scmp.ne.s32.totalorder %s48, %s51
    %p60 = scmp.eq.s32.totalorder %s17, 1
    %p61 = por %p59, %p60
    %p62 = scmp.ne.s32.totalorder %s51, %s52
    %p63 = scmp.eq.s32.totalorder %s17, 0
    %p64 = por %p62, %p63
    %p65 = scmp.ne.s32.totalorder %s51, %s52
    %p66 = scmp.eq.s32.totalorder %s18, 1
    %p67 = por %p65, %p66
    %p69 = scmp.ne.s32.totalorder %s52, %s68
    %p70 = scmp.eq.s32.totalorder %s18, 0
    %p71 = por %p69, %p70
    %s73 = sadd.s32 %s72, 1
    %p76 = scmp.eq.s32.totalorder %s12, 1
    %p77 = scmp.ne.s32.totalorder %s72, %s74
    %p78 = scmp.eq.s32.totalorder %s12, 0
    %p79 = por %p77, %p78
    %p80 = scmp.ne.s32.totalorder %s72, %s74
    %p81 = scmp.eq.s32.totalorder %s17, 1
    %p82 = por %p80, %p81
    %p83 = scmp.ne.s32.totalorder %s74, %s75
    %p84 = scmp.eq.s32.totalorder %s17, 0
    %p85 = por %p83, %p84
    %p86 = scmp.ne.s32.totalorder %s74, %s75
    %p87 = scmp.eq.s32.totalorder %s18, 1
    %p88 = por %p86, %p87
    %p90 = scmp.ne.s32.totalorder %s75, %s89
    %p91 = scmp.eq.s32.totalorder %s18, 0
    %p92 = por %p90, %p91
    %s94 = sadd.s32 %s93, 1
    %p97 = scmp.eq.s32.totalorder %s12, 1
    %p98 = scmp.ne.s32.totalorder %s93, %s95
    %p99 = scmp.eq.s32.totalorder %s12, 0
    %p100 = por %p98, %p99
    %p101 = scmp.ne.s32.totalorder %s93, %s95
    %p102 = scmp.eq.s32.totalorder %s17, 1
    %p103 = por %p101, %p102
    %p104 = scmp.ne.s32.totalorder %s95, %s96
    %p105 = scmp.eq.s32.totalorder %s17, 0
    %p106 = por %p104, %p105
    %p107 = scmp.ne.s32.totalorder %s95, %s96
    %p108 = scmp.eq.s32.totalorder %s18, 1
    %p109 = por %p107, %p108
    %p111 = scmp.ne.s32.totalorder %s96, %s110
    %p112 = scmp.eq.s32.totalorder %s18, 0
    %p113 = por %p111, %p112
    %s115 = sadd.s32 %s114, 1
    %p118 = scmp.eq.s32.totalorder %s12, 1
    %p119 = scmp.ne.s32.totalorder %s114, %s116
    %p120 = scmp.eq.s32.totalorder %s12, 0
    %p121 = por %p119, %p120
    %p122 = scmp.ne.s32.totalorder %s114, %s116
    %p123 = scmp.eq.s32.totalorder %s17, 1
    %p124 = por %p122, %p123
    %p125 = scmp.ne.s32.totalorder %s116, %s117
    %p126 = scmp.eq.s32.totalorder %s17, 0
    %p127 = por %p125, %p126
    %p128 = scmp.ne.s32.totalorder %s116, %s117
    %p129 = scmp.eq.s32.totalorder %s18, 1
    %p130 = por %p128, %p129
    %p132 = scmp.ne.s32.totalorder %s117, %s131
    %p133 = scmp.eq.s32.totalorder %s18, 0
    %p134 = por %p132, %p133
    %s136 = sadd.s32 %s135, 1
    %p139 = scmp.eq.s32.totalorder %s12, 1
    %p140 = scmp.ne.s32.totalorder %s135, %s137
    %p141 = scmp.eq.s32.totalorder %s12, 0
    %p142 = por %p140, %p141
    %p143 = scmp.ne.s32.totalorder %s135, %s137
    %p144 = scmp.eq.s32.totalorder %s17, 1
    %p145 = por %p143, %p144
    %p146 = scmp.ne.s32.totalorder %s137, %s138
    %p147 = scmp.eq.s32.totalorder %s17, 0
    %p148 = por %p146, %p147
    %p149 = scmp.ne.s32.totalorder %s137, %s138
    %p150 = scmp.eq.s32.totalorder %s18, 1
    %p151 = por %p149, %p150
    %p153 = scmp.ne.s32.totalorder %s138, %s152
    %p154 = scmp.eq.s32.totalorder %s18, 0
    %p155 = por %p153, %p154
    %s156 = ssub.s32 %s12, %s19
    %p157 = scmp.eq.s32.totalorder %s156, 0
    %s159 = sadd.s32 %s158, 1
    %s160 = scalar_select %p157, %s158, %s159
    %p163 = pneg %p157
    %p164 = scmp.eq.s32.totalorder %s12, 1
    %p165 = por %p163, %p164
    %p166 = scmp.ne.s32.totalorder %s158, %s161
    %p167 = scmp.eq.s32.totalorder %s12, 0
    %p168 = por %p166, %p167
    %p169 = scmp.ne.s32.totalorder %s158, %s161
    %p170 = scmp.eq.s32.totalorder %s17, 1
    %p171 = por %p169, %p170
    %p172 = scmp.ne.s32.totalorder %s161, %s162
    %p173 = scmp.eq.s32.totalorder %s17, 0
    %p174 = por %p172, %p173
    %p175 = scmp.ne.s32.totalorder %s161, %s162
    %p176 = scmp.eq.s32.totalorder %s18, 1
    %p177 = por %p175, %p176
    %p179 = scmp.ne.s32.totalorder %s162, %s178
    %p180 = scmp.eq.s32.totalorder %s18, 0
    %p181 = por %p179, %p180
    %p182 = scmp.le.s32.totalorder 1, %s12
    %p183 = scmp.lt.s32.totalorder %s12, 3
    %p184 = pnand %p182, %p183
    %p185 = pneg %p184
    // Predicated region
    $region9: #{merge_forward.1} parent=5 // pred_check
      _
    $region10: #{merge_forward.1} parent=5 // pred_check_branch
      %187 = sbr.rel (%p184) target = $region12
    $region11: #{merge_forward.1} parent=5 // pred_region
      %s188 = ssub.s32 %s12, 1
      // Predicated region
      $region13: #{merge_forward.1} parent=11 // pred_check
        %p189 = pneg %p85
      $region14: #{merge_forward.1} parent=11 // pred_check_branch
        %191 = sbr.rel (%p189) target = $region16
      $region15: #{merge_forward.1} parent=11 // pred_region
        _
      $region16: #{merge_forward.1} parent=11 // pred_fallthru
        _
      // Predicated region
      $region17: #{merge_forward.1} parent=11 // pred_check
        %p192 = pneg %p106
      $region18: #{merge_forward.1} parent=11 // pred_check_branch
        %194 = sbr.rel (%p192) target = $region20
      $region19: #{merge_forward.1} parent=11 // pred_region
        _
      $region20: #{merge_forward.1} parent=11 // pred_fallthru
        _
      // Predicated region
      $region21: #{merge_forward.1} parent=11 // pred_check
        %p195 = pneg %p127
      $region22: #{merge_forward.1} parent=11 // pred_check_branch
        %197 = sbr.rel (%p195) target = $region24
      $region23: #{merge_forward.1} parent=11 // pred_region
        _
      $region24: #{merge_forward.1} parent=11 // pred_fallthru
        _
      // Predicated region
      $region25: #{merge_forward.1} parent=11 // pred_check
        %p198 = pneg %p148
      $region26: #{merge_forward.1} parent=11 // pred_check_branch
        %200 = sbr.rel (%p198) target = $region28
      $region27: #{merge_forward.1} parent=11 // pred_region
        _
      $region28: #{merge_forward.1} parent=11 // pred_fallthru
        _
    $region12: #{merge_forward.1} parent=5 // pred_fallthru
      _
    %p201 = scmp.lt.s32.totalorder %s12, 2
    // Predicated region
    $region29: #{merge_forward.1} parent=5 // pred_check
      %p202 = pneg %p201
    $region30: #{merge_forward.1} parent=5 // pred_check_branch
      %204 = sbr.rel (%p202) target = $region32
    $region31: #{merge_forward.1} parent=5 // pred_region
      // Predicated region
      $region33: #{merge_forward.1} parent=31 // pred_check
        %p205 = pneg %p32
      $region34: #{merge_forward.1} parent=31 // pred_check_branch
        %207 = sbr.rel (%p205) target = $region36
      $region35: #{merge_forward.1} parent=31 // pred_region
        %p208 = scmp.lt.s32.totalorder %s12, 1
        %s209 = scalar_select %p208, %s12, 1
        %s210 = smul.addr %s209, 32
        %s211 = smul.addr %s210, 8
        %s212 = scalar_lea.vmem %s0, %s211
      $region36: #{merge_forward.1} parent=31 // pred_fallthru
        _
      // Predicated region
      $region37: #{merge_forward.1} parent=31 // pred_check
        %p213 = pneg %p58
      $region38: #{merge_forward.1} parent=31 // pred_check_branch
        %215 = sbr.rel (%p213) target = $region40
      $region39: #{merge_forward.1} parent=31 // pred_region
        %p216 = scmp.lt.s32.totalorder %s12, 1
        %s217 = scalar_select %p216, %s12, 1
        %s218 = smul.addr %s217, 32
        %s219 = smul.addr %s218, 8
        %s220 = scalar_lea.vmem %s1, %s219
      $region40: #{merge_forward.1} parent=31 // pred_fallthru
        _
    $region32: #{merge_forward.1} parent=5 // pred_fallthru
      _
    %p221 = scmp.le.s32.totalorder 1, %s12
    %p222 = scmp.lt.s32.totalorder %s12, 3
    %p223 = pnand %p221, %p222
    %p224 = pneg %p223
    // Predicated region
    $region41: #{merge_forward.1} parent=5 // pred_check
      _
    $region42: #{merge_forward.1} parent=5 // pred_check_branch
      %226 = sbr.rel (%p223) target = $region44
    $region43: #{merge_forward.1} parent=5 // pred_region
      %s227 = ssub.s32 %s12, 1
      %p228 = scmp.lt.s32.totalorder %s17, 1
      %s229 = scalar_select %p228, %s17, 1
      %s230 = smul.addr %s229, 32
      %s231 = smul.addr %s230, 8
      %s232 = scalar_lea.vmem %s0, %s231
      %p233 = pneg %p38
      %p234 = pneg %p35
      %p235 = scmp.lt.s32.totalorder %s17, 1
      %s236 = scalar_select %p235, %s17, 1
      %s237 = smul.addr %s236, 32
      %s238 = smul.addr %s237, 8
      %s239 = scalar_lea.vmem %s1, %s238
      %p240 = pneg %p64
      %p241 = pneg %p61
      %p242 = pneg %p85
      %p243 = pneg %p82
      %p244 = pneg %p106
      %p245 = pneg %p103
      %p246 = pneg %p127
      %p247 = pneg %p124
      %p248 = pneg %p148
      %p249 = pneg %p145
      %p250 = pneg %p174
      %p251 = pneg %p171
      %p252 = scmp.lt.s32.totalorder %s17, 1
      %s253 = scalar_select %p252, %s17, 1
      %s254 = smul.addr %s253, 32
      %s255 = smul.addr %s254, 8
      %s256 = scalar_lea.vmem %s6, %s255
      %p257 = scmp.lt.s32.totalorder %s17, 1
      %s258 = scalar_select %p257, %s17, 1
      %s259 = smul.addr %s258, 32
      %s260 = smul.addr %s259, 8
      %s261 = scalar_lea.vmem %s0, %s260
      %p262 = scmp.lt.s32.totalorder %s17, 1
      %s263 = scalar_select %p262, %s17, 1
      %s264 = smul.addr %s263, 32
      %s265 = smul.addr %s264, 8
      %s266 = scalar_lea.vmem %s1, %s265
      %p267 = scmp.lt.s32.totalorder %s17, 1
      %s268 = scalar_select %p267, %s17, 1
      %s269 = smul.addr %s268, 32
      %s270 = smul.addr %s269, 8
      %s271 = scalar_lea.vmem %s6, %s270
      %v272 = vld [vmem:[%s261] sm:$0xff]
      %v273 = vld [vmem:[%s261 + $0x8] sm:$0xff]
      %v274 = vld [vmem:[%s261 + $0x10] sm:$0xff]
      %v275 = vld [vmem:[%s261 + $0x18] sm:$0xff]
      %v276 = vld [vmem:[%s261 + $0x20] sm:$0xff]
      %v277 = vld [vmem:[%s261 + $0x28] sm:$0xff]
      %v278 = vld [vmem:[%s261 + $0x30] sm:$0xff]
      %v279 = vld [vmem:[%s261 + $0x38] sm:$0xff]
      %v280 = vld [vmem:[%s261 + $0x40] sm:$0xff]
      %v281 = vld [vmem:[%s261 + $0x48] sm:$0xff]
      %v282 = vld [vmem:[%s261 + $0x50] sm:$0xff]
      %v283 = vld [vmem:[%s261 + $0x58] sm:$0xff]
      %v284 = vld [vmem:[%s261 + $0x60] sm:$0xff]
      %v285 = vld [vmem:[%s261 + $0x68] sm:$0xff]
      %v286 = vld [vmem:[%s261 + $0x70] sm:$0xff]
      %v287 = vld [vmem:[%s261 + $0x78] sm:$0xff]
      %v288 = vld [vmem:[%s261 + $0x80] sm:$0xff]
      %v289 = vld [vmem:[%s261 + $0x88] sm:$0xff]
      %v290 = vld [vmem:[%s261 + $0x90] sm:$0xff]
      %v291 = vld [vmem:[%s261 + $0x98] sm:$0xff]
      %v292 = vld [vmem:[%s261 + $0xa0] sm:$0xff]
      %v293 = vld [vmem:[%s261 + $0xa8] sm:$0xff]
      %v294 = vld [vmem:[%s261 + $0xb0] sm:$0xff]
      %v295 = vld [vmem:[%s261 + $0xb8] sm:$0xff]
      %v296 = vld [vmem:[%s261 + $0xc0] sm:$0xff]
      %v297 = vld [vmem:[%s261 + $0xc8] sm:$0xff]
      %v298 = vld [vmem:[%s261 + $0xd0] sm:$0xff]
      %v299 = vld [vmem:[%s261 + $0xd8] sm:$0xff]
      %v300 = vld [vmem:[%s261 + $0xe0] sm:$0xff]
      %v301 = vld [vmem:[%s261 + $0xe8] sm:$0xff]
      %v302 = vld [vmem:[%s261 + $0xf0] sm:$0xff]
      %v303 = vld [vmem:[%s261 + $0xf8] sm:$0xff]
      %s304 = scalar_lea.vmem [#allocation2], 24
      %vm305 = vcmask 31744
      %306 = vst.msk [vmem:[%s304 + $0x1] sm:$0xff] %vm305, %v272
      %307 = vst.msk [vmem:[%s304 + $0x9] sm:$0xff] %vm305, %v273
      %308 = vst.msk [vmem:[%s304 + $0x19] sm:$0xff] %vm305, %v274
      %309 = vst.msk [vmem:[%s304 + $0x21] sm:$0xff] %vm305, %v275
      %310 = vst.msk [vmem:[%s304 + $0x31] sm:$0xff] %vm305, %v276
      %311 = vst.msk [vmem:[%s304 + $0x39] sm:$0xff] %vm305, %v277
      %312 = vst.msk [vmem:[%s304 + $0x49] sm:$0xff] %vm305, %v278
      %313 = vst.msk [vmem:[%s304 + $0x51] sm:$0xff] %vm305, %v279
      %314 = vst.msk [vmem:[%s304 + $0x61] sm:$0xff] %vm305, %v280
      %315 = vst.msk [vmem:[%s304 + $0x69] sm:$0xff] %vm305, %v281
      %316 = vst.msk [vmem:[%s304 + $0x79] sm:$0xff] %vm305, %v282
      %317 = vst.msk [vmem:[%s304 + $0x81] sm:$0xff] %vm305, %v283
      %318 = vst.msk [vmem:[%s304 + $0x91] sm:$0xff] %vm305, %v284
      %319 = vst.msk [vmem:[%s304 + $0x99] sm:$0xff] %vm305, %v285
      %320 = vst.msk [vmem:[%s304 + $0xa9] sm:$0xff] %vm305, %v286
      %321 = vst.msk [vmem:[%s304 + $0xb1] sm:$0xff] %vm305, %v287
      %322 = vst.msk [vmem:[%s304 + $0xc1] sm:$0xff] %vm305, %v288
      %323 = vst.msk [vmem:[%s304 + $0xc9] sm:$0xff] %vm305, %v289
      %324 = vst.msk [vmem:[%s304 + $0xd9] sm:$0xff] %vm305, %v290
      %325 = vst.msk [vmem:[%s304 + $0xe1] sm:$0xff] %vm305, %v291
      %326 = vst.msk [vmem:[%s304 + $0xf1] sm:$0xff] %vm305, %v292
      %327 = vst.msk [vmem:[%s304 + $0xf9] sm:$0xff] %vm305, %v293
      %328 = vst.msk [vmem:[%s304 + $0x109] sm:$0xff] %vm305, %v294
      %329 = vst.msk [vmem:[%s304 + $0x111] sm:$0xff] %vm305, %v295
      %330 = vst.msk [vmem:[%s304 + $0x121] sm:$0xff] %vm305, %v296
      %331 = vst.msk [vmem:[%s304 + $0x129] sm:$0xff] %vm305, %v297
      %332 = vst.msk [vmem:[%s304 + $0x139] sm:$0xff] %vm305, %v298
      %333 = vst.msk [vmem:[%s304 + $0x141] sm:$0xff] %vm305, %v299
      %334 = vst.msk [vmem:[%s304 + $0x151] sm:$0xff] %vm305, %v300
      %335 = vst.msk [vmem:[%s304 + $0x159] sm:$0xff] %vm305, %v301
      %336 = vst.msk [vmem:[%s304 + $0x169] sm:$0xff] %vm305, %v302
      %337 = vst.msk [vmem:[%s304 + $0x171] sm:$0xff] %vm305, %v303
      %v338 = vld [vmem:[%s266] sm:$0xff]
      %v339 = vld [vmem:[%s266 + $0x8] sm:$0xff]
      %v340 = vld [vmem:[%s266 + $0x10] sm:$0xff]
      %v341 = vld [vmem:[%s266 + $0x18] sm:$0xff]
      %v342 = vld [vmem:[%s266 + $0x20] sm:$0xff]
      %v343 = vld [vmem:[%s266 + $0x28] sm:$0xff]
      %v344 = vld [vmem:[%s266 + $0x30] sm:$0xff]
      %v345 = vld [vmem:[%s266 + $0x38] sm:$0xff]
      %v346 = vld [vmem:[%s266 + $0x40] sm:$0xff]
      %v347 = vld [vmem:[%s266 + $0x48] sm:$0xff]
      %v348 = vld [vmem:[%s266 + $0x50] sm:$0xff]
      %v349 = vld [vmem:[%s266 + $0x58] sm:$0xff]
      %v350 = vld [vmem:[%s266 + $0x60] sm:$0xff]
      %v351 = vld [vmem:[%s266 + $0x68] sm:$0xff]
      %v352 = vld [vmem:[%s266 + $0x70] sm:$0xff]
      %v353 = vld [vmem:[%s266 + $0x78] sm:$0xff]
      %v354 = vld [vmem:[%s266 + $0x80] sm:$0xff]
      %v355 = vld [vmem:[%s266 + $0x88] sm:$0xff]
      %v356 = vld [vmem:[%s266 + $0x90] sm:$0xff]
      %v357 = vld [vmem:[%s266 + $0x98] sm:$0xff]
      %v358 = vld [vmem:[%s266 + $0xa0] sm:$0xff]
      %v359 = vld [vmem:[%s266 + $0xa8] sm:$0xff]
      %v360 = vld [vmem:[%s266 + $0xb0] sm:$0xff]
      %v361 = vld [vmem:[%s266 + $0xb8] sm:$0xff]
      %v362 = vld [vmem:[%s266 + $0xc0] sm:$0xff]
      %v363 = vld [vmem:[%s266 + $0xc8] sm:$0xff]
      %v364 = vld [vmem:[%s266 + $0xd0] sm:$0xff]
      %v365 = vld [vmem:[%s266 + $0xd8] sm:$0xff]
      %v366 = vld [vmem:[%s266 + $0xe0] sm:$0xff]
      %v367 = vld [vmem:[%s266 + $0xe8] sm:$0xff]
      %v368 = vld [vmem:[%s266 + $0xf0] sm:$0xff]
      %v369 = vld [vmem:[%s266 + $0xf8] sm:$0xff]
      %402 = vrot.lane.b32.xlu0 %v338, 4
      %v403 = vpop.permute.xlu0 %402
      %404 = vrot.lane.b32.xlu0 %v339, 4
      %v405 = vpop.permute.xlu0 %404
      %406 = vrot.lane.b32.xlu0 %v340, 4
      %v407 = vpop.permute.xlu0 %406
      %408 = vrot.lane.b32.xlu0 %v341, 4
      %v409 = vpop.permute.xlu0 %408
      %410 = vrot.lane.b32.xlu0 %v342, 4
      %v411 = vpop.permute.xlu0 %410
      %412 = vrot.lane.b32.xlu0 %v343, 4
      %v413 = vpop.permute.xlu0 %412
      %414 = vrot.lane.b32.xlu0 %v344, 4
      %v415 = vpop.permute.xlu0 %414
      %416 = vrot.lane.b32.xlu0 %v345, 4
      %v417 = vpop.permute.xlu0 %416
      %418 = vrot.lane.b32.xlu0 %v346, 4
      %v419 = vpop.permute.xlu0 %418
      %420 = vrot.lane.b32.xlu0 %v347, 4
      %v421 = vpop.permute.xlu0 %420
      %422 = vrot.lane.b32.xlu0 %v348, 4
      %v423 = vpop.permute.xlu0 %422
      %424 = vrot.lane.b32.xlu0 %v349, 4
      %v425 = vpop.permute.xlu0 %424
      %426 = vrot.lane.b32.xlu0 %v350, 4
      %v427 = vpop.permute.xlu0 %426
      %428 = vrot.lane.b32.xlu0 %v351, 4
      %v429 = vpop.permute.xlu0 %428
      %430 = vrot.lane.b32.xlu0 %v352, 4
      %v431 = vpop.permute.xlu0 %430
      %432 = vrot.lane.b32.xlu0 %v353, 4
      %v433 = vpop.permute.xlu0 %432
      %434 = vrot.lane.b32.xlu0 %v354, 4
      %v435 = vpop.permute.xlu0 %434
      %436 = vrot.lane.b32.xlu0 %v355, 4
      %v437 = vpop.permute.xlu0 %436
      %438 = vrot.lane.b32.xlu0 %v356, 4
      %v439 = vpop.permute.xlu0 %438
      %440 = vrot.lane.b32.xlu0 %v357, 4
      %v441 = vpop.permute.xlu0 %440
      %442 = vrot.lane.b32.xlu0 %v358, 4
      %v443 = vpop.permute.xlu0 %442
      %444 = vrot.lane.b32.xlu0 %v359, 4
      %v445 = vpop.permute.xlu0 %444
      %446 = vrot.lane.b32.xlu0 %v360, 4
      %v447 = vpop.permute.xlu0 %446
      %448 = vrot.lane.b32.xlu0 %v361, 4
      %v449 = vpop.permute.xlu0 %448
      %450 = vrot.lane.b32.xlu0 %v362, 4
      %v451 = vpop.permute.xlu0 %450
      %452 = vrot.lane.b32.xlu0 %v363, 4
      %v453 = vpop.permute.xlu0 %452
      %454 = vrot.lane.b32.xlu0 %v364, 4
      %v455 = vpop.permute.xlu0 %454
      %456 = vrot.lane.b32.xlu0 %v365, 4
      %v457 = vpop.permute.xlu0 %456
      %458 = vrot.lane.b32.xlu0 %v366, 4
      %v459 = vpop.permute.xlu0 %458
      %460 = vrot.lane.b32.xlu0 %v367, 4
      %v461 = vpop.permute.xlu0 %460
      %462 = vrot.lane.b32.xlu0 %v368, 4
      %v463 = vpop.permute.xlu0 %462
      %464 = vrot.lane.b32.xlu0 %v369, 4
      %v465 = vpop.permute.xlu0 %464
      %vm498 = vcmask 64544
      %499 = vst.msk [vmem:[%s304 + $0x1] sm:$0xff] %vm498, %v403
      %500 = vst.msk [vmem:[%s304 + $0x9] sm:$0xff] %vm498, %v405
      %501 = vst.msk [vmem:[%s304 + $0x19] sm:$0xff] %vm498, %v407
      %502 = vst.msk [vmem:[%s304 + $0x21] sm:$0xff] %vm498, %v409
      %503 = vst.msk [vmem:[%s304 + $0x31] sm:$0xff] %vm498, %v411
      %504 = vst.msk [vmem:[%s304 + $0x39] sm:$0xff] %vm498, %v413
      %505 = vst.msk [vmem:[%s304 + $0x49] sm:$0xff] %vm498, %v415
      %506 = vst.msk [vmem:[%s304 + $0x51] sm:$0xff] %vm498, %v417
      %507 = vst.msk [vmem:[%s304 + $0x61] sm:$0xff] %vm498, %v419
      %508 = vst.msk [vmem:[%s304 + $0x69] sm:$0xff] %vm498, %v421
      %509 = vst.msk [vmem:[%s304 + $0x79] sm:$0xff] %vm498, %v423
      %510 = vst.msk [vmem:[%s304 + $0x81] sm:$0xff] %vm498, %v425
      %511 = vst.msk [vmem:[%s304 + $0x91] sm:$0xff] %vm498, %v427
      %512 = vst.msk [vmem:[%s304 + $0x99] sm:$0xff] %vm498, %v429
      %513 = vst.msk [vmem:[%s304 + $0xa9] sm:$0xff] %vm498, %v431
      %514 = vst.msk [vmem:[%s304 + $0xb1] sm:$0xff] %vm498, %v433
      %515 = vst.msk [vmem:[%s304 + $0xc1] sm:$0xff] %vm498, %v435
      %516 = vst.msk [vmem:[%s304 + $0xc9] sm:$0xff] %vm498, %v437
      %517 = vst.msk [vmem:[%s304 + $0xd9] sm:$0xff] %vm498, %v439
      %518 = vst.msk [vmem:[%s304 + $0xe1] sm:$0xff] %vm498, %v441
      %519 = vst.msk [vmem:[%s304 + $0xf1] sm:$0xff] %vm498, %v443
      %520 = vst.msk [vmem:[%s304 + $0xf9] sm:$0xff] %vm498, %v445
      %521 = vst.msk [vmem:[%s304 + $0x109] sm:$0xff] %vm498, %v447
      %522 = vst.msk [vmem:[%s304 + $0x111] sm:$0xff] %vm498, %v449
      %523 = vst.msk [vmem:[%s304 + $0x121] sm:$0xff] %vm498, %v451
      %524 = vst.msk [vmem:[%s304 + $0x129] sm:$0xff] %vm498, %v453
      %525 = vst.msk [vmem:[%s304 + $0x139] sm:$0xff] %vm498, %v455
      %526 = vst.msk [vmem:[%s304 + $0x141] sm:$0xff] %vm498, %v457
      %527 = vst.msk [vmem:[%s304 + $0x151] sm:$0xff] %vm498, %v459
      %528 = vst.msk [vmem:[%s304 + $0x159] sm:$0xff] %vm498, %v461
      %529 = vst.msk [vmem:[%s304 + $0x169] sm:$0xff] %vm498, %v463
      %530 = vst.msk [vmem:[%s304 + $0x171] sm:$0xff] %vm498, %v465
      %v531 = vld [vmem:[%s304 + $0x2] sm:$0x1]
      %v532 = vld [vmem:[%s304 + $0x1a] sm:$0x1]
      %v533 = vld [vmem:[%s304 + $0x32] sm:$0x1]
      %v534 = vld [vmem:[%s304 + $0x4a] sm:$0x1]
      %v535 = vld [vmem:[%s304 + $0x62] sm:$0x1]
      %v536 = vld [vmem:[%s304 + $0x7a] sm:$0x1]
      %v537 = vld [vmem:[%s304 + $0x92] sm:$0x1]
      %v538 = vld [vmem:[%s304 + $0xaa] sm:$0x1]
      %v539 = vld [vmem:[%s304 + $0xc2] sm:$0x1]
      %v540 = vld [vmem:[%s304 + $0xda] sm:$0x1]
      %v541 = vld [vmem:[%s304 + $0xf2] sm:$0x1]
      %v542 = vld [vmem:[%s304 + $0x10a] sm:$0x1]
      %v543 = vld [vmem:[%s304 + $0x122] sm:$0x1]
      %v544 = vld [vmem:[%s304 + $0x13a] sm:$0x1]
      %v545 = vld [vmem:[%s304 + $0x152] sm:$0x1]
      %v546 = vld [vmem:[%s304 + $0x16a] sm:$0x1]
      %vm547 = vcmask 57344
      %548 = vst.msk [vmem:[%s304] sm:$0x1] %vm547, %v531
      %549 = vst.msk [vmem:[%s304 + $0x18] sm:$0x1] %vm547, %v532
      %550 = vst.msk [vmem:[%s304 + $0x30] sm:$0x1] %vm547, %v533
      %551 = vst.msk [vmem:[%s304 + $0x48] sm:$0x1] %vm547, %v534
      %552 = vst.msk [vmem:[%s304 + $0x60] sm:$0x1] %vm547, %v535
      %553 = vst.msk [vmem:[%s304 + $0x78] sm:$0x1] %vm547, %v536
      %554 = vst.msk [vmem:[%s304 + $0x90] sm:$0x1] %vm547, %v537
      %555 = vst.msk [vmem:[%s304 + $0xa8] sm:$0x1] %vm547, %v538
      %556 = vst.msk [vmem:[%s304 + $0xc0] sm:$0x1] %vm547, %v539
      %557 = vst.msk [vmem:[%s304 + $0xd8] sm:$0x1] %vm547, %v540
      %558 = vst.msk [vmem:[%s304 + $0xf0] sm:$0x1] %vm547, %v541
      %559 = vst.msk [vmem:[%s304 + $0x108] sm:$0x1] %vm547, %v542
      %560 = vst.msk [vmem:[%s304 + $0x120] sm:$0x1] %vm547, %v543
      %561 = vst.msk [vmem:[%s304 + $0x138] sm:$0x1] %vm547, %v544
      %562 = vst.msk [vmem:[%s304 + $0x150] sm:$0x1] %vm547, %v545
      %563 = vst.msk [vmem:[%s304 + $0x168] sm:$0x1] %vm547, %v546
      %v564 = vld [vmem:[%s304 + $0xf] sm:$0x1]
      %v565 = vld [vmem:[%s304 + $0x27] sm:$0x1]
      %v566 = vld [vmem:[%s304 + $0x3f] sm:$0x1]
      %v567 = vld [vmem:[%s304 + $0x57] sm:$0x1]
      %v568 = vld [vmem:[%s304 + $0x6f] sm:$0x1]
      %v569 = vld [vmem:[%s304 + $0x87] sm:$0x1]
      %v570 = vld [vmem:[%s304 + $0x9f] sm:$0x1]
      %v571 = vld [vmem:[%s304 + $0xb7] sm:$0x1]
      %v572 = vld [vmem:[%s304 + $0xcf] sm:$0x1]
      %v573 = vld [vmem:[%s304 + $0xe7] sm:$0x1]
      %v574 = vld [vmem:[%s304 + $0xff] sm:$0x1]
      %v575 = vld [vmem:[%s304 + $0x117] sm:$0x1]
      %v576 = vld [vmem:[%s304 + $0x12f] sm:$0x1]
      %v577 = vld [vmem:[%s304 + $0x147] sm:$0x1]
      %v578 = vld [vmem:[%s304 + $0x15f] sm:$0x1]
      %v579 = vld [vmem:[%s304 + $0x177] sm:$0x1]
      %580 = vst.msk [vmem:[%s304 + $0x11] sm:$0x1] %vm547, %v564
      %581 = vst.msk [vmem:[%s304 + $0x29] sm:$0x1] %vm547, %v565
      %582 = vst.msk [vmem:[%s304 + $0x41] sm:$0x1] %vm547, %v566
      %583 = vst.msk [vmem:[%s304 + $0x59] sm:$0x1] %vm547, %v567
      %584 = vst.msk [vmem:[%s304 + $0x71] sm:$0x1] %vm547, %v568
      %585 = vst.msk [vmem:[%s304 + $0x89] sm:$0x1] %vm547, %v569
      %586 = vst.msk [vmem:[%s304 + $0xa1] sm:$0x1] %vm547, %v570
      %587 = vst.msk [vmem:[%s304 + $0xb9] sm:$0x1] %vm547, %v571
      %588 = vst.msk [vmem:[%s304 + $0xd1] sm:$0x1] %vm547, %v572
      %589 = vst.msk [vmem:[%s304 + $0xe9] sm:$0x1] %vm547, %v573
      %590 = vst.msk [vmem:[%s304 + $0x101] sm:$0x1] %vm547, %v574
      %591 = vst.msk [vmem:[%s304 + $0x119] sm:$0x1] %vm547, %v575
      %592 = vst.msk [vmem:[%s304 + $0x131] sm:$0x1] %vm547, %v576
      %593 = vst.msk [vmem:[%s304 + $0x149] sm:$0x1] %vm547, %v577
      %594 = vst.msk [vmem:[%s304 + $0x161] sm:$0x1] %vm547, %v578
      %595 = vst.msk [vmem:[%s304 + $0x179] sm:$0x1] %vm547, %v579
      %s596 = scalar_lea.vmem [#allocation2], 48
      %v597 = vld [vmem:[%s596] sm:$0xff]
      %v598 = vld [vmem:[%s596 + $0x8] sm:$0xff]
      %v599 = vld [vmem:[%s596 + $0x10] sm:$0x3]
      %vm600 = vcmask 64512
      %601 = vst.msk [vmem:[#allocation2] sm:$0xff] %vm600, %v597
      %602 = vst.msk [vmem:[#allocation2 + $0x8] sm:$0xff] %vm600, %v598
      %vm603 = vcmask 58368
      %604 = vst.msk [vmem:[#allocation2 + $0x10] sm:$0x3] %vm603, %v599
      %s605 = scalar_lea.vmem [#allocation2], 360
      %v606 = vld [vmem:[%s605] sm:$0xff]
      %v607 = vld [vmem:[%s605 + $0x8] sm:$0xff]
      %v608 = vld [vmem:[%s605 + $0x10] sm:$0x3]
      %s609 = scalar_lea.vmem [#allocation2], 408
      %610 = vst.msk [vmem:[%s609] sm:$0xff] %vm600, %v606
      %611 = vst.msk [vmem:[%s609 + $0x8] sm:$0xff] %vm600, %v607
      %612 = vst.msk [vmem:[%s609 + $0x10] sm:$0x3] %vm603, %v608
      %v613 = vld [vmem:[%s304 + $0x1] sm:$0xff]
      %v614 = vld [vmem:[%s304 + $0x9] sm:$0xff]
      %v615 = vld [vmem:[%s304 + $0x19] sm:$0xff]
      %v616 = vld [vmem:[%s304 + $0x21] sm:$0xff]
      %v617 = vld [vmem:[%s304 + $0x31] sm:$0xff]
      %v618 = vld [vmem:[%s304 + $0x39] sm:$0xff]
      %v619 = vld [vmem:[%s304 + $0x49] sm:$0xff]
      %v620 = vld [vmem:[%s304 + $0x51] sm:$0xff]
      %v621 = vld [vmem:[%s304 + $0x61] sm:$0xff]
      %v622 = vld [vmem:[%s304 + $0x69] sm:$0xff]
      %v623 = vld [vmem:[%s304 + $0x79] sm:$0xff]
      %v624 = vld [vmem:[%s304 + $0x81] sm:$0xff]
      %v625 = vld [vmem:[%s304 + $0x91] sm:$0xff]
      %v626 = vld [vmem:[%s304 + $0x99] sm:$0xff]
      %v627 = vld [vmem:[%s304 + $0xa9] sm:$0xff]
      %v628 = vld [vmem:[%s304 + $0xb1] sm:$0xff]
      %v629 = vld [vmem:[%s304 + $0xc1] sm:$0xff]
      %v630 = vld [vmem:[%s304 + $0xc9] sm:$0xff]
      %v631 = vld [vmem:[%s304 + $0xd9] sm:$0xff]
      %v632 = vld [vmem:[%s304 + $0xe1] sm:$0xff]
      %v633 = vld [vmem:[%s304 + $0xf1] sm:$0xff]
      %v634 = vld [vmem:[%s304 + $0xf9] sm:$0xff]
      %v635 = vld [vmem:[%s304 + $0x109] sm:$0xff]
      %v636 = vld [vmem:[%s304 + $0x111] sm:$0xff]
      %v637 = vld [vmem:[%s304 + $0x121] sm:$0xff]
      %v638 = vld [vmem:[%s304 + $0x129] sm:$0xff]
      %v639 = vld [vmem:[%s304 + $0x139] sm:$0xff]
      %v640 = vld [vmem:[%s304 + $0x141] sm:$0xff]
      %v641 = vld [vmem:[%s304 + $0x151] sm:$0xff]
      %v642 = vld [vmem:[%s304 + $0x159] sm:$0xff]
      %v643 = vld [vmem:[%s304 + $0x169] sm:$0xff]
      %v644 = vld [vmem:[%s304 + $0x171] sm:$0xff]
      %v645 = vld [vmem:[%s2] sm:$0xff]
      %v646 = vld [vmem:[%s2 + $0x8] sm:$0xff]
      %v647 = vld [vmem:[%s2 + $0x10] sm:$0xff]
      %v648 = vld [vmem:[%s2 + $0x18] sm:$0xff]
      %v649 = vld [vmem:[%s2 + $0x20] sm:$0xff]
      %v650 = vld [vmem:[%s2 + $0x28] sm:$0xff]
      %v651 = vld [vmem:[%s2 + $0x30] sm:$0xff]
      %v652 = vld [vmem:[%s2 + $0x38] sm:$0xff]
      %v653 = vld [vmem:[%s2 + $0x40] sm:$0xff]
      %v654 = vld [vmem:[%s3] sm:$0x1]
      %v655 = vld [vmem:[#allocation2] sm:$0xff]
      %v656 = vld [vmem:[#allocation2 + $0x8] sm:$0xff]
      %v657 = vld [vmem:[#allocation2 + $0x18] sm:$0xff]
      %v658 = vld [vmem:[#allocation2 + $0x20] sm:$0xff]
      %v659 = vld [vmem:[#allocation2 + $0x30] sm:$0xff]
      %v660 = vld [vmem:[#allocation2 + $0x38] sm:$0xff]
      %v661 = vld [vmem:[#allocation2 + $0x48] sm:$0xff]
      %v662 = vld [vmem:[#allocation2 + $0x50] sm:$0xff]
      %v663 = vld [vmem:[#allocation2 + $0x60] sm:$0xff]
      %v664 = vld [vmem:[#allocation2 + $0x68] sm:$0xff]
      %v665 = vld [vmem:[#allocation2 + $0x78] sm:$0xff]
      %v666 = vld [vmem:[#allocation2 + $0x80] sm:$0xff]
      %v667 = vld [vmem:[#allocation2 + $0x90] sm:$0xff]
      %v668 = vld [vmem:[#allocation2 + $0x98] sm:$0xff]
      %v669 = vld [vmem:[#allocation2 + $0xa8] sm:$0xff]
      %v670 = vld [vmem:[#allocation2 + $0xb0] sm:$0xff]
      %v671 = vld [vmem:[#allocation2 + $0xc0] sm:$0xff]
      %v672 = vld [vmem:[#allocation2 + $0xc8] sm:$0xff]
      %v673 = vld [vmem:[#allocation2 + $0xd8] sm:$0xff]
      %v674 = vld [vmem:[#allocation2 + $0xe0] sm:$0xff]
      %v675 = vld [vmem:[#allocation2 + $0xf0] sm:$0xff]
      %v676 = vld [vmem:[#allocation2 + $0xf8] sm:$0xff]
      %v677 = vld [vmem:[#allocation2 + $0x108] sm:$0xff]
      %v678 = vld [vmem:[#allocation2 + $0x110] sm:$0xff]
      %v679 = vld [vmem:[#allocation2 + $0x120] sm:$0xff]
      %v680 = vld [vmem:[#allocation2 + $0x128] sm:$0xff]
      %v681 = vld [vmem:[#allocation2 + $0x138] sm:$0xff]
      %v682 = vld [vmem:[#allocation2 + $0x140] sm:$0xff]
      %v683 = vld [vmem:[#allocation2 + $0x150] sm:$0xff]
      %v684 = vld [vmem:[#allocation2 + $0x158] sm:$0xff]
      %v685 = vld [vmem:[#allocation2 + $0x168] sm:$0xff]
      %v686 = vld [vmem:[#allocation2 + $0x170] sm:$0xff]
      %687 = vst.msk [vmem:[#allocation3] sm:$0xff] %vm600, %v655
      %688 = vst.msk [vmem:[#allocation3 + $0x8] sm:$0xff] %vm600, %v656
      %689 = vst.msk [vmem:[#allocation3 + $0x10] sm:$0xff] %vm600, %v657
      %690 = vst.msk [vmem:[#allocation3 + $0x18] sm:$0xff] %vm600, %v658
      %691 = vst.msk [vmem:[#allocation3 + $0x20] sm:$0xff] %vm600, %v659
      %692 = vst.msk [vmem:[#allocation3 + $0x28] sm:$0xff] %vm600, %v660
      %693 = vst.msk [vmem:[#allocation3 + $0x30] sm:$0xff] %vm600, %v661
      %694 = vst.msk [vmem:[#allocation3 + $0x38] sm:$0xff] %vm600, %v662
      %695 = vst.msk [vmem:[#allocation3 + $0x40] sm:$0xff] %vm600, %v663
      %696 = vst.msk [vmem:[#allocation3 + $0x48] sm:$0xff] %vm600, %v664
      %697 = vst.msk [vmem:[#allocation3 + $0x50] sm:$0xff] %vm600, %v665
      %698 = vst.msk [vmem:[#allocation3 + $0x58] sm:$0xff] %vm600, %v666
      %699 = vst.msk [vmem:[#allocation3 + $0x60] sm:$0xff] %vm600, %v667
      %700 = vst.msk [vmem:[#allocation3 + $0x68] sm:$0xff] %vm600, %v668
      %701 = vst.msk [vmem:[#allocation3 + $0x70] sm:$0xff] %vm600, %v669
      %702 = vst.msk [vmem:[#allocation3 + $0x78] sm:$0xff] %vm600, %v670
      %703 = vst.msk [vmem:[#allocation3 + $0x80] sm:$0xff] %vm600, %v671
      %704 = vst.msk [vmem:[#allocation3 + $0x88] sm:$0xff] %vm600, %v672
      %705 = vst.msk [vmem:[#allocation3 + $0x90] sm:$0xff] %vm600, %v673
      %706 = vst.msk [vmem:[#allocation3 + $0x98] sm:$0xff] %vm600, %v674
      %707 = vst.msk [vmem:[#allocation3 + $0xa0] sm:$0xff] %vm600, %v675
      %708 = vst.msk [vmem:[#allocation3 + $0xa8] sm:$0xff] %vm600, %v676
      %709 = vst.msk [vmem:[#allocation3 + $0xb0] sm:$0xff] %vm600, %v677
      %710 = vst.msk [vmem:[#allocation3 + $0xb8] sm:$0xff] %vm600, %v678
      %711 = vst.msk [vmem:[#allocation3 + $0xc0] sm:$0xff] %vm600, %v679
      %712 = vst.msk [vmem:[#allocation3 + $0xc8] sm:$0xff] %vm600, %v680
      %713 = vst.msk [vmem:[#allocation3 + $0xd0] sm:$0xff] %vm600, %v681
      %714 = vst.msk [vmem:[#allocation3 + $0xd8] sm:$0xff] %vm600, %v682
      %715 = vst.msk [vmem:[#allocation3 + $0xe0] sm:$0xff] %vm600, %v683
      %716 = vst.msk [vmem:[#allocation3 + $0xe8] sm:$0xff] %vm600, %v684
      %717 = vst.msk [vmem:[#allocation3 + $0xf0] sm:$0xff] %vm600, %v685
      %718 = vst.msk [vmem:[#allocation3 + $0xf8] sm:$0xff] %vm600, %v686
      %v719 = vld [vmem:[#allocation2 + $0x1] sm:$0xff]
      %v720 = vld [vmem:[#allocation2 + $0x9] sm:$0xff]
      %v721 = vld [vmem:[#allocation2 + $0x19] sm:$0xff]
      %v722 = vld [vmem:[#allocation2 + $0x21] sm:$0xff]
      %v723 = vld [vmem:[#allocation2 + $0x31] sm:$0xff]
      %v724 = vld [vmem:[#allocation2 + $0x39] sm:$0xff]
      %v725 = vld [vmem:[#allocation2 + $0x49] sm:$0xff]
      %v726 = vld [vmem:[#allocation2 + $0x51] sm:$0xff]
      %v727 = vld [vmem:[#allocation2 + $0x61] sm:$0xff]
      %v728 = vld [vmem:[#allocation2 + $0x69] sm:$0xff]
      %v729 = vld [vmem:[#allocation2 + $0x79] sm:$0xff]
      %v730 = vld [vmem:[#allocation2 + $0x81] sm:$0xff]
      %v731 = vld [vmem:[#allocation2 + $0x91] sm:$0xff]
      %v732 = vld [vmem:[#allocation2 + $0x99] sm:$0xff]
      %v733 = vld [vmem:[#allocation2 + $0xa9] sm:$0xff]
      %v734 = vld [vmem:[#allocation2 + $0xb1] sm:$0xff]
      %v735 = vld [vmem:[#allocation2 + $0xc1] sm:$0xff]
      %v736 = vld [vmem:[#allocation2 + $0xc9] sm:$0xff]
      %v737 = vld [vmem:[#allocation2 + $0xd9] sm:$0xff]
      %v738 = vld [vmem:[#allocation2 + $0xe1] sm:$0xff]
      %v739 = vld [vmem:[#allocation2 + $0xf1] sm:$0xff]
      %v740 = vld [vmem:[#allocation2 + $0xf9] sm:$0xff]
      %v741 = vld [vmem:[#allocation2 + $0x109] sm:$0xff]
      %v742 = vld [vmem:[#allocation2 + $0x111] sm:$0xff]
      %v743 = vld [vmem:[#allocation2 + $0x121] sm:$0xff]
      %v744 = vld [vmem:[#allocation2 + $0x129] sm:$0xff]
      %v745 = vld [vmem:[#allocation2 + $0x139] sm:$0xff]
      %v746 = vld [vmem:[#allocation2 + $0x141] sm:$0xff]
      %v747 = vld [vmem:[#allocation2 + $0x151] sm:$0xff]
      %v748 = vld [vmem:[#allocation2 + $0x159] sm:$0xff]
      %v749 = vld [vmem:[#allocation2 + $0x169] sm:$0xff]
      %v750 = vld [vmem:[#allocation2 + $0x171] sm:$0xff]
      %783 = vrot.lane.b32.xlu0 %v719, 8
      %v784 = vpop.permute.xlu0 %783
      %785 = vrot.lane.b32.xlu0 %v720, 8
      %v786 = vpop.permute.xlu0 %785
      %787 = vrot.lane.b32.xlu0 %v721, 8
      %v788 = vpop.permute.xlu0 %787
      %789 = vrot.lane.b32.xlu0 %v722, 8
      %v790 = vpop.permute.xlu0 %789
      %791 = vrot.lane.b32.xlu0 %v723, 8
      %v792 = vpop.permute.xlu0 %791
      %793 = vrot.lane.b32.xlu0 %v724, 8
      %v794 = vpop.permute.xlu0 %793
      %795 = vrot.lane.b32.xlu0 %v725, 8
      %v796 = vpop.permute.xlu0 %795
      %797 = vrot.lane.b32.xlu0 %v726, 8
      %v798 = vpop.permute.xlu0 %797
      %799 = vrot.lane.b32.xlu0 %v727, 8
      %v800 = vpop.permute.xlu0 %799
      %801 = vrot.lane.b32.xlu0 %v728, 8
      %v802 = vpop.permute.xlu0 %801
      %803 = vrot.lane.b32.xlu0 %v729, 8
      %v804 = vpop.permute.xlu0 %803
      %805 = vrot.lane.b32.xlu0 %v730, 8
      %v806 = vpop.permute.xlu0 %805
      %807 = vrot.lane.b32.xlu0 %v731, 8
      %v808 = vpop.permute.xlu0 %807
      %809 = vrot.lane.b32.xlu0 %v732, 8
      %v810 = vpop.permute.xlu0 %809
      %811 = vrot.lane.b32.xlu0 %v733, 8
      %v812 = vpop.permute.xlu0 %811
      %813 = vrot.lane.b32.xlu0 %v734, 8
      %v814 = vpop.permute.xlu0 %813
      %815 = vrot.lane.b32.xlu0 %v735, 8
      %v816 = vpop.permute.xlu0 %815
      %817 = vrot.lane.b32.xlu0 %v736, 8
      %v818 = vpop.permute.xlu0 %817
      %819 = vrot.lane.b32.xlu0 %v737, 8
      %v820 = vpop.permute.xlu0 %819
      %821 = vrot.lane.b32.xlu0 %v738, 8
      %v822 = vpop.permute.xlu0 %821
      %823 = vrot.lane.b32.xlu0 %v739, 8
      %v824 = vpop.permute.xlu0 %823
      %825 = vrot.lane.b32.xlu0 %v740, 8
      %v826 = vpop.permute.xlu0 %825
      %827 = vrot.lane.b32.xlu0 %v741, 8
      %v828 = vpop.permute.xlu0 %827
      %829 = vrot.lane.b32.xlu0 %v742, 8
      %v830 = vpop.permute.xlu0 %829
      %831 = vrot.lane.b32.xlu0 %v743, 8
      %v832 = vpop.permute.xlu0 %831
      %833 = vrot.lane.b32.xlu0 %v744, 8
      %v834 = vpop.permute.xlu0 %833
      %835 = vrot.lane.b32.xlu0 %v745, 8
      %v836 = vpop.permute.xlu0 %835
      %837 = vrot.lane.b32.xlu0 %v746, 8
      %v838 = vpop.permute.xlu0 %837
      %839 = vrot.lane.b32.xlu0 %v747, 8
      %v840 = vpop.permute.xlu0 %839
      %841 = vrot.lane.b32.xlu0 %v748, 8
      %v842 = vpop.permute.xlu0 %841
      %843 = vrot.lane.b32.xlu0 %v749, 8
      %v844 = vpop.permute.xlu0 %843
      %845 = vrot.lane.b32.xlu0 %v750, 8
      %v846 = vpop.permute.xlu0 %845
      %vm879 = vcmask 130112
      %880 = vst.msk [vmem:[#allocation3] sm:$0xff] %vm879, %v784
      %881 = vst.msk [vmem:[#allocation3 + $0x8] sm:$0xff] %vm879, %v786
      %882 = vst.msk [vmem:[#allocation3 + $0x10] sm:$0xff] %vm879, %v788
      %883 = vst.msk [vmem:[#allocation3 + $0x18] sm:$0xff] %vm879, %v790
      %884 = vst.msk [vmem:[#allocation3 + $0x20] sm:$0xff] %vm879, %v792
      %885 = vst.msk [vmem:[#allocation3 + $0x28] sm:$0xff] %vm879, %v794
      %886 = vst.msk [vmem:[#allocation3 + $0x30] sm:$0xff] %vm879, %v796
      %887 = vst.msk [vmem:[#allocation3 + $0x38] sm:$0xff] %vm879, %v798
      %888 = vst.msk [vmem:[#allocation3 + $0x40] sm:$0xff] %vm879, %v800
      %889 = vst.msk [vmem:[#allocation3 + $0x48] sm:$0xff] %vm879, %v802
      %890 = vst.msk [vmem:[#allocation3 + $0x50] sm:$0xff] %vm879, %v804
      %891 = vst.msk [vmem:[#allocation3 + $0x58] sm:$0xff] %vm879, %v806
      %892 = vst.msk [vmem:[#allocation3 + $0x60] sm:$0xff] %vm879, %v808
      %893 = vst.msk [vmem:[#allocation3 + $0x68] sm:$0xff] %vm879, %v810
      %894 = vst.msk [vmem:[#allocation3 + $0x70] sm:$0xff] %vm879, %v812
      %895 = vst.msk [vmem:[#allocation3 + $0x78] sm:$0xff] %vm879, %v814
      %896 = vst.msk [vmem:[#allocation3 + $0x80] sm:$0xff] %vm879, %v816
      %897 = vst.msk [vmem:[#allocation3 + $0x88] sm:$0xff] %vm879, %v818
      %898 = vst.msk [vmem:[#allocation3 + $0x90] sm:$0xff] %vm879, %v820
      %899 = vst.msk [vmem:[#allocation3 + $0x98] sm:$0xff] %vm879, %v822
      %900 = vst.msk [vmem:[#allocation3 + $0xa0] sm:$0xff] %vm879, %v824
      %901 = vst.msk [vmem:[#allocation3 + $0xa8] sm:$0xff] %vm879, %v826
      %902 = vst.msk [vmem:[#allocation3 + $0xb0] sm:$0xff] %vm879, %v828
      %903 = vst.msk [vmem:[#allocation3 + $0xb8] sm:$0xff] %vm879, %v830
      %904 = vst.msk [vmem:[#allocation3 + $0xc0] sm:$0xff] %vm879, %v832
      %905 = vst.msk [vmem:[#allocation3 + $0xc8] sm:$0xff] %vm879, %v834
      %906 = vst.msk [vmem:[#allocation3 + $0xd0] sm:$0xff] %vm879, %v836
      %907 = vst.msk [vmem:[#allocation3 + $0xd8] sm:$0xff] %vm879, %v838
      %908 = vst.msk [vmem:[#allocation3 + $0xe0] sm:$0xff] %vm879, %v840
      %909 = vst.msk [vmem:[#allocation3 + $0xe8] sm:$0xff] %vm879, %v842
      %910 = vst.msk [vmem:[#allocation3 + $0xf0] sm:$0xff] %vm879, %v844
      %911 = vst.msk [vmem:[#allocation3 + $0xf8] sm:$0xff] %vm879, %v846
      %v912 = vld [vmem:[#allocation2 + $0x2] sm:$0xff]
      %v913 = vld [vmem:[#allocation2 + $0xa] sm:$0xff]
      %v914 = vld [vmem:[#allocation2 + $0x1a] sm:$0xff]
      %v915 = vld [vmem:[#allocation2 + $0x22] sm:$0xff]
      %v916 = vld [vmem:[#allocation2 + $0x32] sm:$0xff]
      %v917 = vld [vmem:[#allocation2 + $0x3a] sm:$0xff]
      %v918 = vld [vmem:[#allocation2 + $0x4a] sm:$0xff]
      %v919 = vld [vmem:[#allocation2 + $0x52] sm:$0xff]
      %v920 = vld [vmem:[#allocation2 + $0x62] sm:$0xff]
      %v921 = vld [vmem:[#allocation2 + $0x6a] sm:$0xff]
      %v922 = vld [vmem:[#allocation2 + $0x7a] sm:$0xff]
      %v923 = vld [vmem:[#allocation2 + $0x82] sm:$0xff]
      %v924 = vld [vmem:[#allocation2 + $0x92] sm:$0xff]
      %v925 = vld [vmem:[#allocation2 + $0x9a] sm:$0xff]
      %v926 = vld [vmem:[#allocation2 + $0xaa] sm:$0xff]
      %v927 = vld [vmem:[#allocation2 + $0xb2] sm:$0xff]
      %v928 = vld [vmem:[#allocation2 + $0xc2] sm:$0xff]
      %v929 = vld [vmem:[#allocation2 + $0xca] sm:$0xff]
      %v930 = vld [vmem:[#allocation2 + $0xda] sm:$0xff]
      %v931 = vld [vmem:[#allocation2 + $0xe2] sm:$0xff]
      %v932 = vld [vmem:[#allocation2 + $0xf2] sm:$0xff]
      %v933 = vld [vmem:[#allocation2 + $0xfa] sm:$0xff]
      %v934 = vld [vmem:[#allocation2 + $0x10a] sm:$0xff]
      %v935 = vld [vmem:[#allocation2 + $0x112] sm:$0xff]
      %v936 = vld [vmem:[#allocation2 + $0x122] sm:$0xff]
      %v937 = vld [vmem:[#allocation2 + $0x12a] sm:$0xff]
      %v938 = vld [vmem:[#allocation2 + $0x13a] sm:$0xff]
      %v939 = vld [vmem:[#allocation2 + $0x142] sm:$0xff]
      %v940 = vld [vmem:[#allocation2 + $0x152] sm:$0xff]
      %v941 = vld [vmem:[#allocation2 + $0x15a] sm:$0xff]
      %v942 = vld [vmem:[#allocation2 + $0x16a] sm:$0xff]
      %v943 = vld [vmem:[#allocation2 + $0x172] sm:$0xff]
      %976 = vrot.lane.b32.xlu0 %v912, 16
      %v977 = vpop.permute.xlu0 %976
      %978 = vrot.lane.b32.xlu0 %v913, 16
      %v979 = vpop.permute.xlu0 %978
      %980 = vrot.lane.b32.xlu0 %v914, 16
      %v981 = vpop.permute.xlu0 %980
      %982 = vrot.lane.b32.xlu0 %v915, 16
      %v983 = vpop.permute.xlu0 %982
      %984 = vrot.lane.b32.xlu0 %v916, 16
      %v985 = vpop.permute.xlu0 %984
      %986 = vrot.lane.b32.xlu0 %v917, 16
      %v987 = vpop.permute.xlu0 %986
      %988 = vrot.lane.b32.xlu0 %v918, 16
      %v989 = vpop.permute.xlu0 %988
      %990 = vrot.lane.b32.xlu0 %v919, 16
      %v991 = vpop.permute.xlu0 %990
      %992 = vrot.lane.b32.xlu0 %v920, 16
      %v993 = vpop.permute.xlu0 %992
      %994 = vrot.lane.b32.xlu0 %v921, 16
      %v995 = vpop.permute.xlu0 %994
      %996 = vrot.lane.b32.xlu0 %v922, 16
      %v997 = vpop.permute.xlu0 %996
      %998 = vrot.lane.b32.xlu0 %v923, 16
      %v999 = vpop.permute.xlu0 %998
      %1000 = vrot.lane.b32.xlu0 %v924, 16
      %v1001 = vpop.permute.xlu0 %1000
      %1002 = vrot.lane.b32.xlu0 %v925, 16
      %v1003 = vpop.permute.xlu0 %1002
      %1004 = vrot.lane.b32.xlu0 %v926, 16
      %v1005 = vpop.permute.xlu0 %1004
      %1006 = vrot.lane.b32.xlu0 %v927, 16
      %v1007 = vpop.permute.xlu0 %1006
      %1008 = vrot.lane.b32.xlu0 %v928, 16
      %v1009 = vpop.permute.xlu0 %1008
      %1010 = vrot.lane.b32.xlu0 %v929, 16
      %v1011 = vpop.permute.xlu0 %1010
      %1012 = vrot.lane.b32.xlu0 %v930, 16
      %v1013 = vpop.permute.xlu0 %1012
      %1014 = vrot.lane.b32.xlu0 %v931, 16
      %v1015 = vpop.permute.xlu0 %1014
      %1016 = vrot.lane.b32.xlu0 %v932, 16
      %v1017 = vpop.permute.xlu0 %1016
      %1018 = vrot.lane.b32.xlu0 %v933, 16
      %v1019 = vpop.permute.xlu0 %1018
      %1020 = vrot.lane.b32.xlu0 %v934, 16
      %v1021 = vpop.permute.xlu0 %1020
      %1022 = vrot.lane.b32.xlu0 %v935, 16
      %v1023 = vpop.permute.xlu0 %1022
      %1024 = vrot.lane.b32.xlu0 %v936, 16
      %v1025 = vpop.permute.xlu0 %1024
      %1026 = vrot.lane.b32.xlu0 %v937, 16
      %v1027 = vpop.permute.xlu0 %1026
      %1028 = vrot.lane.b32.xlu0 %v938, 16
      %v1029 = vpop.permute.xlu0 %1028
      %1030 = vrot.lane.b32.xlu0 %v939, 16
      %v1031 = vpop.permute.xlu0 %1030
      %1032 = vrot.lane.b32.xlu0 %v940, 16
      %v1033 = vpop.permute.xlu0 %1032
      %1034 = vrot.lane.b32.xlu0 %v941, 16
      %v1035 = vpop.permute.xlu0 %1034
      %1036 = vrot.lane.b32.xlu0 %v942, 16
      %v1037 = vpop.permute.xlu0 %1036
      %1038 = vrot.lane.b32.xlu0 %v943, 16
      %v1039 = vpop.permute.xlu0 %1038
      %vm1072 = vcmask 195712
      %1073 = vst.msk [vmem:[#allocation3] sm:$0xff] %vm1072, %v977
      %1074 = vst.msk [vmem:[#allocation3 + $0x8] sm:$0xff] %vm1072, %v979
      %1075 = vst.msk [vmem:[#allocation3 + $0x10] sm:$0xff] %vm1072, %v981
      %1076 = vst.msk [vmem:[#allocation3 + $0x18] sm:$0xff] %vm1072, %v983
      %1077 = vst.msk [vmem:[#allocation3 + $0x20] sm:$0xff] %vm1072, %v985
      %1078 = vst.msk [vmem:[#allocation3 + $0x28] sm:$0xff] %vm1072, %v987
      %1079 = vst.msk [vmem:[#allocation3 + $0x30] sm:$0xff] %vm1072, %v989
      %1080 = vst.msk [vmem:[#allocation3 + $0x38] sm:$0xff] %vm1072, %v991
      %1081 = vst.msk [vmem:[#allocation3 + $0x40] sm:$0xff] %vm1072, %v993
      %1082 = vst.msk [vmem:[#allocation3 + $0x48] sm:$0xff] %vm1072, %v995
      %1083 = vst.msk [vmem:[#allocation3 + $0x50] sm:$0xff] %vm1072, %v997
      %1084 = vst.msk [vmem:[#allocation3 + $0x58] sm:$0xff] %vm1072, %v999
      %1085 = vst.msk [vmem:[#allocation3 + $0x60] sm:$0xff] %vm1072, %v1001
      %1086 = vst.msk [vmem:[#allocation3 + $0x68] sm:$0xff] %vm1072, %v1003
      %1087 = vst.msk [vmem:[#allocation3 + $0x70] sm:$0xff] %vm1072, %v1005
      %1088 = vst.msk [vmem:[#allocation3 + $0x78] sm:$0xff] %vm1072, %v1007
      %1089 = vst.msk [vmem:[#allocation3 + $0x80] sm:$0xff] %vm1072, %v1009
      %1090 = vst.msk [vmem:[#allocation3 + $0x88] sm:$0xff] %vm1072, %v1011
      %1091 = vst.msk [vmem:[#allocation3 + $0x90] sm:$0xff] %vm1072, %v1013
      %1092 = vst.msk [vmem:[#allocation3 + $0x98] sm:$0xff] %vm1072, %v1015
      %1093 = vst.msk [vmem:[#allocation3 + $0xa0] sm:$0xff] %vm1072, %v1017
      %1094 = vst.msk [vmem:[#allocation3 + $0xa8] sm:$0xff] %vm1072, %v1019
      %1095 = vst.msk [vmem:[#allocation3 + $0xb0] sm:$0xff] %vm1072, %v1021
      %1096 = vst.msk [vmem:[#allocation3 + $0xb8] sm:$0xff] %vm1072, %v1023
      %1097 = vst.msk [vmem:[#allocation3 + $0xc0] sm:$0xff] %vm1072, %v1025
      %1098 = vst.msk [vmem:[#allocation3 + $0xc8] sm:$0xff] %vm1072, %v1027
      %1099 = vst.msk [vmem:[#allocation3 + $0xd0] sm:$0xff] %vm1072, %v1029
      %1100 = vst.msk [vmem:[#allocation3 + $0xd8] sm:$0xff] %vm1072, %v1031
      %1101 = vst.msk [vmem:[#allocation3 + $0xe0] sm:$0xff] %vm1072, %v1033
      %1102 = vst.msk [vmem:[#allocation3 + $0xe8] sm:$0xff] %vm1072, %v1035
      %1103 = vst.msk [vmem:[#allocation3 + $0xf0] sm:$0xff] %vm1072, %v1037
      %1104 = vst.msk [vmem:[#allocation3 + $0xf8] sm:$0xff] %vm1072, %v1039
      %v1105 = vld [vmem:[%s304] sm:$0xff]
      %v1106 = vld [vmem:[%s304 + $0x8] sm:$0xff]
      %v1107 = vld [vmem:[%s304 + $0x18] sm:$0xff]
      %v1108 = vld [vmem:[%s304 + $0x20] sm:$0xff]
      %v1109 = vld [vmem:[%s304 + $0x30] sm:$0xff]
      %v1110 = vld [vmem:[%s304 + $0x38] sm:$0xff]
      %v1111 = vld [vmem:[%s304 + $0x48] sm:$0xff]
      %v1112 = vld [vmem:[%s304 + $0x50] sm:$0xff]
      %v1113 = vld [vmem:[%s304 + $0x60] sm:$0xff]
      %v1114 = vld [vmem:[%s304 + $0x68] sm:$0xff]
      %v1115 = vld [vmem:[%s304 + $0x78] sm:$0xff]
      %v1116 = vld [vmem:[%s304 + $0x80] sm:$0xff]
      %v1117 = vld [vmem:[%s304 + $0x90] sm:$0xff]
      %v1118 = vld [vmem:[%s304 + $0x98] sm:$0xff]
      %v1119 = vld [vmem:[%s304 + $0xa8] sm:$0xff]
      %v1120 = vld [vmem:[%s304 + $0xb0] sm:$0xff]
      %v1121 = vld [vmem:[%s304 + $0xc0] sm:$0xff]
      %v1122 = vld [vmem:[%s304 + $0xc8] sm:$0xff]
      %v1123 = vld [vmem:[%s304 + $0xd8] sm:$0xff]
      %v1124 = vld [vmem:[%s304 + $0xe0] sm:$0xff]
      %v1125 = vld [vmem:[%s304 + $0xf0] sm:$0xff]
      %v1126 = vld [vmem:[%s304 + $0xf8] sm:$0xff]
      %v1127 = vld [vmem:[%s304 + $0x108] sm:$0xff]
      %v1128 = vld [vmem:[%s304 + $0x110] sm:$0xff]
      %v1129 = vld [vmem:[%s304 + $0x120] sm:$0xff]
      %v1130 = vld [vmem:[%s304 + $0x128] sm:$0xff]
      %v1131 = vld [vmem:[%s304 + $0x138] sm:$0xff]
      %v1132 = vld [vmem:[%s304 + $0x140] sm:$0xff]
      %v1133 = vld [vmem:[%s304 + $0x150] sm:$0xff]
      %v1134 = vld [vmem:[%s304 + $0x158] sm:$0xff]
      %v1135 = vld [vmem:[%s304 + $0x168] sm:$0xff]
      %v1136 = vld [vmem:[%s304 + $0x170] sm:$0xff]
      %1169 = vrot.lane.b32.xlu0 %v1105, 24
      %v1170 = vpop.permute.xlu0 %1169
      %1171 = vrot.lane.b32.xlu0 %v1106, 24
      %v1172 = vpop.permute.xlu0 %1171
      %1173 = vrot.lane.b32.xlu0 %v1107, 24
      %v1174 = vpop.permute.xlu0 %1173
      %1175 = vrot.lane.b32.xlu0 %v1108, 24
      %v1176 = vpop.permute.xlu0 %1175
      %1177 = vrot.lane.b32.xlu0 %v1109, 24
      %v1178 = vpop.permute.xlu0 %1177
      %1179 = vrot.lane.b32.xlu0 %v1110, 24
      %v1180 = vpop.permute.xlu0 %1179
      %1181 = vrot.lane.b32.xlu0 %v1111, 24
      %v1182 = vpop.permute.xlu0 %1181
      %1183 = vrot.lane.b32.xlu0 %v1112, 24
      %v1184 = vpop.permute.xlu0 %1183
      %1185 = vrot.lane.b32.xlu0 %v1113, 24
      %v1186 = vpop.permute.xlu0 %1185
      %1187 = vrot.lane.b32.xlu0 %v1114, 24
      %v1188 = vpop.permute.xlu0 %1187
      %1189 = vrot.lane.b32.xlu0 %v1115, 24
      %v1190 = vpop.permute.xlu0 %1189
      %1191 = vrot.lane.b32.xlu0 %v1116, 24
      %v1192 = vpop.permute.xlu0 %1191
      %1193 = vrot.lane.b32.xlu0 %v1117, 24
      %v1194 = vpop.permute.xlu0 %1193
      %1195 = vrot.lane.b32.xlu0 %v1118, 24
      %v1196 = vpop.permute.xlu0 %1195
      %1197 = vrot.lane.b32.xlu0 %v1119, 24
      %v1198 = vpop.permute.xlu0 %1197
      %1199 = vrot.lane.b32.xlu0 %v1120, 24
      %v1200 = vpop.permute.xlu0 %1199
      %1201 = vrot.lane.b32.xlu0 %v1121, 24
      %v1202 = vpop.permute.xlu0 %1201
      %1203 = vrot.lane.b32.xlu0 %v1122, 24
      %v1204 = vpop.permute.xlu0 %1203
      %1205 = vrot.lane.b32.xlu0 %v1123, 24
      %v1206 = vpop.permute.xlu0 %1205
      %1207 = vrot.lane.b32.xlu0 %v1124, 24
      %v1208 = vpop.permute.xlu0 %1207
      %1209 = vrot.lane.b32.xlu0 %v1125, 24
      %v1210 = vpop.permute.xlu0 %1209
      %1211 = vrot.lane.b32.xlu0 %v1126, 24
      %v1212 = vpop.permute.xlu0 %1211
      %1213 = vrot.lane.b32.xlu0 %v1127, 24
      %v1214 = vpop.permute.xlu0 %1213
      %1215 = vrot.lane.b32.xlu0 %v1128, 24
      %v1216 = vpop.permute.xlu0 %1215
      %1217 = vrot.lane.b32.xlu0 %v1129, 24
      %v1218 = vpop.permute.xlu0 %1217
      %1219 = vrot.lane.b32.xlu0 %v1130, 24
      %v1220 = vpop.permute.xlu0 %1219
      %1221 = vrot.lane.b32.xlu0 %v1131, 24
      %v1222 = vpop.permute.xlu0 %1221
      %1223 = vrot.lane.b32.xlu0 %v1132, 24
      %v1224 = vpop.permute.xlu0 %1223
      %1225 = vrot.lane.b32.xlu0 %v1133, 24
      %v1226 = vpop.permute.xlu0 %1225
      %1227 = vrot.lane.b32.xlu0 %v1134, 24
      %v1228 = vpop.permute.xlu0 %1227
      %1229 = vrot.lane.b32.xlu0 %v1135, 24
      %v1230 = vpop.permute.xlu0 %1229
      %1231 = vrot.lane.b32.xlu0 %v1136, 24
      %v1232 = vpop.permute.xlu0 %1231
      %vm1265 = vcmask 261312
      %1266 = vst.msk [vmem:[#allocation3] sm:$0xff] %vm1265, %v1170
      %1267 = vst.msk [vmem:[#allocation3 + $0x8] sm:$0xff] %vm1265, %v1172
      %1268 = vst.msk [vmem:[#allocation3 + $0x10] sm:$0xff] %vm1265, %v1174
      %1269 = vst.msk [vmem:[#allocation3 + $0x18] sm:$0xff] %vm1265, %v1176
      %1270 = vst.msk [vmem:[#allocation3 + $0x20] sm:$0xff] %vm1265, %v1178
      %1271 = vst.msk [vmem:[#allocation3 + $0x28] sm:$0xff] %vm1265, %v1180
      %1272 = vst.msk [vmem:[#allocation3 + $0x30] sm:$0xff] %vm1265, %v1182
      %1273 = vst.msk [vmem:[#allocation3 + $0x38] sm:$0xff] %vm1265, %v1184
      %1274 = vst.msk [vmem:[#allocation3 + $0x40] sm:$0xff] %vm1265, %v1186
      %1275 = vst.msk [vmem:[#allocation3 + $0x48] sm:$0xff] %vm1265, %v1188
      %1276 = vst.msk [vmem:[#allocation3 + $0x50] sm:$0xff] %vm1265, %v1190
      %1277 = vst.msk [vmem:[#allocation3 + $0x58] sm:$0xff] %vm1265, %v1192
      %1278 = vst.msk [vmem:[#allocation3 + $0x60] sm:$0xff] %vm1265, %v1194
      %1279 = vst.msk [vmem:[#allocation3 + $0x68] sm:$0xff] %vm1265, %v1196
      %1280 = vst.msk [vmem:[#allocation3 + $0x70] sm:$0xff] %vm1265, %v1198
      %1281 = vst.msk [vmem:[#allocation3 + $0x78] sm:$0xff] %vm1265, %v1200
      %1282 = vst.msk [vmem:[#allocation3 + $0x80] sm:$0xff] %vm1265, %v1202
      %1283 = vst.msk [vmem:[#allocation3 + $0x88] sm:$0xff] %vm1265, %v1204
      %1284 = vst.msk [vmem:[#allocation3 + $0x90] sm:$0xff] %vm1265, %v1206
      %1285 = vst.msk [vmem:[#allocation3 + $0x98] sm:$0xff] %vm1265, %v1208
      %1286 = vst.msk [vmem:[#allocation3 + $0xa0] sm:$0xff] %vm1265, %v1210
      %1287 = vst.msk [vmem:[#allocation3 + $0xa8] sm:$0xff] %vm1265, %v1212
      %1288 = vst.msk [vmem:[#allocation3 + $0xb0] sm:$0xff] %vm1265, %v1214
      %1289 = vst.msk [vmem:[#allocation3 + $0xb8] sm:$0xff] %vm1265, %v1216
      %1290 = vst.msk [vmem:[#allocation3 + $0xc0] sm:$0xff] %vm1265, %v1218
      %1291 = vst.msk [vmem:[#allocation3 + $0xc8] sm:$0xff] %vm1265, %v1220
      %1292 = vst.msk [vmem:[#allocation3 + $0xd0] sm:$0xff] %vm1265, %v1222
      %1293 = vst.msk [vmem:[#allocation3 + $0xd8] sm:$0xff] %vm1265, %v1224
      %1294 = vst.msk [vmem:[#allocation3 + $0xe0] sm:$0xff] %vm1265, %v1226
      %1295 = vst.msk [vmem:[#allocation3 + $0xe8] sm:$0xff] %vm1265, %v1228
      %1296 = vst.msk [vmem:[#allocation3 + $0xf0] sm:$0xff] %vm1265, %v1230
      %1297 = vst.msk [vmem:[#allocation3 + $0xf8] sm:$0xff] %vm1265, %v1232
      %v1298 = vld [vmem:[%s304 + $0x1] sm:$0xff]
      %v1299 = vld [vmem:[%s304 + $0x9] sm:$0xff]
      %v1300 = vld [vmem:[%s304 + $0x19] sm:$0xff]
      %v1301 = vld [vmem:[%s304 + $0x21] sm:$0xff]
      %v1302 = vld [vmem:[%s304 + $0x31] sm:$0xff]
      %v1303 = vld [vmem:[%s304 + $0x39] sm:$0xff]
      %v1304 = vld [vmem:[%s304 + $0x49] sm:$0xff]
      %v1305 = vld [vmem:[%s304 + $0x51] sm:$0xff]
      %v1306 = vld [vmem:[%s304 + $0x61] sm:$0xff]
      %v1307 = vld [vmem:[%s304 + $0x69] sm:$0xff]
      %v1308 = vld [vmem:[%s304 + $0x79] sm:$0xff]
      %v1309 = vld [vmem:[%s304 + $0x81] sm:$0xff]
      %v1310 = vld [vmem:[%s304 + $0x91] sm:$0xff]
      %v1311 = vld [vmem:[%s304 + $0x99] sm:$0xff]
      %v1312 = vld [vmem:[%s304 + $0xa9] sm:$0xff]
      %v1313 = vld [vmem:[%s304 + $0xb1] sm:$0xff]
      %v1314 = vld [vmem:[%s304 + $0xc1] sm:$0xff]
      %v1315 = vld [vmem:[%s304 + $0xc9] sm:$0xff]
      %v1316 = vld [vmem:[%s304 + $0xd9] sm:$0xff]
      %v1317 = vld [vmem:[%s304 + $0xe1] sm:$0xff]
      %v1318 = vld [vmem:[%s304 + $0xf1] sm:$0xff]
      %v1319 = vld [vmem:[%s304 + $0xf9] sm:$0xff]
      %v1320 = vld [vmem:[%s304 + $0x109] sm:$0xff]
      %v1321 = vld [vmem:[%s304 + $0x111] sm:$0xff]
      %v1322 = vld [vmem:[%s304 + $0x121] sm:$0xff]
      %v1323 = vld [vmem:[%s304 + $0x129] sm:$0xff]
      %v1324 = vld [vmem:[%s304 + $0x139] sm:$0xff]
      %v1325 = vld [vmem:[%s304 + $0x141] sm:$0xff]
      %v1326 = vld [vmem:[%s304 + $0x151] sm:$0xff]
      %v1327 = vld [vmem:[%s304 + $0x159] sm:$0xff]
      %v1328 = vld [vmem:[%s304 + $0x169] sm:$0xff]
      %v1329 = vld [vmem:[%s304 + $0x171] sm:$0xff]
      %1362 = vrot.lane.b32.xlu0 %v1298, 32
      %v1363 = vpop.permute.xlu0 %1362
      %1364 = vrot.lane.b32.xlu0 %v1299, 32
      %v1365 = vpop.permute.xlu0 %1364
      %1366 = vrot.lane.b32.xlu0 %v1300, 32
      %v1367 = vpop.permute.xlu0 %1366
      %1368 = vrot.lane.b32.xlu0 %v1301, 32
      %v1369 = vpop.permute.xlu0 %1368
      %1370 = vrot.lane.b32.xlu0 %v1302, 32
      %v1371 = vpop.permute.xlu0 %1370
      %1372 = vrot.lane.b32.xlu0 %v1303, 32
      %v1373 = vpop.permute.xlu0 %1372
      %1374 = vrot.lane.b32.xlu0 %v1304, 32
      %v1375 = vpop.permute.xlu0 %1374
      %1376 = vrot.lane.b32.xlu0 %v1305, 32
      %v1377 = vpop.permute.xlu0 %1376
      %1378 = vrot.lane.b32.xlu0 %v1306, 32
      %v1379 = vpop.permute.xlu0 %1378
      %1380 = vrot.lane.b32.xlu0 %v1307, 32
      %v1381 = vpop.permute.xlu0 %1380
      %1382 = vrot.lane.b32.xlu0 %v1308, 32
      %v1383 = vpop.permute.xlu0 %1382
      %1384 = vrot.lane.b32.xlu0 %v1309, 32
      %v1385 = vpop.permute.xlu0 %1384
      %1386 = vrot.lane.b32.xlu0 %v1310, 32
      %v1387 = vpop.permute.xlu0 %1386
      %1388 = vrot.lane.b32.xlu0 %v1311, 32
      %v1389 = vpop.permute.xlu0 %1388
      %1390 = vrot.lane.b32.xlu0 %v1312, 32
      %v1391 = vpop.permute.xlu0 %1390
      %1392 = vrot.lane.b32.xlu0 %v1313, 32
      %v1393 = vpop.permute.xlu0 %1392
      %1394 = vrot.lane.b32.xlu0 %v1314, 32
      %v1395 = vpop.permute.xlu0 %1394
      %1396 = vrot.lane.b32.xlu0 %v1315, 32
      %v1397 = vpop.permute.xlu0 %1396
      %1398 = vrot.lane.b32.xlu0 %v1316, 32
      %v1399 = vpop.permute.xlu0 %1398
      %1400 = vrot.lane.b32.xlu0 %v1317, 32
      %v1401 = vpop.permute.xlu0 %1400
      %1402 = vrot.lane.b32.xlu0 %v1318, 32
      %v1403 = vpop.permute.xlu0 %1402
      %1404 = vrot.lane.b32.xlu0 %v1319, 32
      %v1405 = vpop.permute.xlu0 %1404
      %1406 = vrot.lane.b32.xlu0 %v1320, 32
      %v1407 = vpop.permute.xlu0 %1406
      %1408 = vrot.lane.b32.xlu0 %v1321, 32
      %v1409 = vpop.permute.xlu0 %1408
      %1410 = vrot.lane.b32.xlu0 %v1322, 32
      %v1411 = vpop.permute.xlu0 %1410
      %1412 = vrot.lane.b32.xlu0 %v1323, 32
      %v1413 = vpop.permute.xlu0 %1412
      %1414 = vrot.lane.b32.xlu0 %v1324, 32
      %v1415 = vpop.permute.xlu0 %1414
      %1416 = vrot.lane.b32.xlu0 %v1325, 32
      %v1417 = vpop.permute.xlu0 %1416
      %1418 = vrot.lane.b32.xlu0 %v1326, 32
      %v1419 = vpop.permute.xlu0 %1418
      %1420 = vrot.lane.b32.xlu0 %v1327, 32
      %v1421 = vpop.permute.xlu0 %1420
      %1422 = vrot.lane.b32.xlu0 %v1328, 32
      %v1423 = vpop.permute.xlu0 %1422
      %1424 = vrot.lane.b32.xlu0 %v1329, 32
      %v1425 = vpop.permute.xlu0 %1424
      %vm1458 = vcmask 326912
      %1459 = vst.msk [vmem:[#allocation3] sm:$0xff] %vm1458, %v1363
      %1460 = vst.msk [vmem:[#allocation3 + $0x8] sm:$0xff] %vm1458, %v1365
      %1461 = vst.msk [vmem:[#allocation3 + $0x10] sm:$0xff] %vm1458, %v1367
      %1462 = vst.msk [vmem:[#allocation3 + $0x18] sm:$0xff] %vm1458, %v1369
      %1463 = vst.msk [vmem:[#allocation3 + $0x20] sm:$0xff] %vm1458, %v1371
      %1464 = vst.msk [vmem:[#allocation3 + $0x28] sm:$0xff] %vm1458, %v1373
      %1465 = vst.msk [vmem:[#allocation3 + $0x30] sm:$0xff] %vm1458, %v1375
      %1466 = vst.msk [vmem:[#allocation3 + $0x38] sm:$0xff] %vm1458, %v1377
      %1467 = vst.msk [vmem:[#allocation3 + $0x40] sm:$0xff] %vm1458, %v1379
      %1468 = vst.msk [vmem:[#allocation3 + $0x48] sm:$0xff] %vm1458, %v1381
      %1469 = vst.msk [vmem:[#allocation3 + $0x50] sm:$0xff] %vm1458, %v1383
      %1470 = vst.msk [vmem:[#allocation3 + $0x58] sm:$0xff] %vm1458, %v1385
      %1471 = vst.msk [vmem:[#allocation3 + $0x60] sm:$0xff] %vm1458, %v1387
      %1472 = vst.msk [vmem:[#allocation3 + $0x68] sm:$0xff] %vm1458, %v1389
      %1473 = vst.msk [vmem:[#allocation3 + $0x70] sm:$0xff] %vm1458, %v1391
      %1474 = vst.msk [vmem:[#allocation3 + $0x78] sm:$0xff] %vm1458, %v1393
      %1475 = vst.msk [vmem:[#allocation3 + $0x80] sm:$0xff] %vm1458, %v1395
      %1476 = vst.msk [vmem:[#allocation3 + $0x88] sm:$0xff] %vm1458, %v1397
      %1477 = vst.msk [vmem:[#allocation3 + $0x90] sm:$0xff] %vm1458, %v1399
      %1478 = vst.msk [vmem:[#allocation3 + $0x98] sm:$0xff] %vm1458, %v1401
      %1479 = vst.msk [vmem:[#allocation3 + $0xa0] sm:$0xff] %vm1458, %v1403
      %1480 = vst.msk [vmem:[#allocation3 + $0xa8] sm:$0xff] %vm1458, %v1405
      %1481 = vst.msk [vmem:[#allocation3 + $0xb0] sm:$0xff] %vm1458, %v1407
      %1482 = vst.msk [vmem:[#allocation3 + $0xb8] sm:$0xff] %vm1458, %v1409
      %1483 = vst.msk [vmem:[#allocation3 + $0xc0] sm:$0xff] %vm1458, %v1411
      %1484 = vst.msk [vmem:[#allocation3 + $0xc8] sm:$0xff] %vm1458, %v1413
      %1485 = vst.msk [vmem:[#allocation3 + $0xd0] sm:$0xff] %vm1458, %v1415
      %1486 = vst.msk [vmem:[#allocation3 + $0xd8] sm:$0xff] %vm1458, %v1417
      %1487 = vst.msk [vmem:[#allocation3 + $0xe0] sm:$0xff] %vm1458, %v1419
      %1488 = vst.msk [vmem:[#allocation3 + $0xe8] sm:$0xff] %vm1458, %v1421
      %1489 = vst.msk [vmem:[#allocation3 + $0xf0] sm:$0xff] %vm1458, %v1423
      %1490 = vst.msk [vmem:[#allocation3 + $0xf8] sm:$0xff] %vm1458, %v1425
      %v1491 = vld [vmem:[%s304 + $0x2] sm:$0xff]
      %v1492 = vld [vmem:[%s304 + $0xa] sm:$0xff]
      %v1493 = vld [vmem:[%s304 + $0x1a] sm:$0xff]
      %v1494 = vld [vmem:[%s304 + $0x22] sm:$0xff]
      %v1495 = vld [vmem:[%s304 + $0x32] sm:$0xff]
      %v1496 = vld [vmem:[%s304 + $0x3a] sm:$0xff]
      %v1497 = vld [vmem:[%s304 + $0x4a] sm:$0xff]
      %v1498 = vld [vmem:[%s304 + $0x52] sm:$0xff]
      %v1499 = vld [vmem:[%s304 + $0x62] sm:$0xff]
      %v1500 = vld [vmem:[%s304 + $0x6a] sm:$0xff]
      %v1501 = vld [vmem:[%s304 + $0x7a] sm:$0xff]
      %v1502 = vld [vmem:[%s304 + $0x82] sm:$0xff]
      %v1503 = vld [vmem:[%s304 + $0x92] sm:$0xff]
      %v1504 = vld [vmem:[%s304 + $0x9a] sm:$0xff]
      %v1505 = vld [vmem:[%s304 + $0xaa] sm:$0xff]
      %v1506 = vld [vmem:[%s304 + $0xb2] sm:$0xff]
      %v1507 = vld [vmem:[%s304 + $0xc2] sm:$0xff]
      %v1508 = vld [vmem:[%s304 + $0xca] sm:$0xff]
      %v1509 = vld [vmem:[%s304 + $0xda] sm:$0xff]
      %v1510 = vld [vmem:[%s304 + $0xe2] sm:$0xff]
      %v1511 = vld [vmem:[%s304 + $0xf2] sm:$0xff]
      %v1512 = vld [vmem:[%s304 + $0xfa] sm:$0xff]
      %v1513 = vld [vmem:[%s304 + $0x10a] sm:$0xff]
      %v1514 = vld [vmem:[%s304 + $0x112] sm:$0xff]
      %v1515 = vld [vmem:[%s304 + $0x122] sm:$0xff]
      %v1516 = vld [vmem:[%s304 + $0x12a] sm:$0xff]
      %v1517 = vld [vmem:[%s304 + $0x13a] sm:$0xff]
      %v1518 = vld [vmem:[%s304 + $0x142] sm:$0xff]
      %v1519 = vld [vmem:[%s304 + $0x152] sm:$0xff]
      %v1520 = vld [vmem:[%s304 + $0x15a] sm:$0xff]
      %v1521 = vld [vmem:[%s304 + $0x16a] sm:$0xff]
      %v1522 = vld [vmem:[%s304 + $0x172] sm:$0xff]
      %1555 = vrot.lane.b32.xlu0 %v1491, 40
      %v1556 = vpop.permute.xlu0 %1555
      %1557 = vrot.lane.b32.xlu0 %v1492, 40
      %v1558 = vpop.permute.xlu0 %1557
      %1559 = vrot.lane.b32.xlu0 %v1493, 40
      %v1560 = vpop.permute.xlu0 %1559
      %1561 = vrot.lane.b32.xlu0 %v1494, 40
      %v1562 = vpop.permute.xlu0 %1561
      %1563 = vrot.lane.b32.xlu0 %v1495, 40
      %v1564 = vpop.permute.xlu0 %1563
      %1565 = vrot.lane.b32.xlu0 %v1496, 40
      %v1566 = vpop.permute.xlu0 %1565
      %1567 = vrot.lane.b32.xlu0 %v1497, 40
      %v1568 = vpop.permute.xlu0 %1567
      %1569 = vrot.lane.b32.xlu0 %v1498, 40
      %v1570 = vpop.permute.xlu0 %1569
      %1571 = vrot.lane.b32.xlu0 %v1499, 40
      %v1572 = vpop.permute.xlu0 %1571
      %1573 = vrot.lane.b32.xlu0 %v1500, 40
      %v1574 = vpop.permute.xlu0 %1573
      %1575 = vrot.lane.b32.xlu0 %v1501, 40
      %v1576 = vpop.permute.xlu0 %1575
      %1577 = vrot.lane.b32.xlu0 %v1502, 40
      %v1578 = vpop.permute.xlu0 %1577
      %1579 = vrot.lane.b32.xlu0 %v1503, 40
      %v1580 = vpop.permute.xlu0 %1579
      %1581 = vrot.lane.b32.xlu0 %v1504, 40
      %v1582 = vpop.permute.xlu0 %1581
      %1583 = vrot.lane.b32.xlu0 %v1505, 40
      %v1584 = vpop.permute.xlu0 %1583
      %1585 = vrot.lane.b32.xlu0 %v1506, 40
      %v1586 = vpop.permute.xlu0 %1585
      %1587 = vrot.lane.b32.xlu0 %v1507, 40
      %v1588 = vpop.permute.xlu0 %1587
      %1589 = vrot.lane.b32.xlu0 %v1508, 40
      %v1590 = vpop.permute.xlu0 %1589
      %1591 = vrot.lane.b32.xlu0 %v1509, 40
      %v1592 = vpop.permute.xlu0 %1591
      %1593 = vrot.lane.b32.xlu0 %v1510, 40
      %v1594 = vpop.permute.xlu0 %1593
      %1595 = vrot.lane.b32.xlu0 %v1511, 40
      %v1596 = vpop.permute.xlu0 %1595
      %1597 = vrot.lane.b32.xlu0 %v1512, 40
      %v1598 = vpop.permute.xlu0 %1597
      %1599 = vrot.lane.b32.xlu0 %v1513, 40
      %v1600 = vpop.permute.xlu0 %1599
      %1601 = vrot.lane.b32.xlu0 %v1514, 40
      %v1602 = vpop.permute.xlu0 %1601
      %1603 = vrot.lane.b32.xlu0 %v1515, 40
      %v1604 = vpop.permute.xlu0 %1603
      %1605 = vrot.lane.b32.xlu0 %v1516, 40
      %v1606 = vpop.permute.xlu0 %1605
      %1607 = vrot.lane.b32.xlu0 %v1517, 40
      %v1608 = vpop.permute.xlu0 %1607
      %1609 = vrot.lane.b32.xlu0 %v1518, 40
      %v1610 = vpop.permute.xlu0 %1609
      %1611 = vrot.lane.b32.xlu0 %v1519, 40
      %v1612 = vpop.permute.xlu0 %1611
      %1613 = vrot.lane.b32.xlu0 %v1520, 40
      %v1614 = vpop.permute.xlu0 %1613
      %1615 = vrot.lane.b32.xlu0 %v1521, 40
      %v1616 = vpop.permute.xlu0 %1615
      %1617 = vrot.lane.b32.xlu0 %v1522, 40
      %v1618 = vpop.permute.xlu0 %1617
      %vm1651 = vcmask 392512
      %1652 = vst.msk [vmem:[#allocation3] sm:$0xff] %vm1651, %v1556
      %1653 = vst.msk [vmem:[#allocation3 + $0x8] sm:$0xff] %vm1651, %v1558
      %1654 = vst.msk [vmem:[#allocation3 + $0x10] sm:$0xff] %vm1651, %v1560
      %1655 = vst.msk [vmem:[#allocation3 + $0x18] sm:$0xff] %vm1651, %v1562
      %1656 = vst.msk [vmem:[#allocation3 + $0x20] sm:$0xff] %vm1651, %v1564
      %1657 = vst.msk [vmem:[#allocation3 + $0x28] sm:$0xff] %vm1651, %v1566
      %1658 = vst.msk [vmem:[#allocation3 + $0x30] sm:$0xff] %vm1651, %v1568
      %1659 = vst.msk [vmem:[#allocation3 + $0x38] sm:$0xff] %vm1651, %v1570
      %1660 = vst.msk [vmem:[#allocation3 + $0x40] sm:$0xff] %vm1651, %v1572
      %1661 = vst.msk [vmem:[#allocation3 + $0x48] sm:$0xff] %vm1651, %v1574
      %1662 = vst.msk [vmem:[#allocation3 + $0x50] sm:$0xff] %vm1651, %v1576
      %1663 = vst.msk [vmem:[#allocation3 + $0x58] sm:$0xff] %vm1651, %v1578
      %1664 = vst.msk [vmem:[#allocation3 + $0x60] sm:$0xff] %vm1651, %v1580
      %1665 = vst.msk [vmem:[#allocation3 + $0x68] sm:$0xff] %vm1651, %v1582
      %1666 = vst.msk [vmem:[#allocation3 + $0x70] sm:$0xff] %vm1651, %v1584
      %1667 = vst.msk [vmem:[#allocation3 + $0x78] sm:$0xff] %vm1651, %v1586
      %1668 = vst.msk [vmem:[#allocation3 + $0x80] sm:$0xff] %vm1651, %v1588
      %1669 = vst.msk [vmem:[#allocation3 + $0x88] sm:$0xff] %vm1651, %v1590
      %1670 = vst.msk [vmem:[#allocation3 + $0x90] sm:$0xff] %vm1651, %v1592
      %1671 = vst.msk [vmem:[#allocation3 + $0x98] sm:$0xff] %vm1651, %v1594
      %1672 = vst.msk [vmem:[#allocation3 + $0xa0] sm:$0xff] %vm1651, %v1596
      %1673 = vst.msk [vmem:[#allocation3 + $0xa8] sm:$0xff] %vm1651, %v1598
      %1674 = vst.msk [vmem:[#allocation3 + $0xb0] sm:$0xff] %vm1651, %v1600
      %1675 = vst.msk [vmem:[#allocation3 + $0xb8] sm:$0xff] %vm1651, %v1602
      %1676 = vst.msk [vmem:[#allocation3 + $0xc0] sm:$0xff] %vm1651, %v1604
      %1677 = vst.msk [vmem:[#allocation3 + $0xc8] sm:$0xff] %vm1651, %v1606
      %1678 = vst.msk [vmem:[#allocation3 + $0xd0] sm:$0xff] %vm1651, %v1608
      %1679 = vst.msk [vmem:[#allocation3 + $0xd8] sm:$0xff] %vm1651, %v1610
      %1680 = vst.msk [vmem:[#allocation3 + $0xe0] sm:$0xff] %vm1651, %v1612
      %1681 = vst.msk [vmem:[#allocation3 + $0xe8] sm:$0xff] %vm1651, %v1614
      %1682 = vst.msk [vmem:[#allocation3 + $0xf0] sm:$0xff] %vm1651, %v1616
      %1683 = vst.msk [vmem:[#allocation3 + $0xf8] sm:$0xff] %vm1651, %v1618
      %v1684 = vld [vmem:[%s596] sm:$0xff]
      %v1685 = vld [vmem:[%s596 + $0x8] sm:$0xff]
      %v1686 = vld [vmem:[%s596 + $0x18] sm:$0xff]
      %v1687 = vld [vmem:[%s596 + $0x20] sm:$0xff]
      %v1688 = vld [vmem:[%s596 + $0x30] sm:$0xff]
      %v1689 = vld [vmem:[%s596 + $0x38] sm:$0xff]
      %v1690 = vld [vmem:[%s596 + $0x48] sm:$0xff]
      %v1691 = vld [vmem:[%s596 + $0x50] sm:$0xff]
      %v1692 = vld [vmem:[%s596 + $0x60] sm:$0xff]
      %v1693 = vld [vmem:[%s596 + $0x68] sm:$0xff]
      %v1694 = vld [vmem:[%s596 + $0x78] sm:$0xff]
      %v1695 = vld [vmem:[%s596 + $0x80] sm:$0xff]
      %v1696 = vld [vmem:[%s596 + $0x90] sm:$0xff]
      %v1697 = vld [vmem:[%s596 + $0x98] sm:$0xff]
      %v1698 = vld [vmem:[%s596 + $0xa8] sm:$0xff]
      %v1699 = vld [vmem:[%s596 + $0xb0] sm:$0xff]
      %v1700 = vld [vmem:[%s596 + $0xc0] sm:$0xff]
      %v1701 = vld [vmem:[%s596 + $0xc8] sm:$0xff]
      %v1702 = vld [vmem:[%s596 + $0xd8] sm:$0xff]
      %v1703 = vld [vmem:[%s596 + $0xe0] sm:$0xff]
      %v1704 = vld [vmem:[%s596 + $0xf0] sm:$0xff]
      %v1705 = vld [vmem:[%s596 + $0xf8] sm:$0xff]
      %v1706 = vld [vmem:[%s596 + $0x108] sm:$0xff]
      %v1707 = vld [vmem:[%s596 + $0x110] sm:$0xff]
      %v1708 = vld [vmem:[%s596 + $0x120] sm:$0xff]
      %v1709 = vld [vmem:[%s596 + $0x128] sm:$0xff]
      %v1710 = vld [vmem:[%s596 + $0x138] sm:$0xff]
      %v1711 = vld [vmem:[%s596 + $0x140] sm:$0xff]
      %v1712 = vld [vmem:[%s596 + $0x150] sm:$0xff]
      %v1713 = vld [vmem:[%s596 + $0x158] sm:$0xff]
      %v1714 = vld [vmem:[%s596 + $0x168] sm:$0xff]
      %v1715 = vld [vmem:[%s596 + $0x170] sm:$0xff]
      %1748 = vrot.lane.b32.xlu0 %v1684, 48
      %v1749 = vpop.permute.xlu0 %1748
      %1750 = vrot.lane.b32.xlu0 %v1685, 48
      %v1751 = vpop.permute.xlu0 %1750
      %1752 = vrot.lane.b32.xlu0 %v1686, 48
      %v1753 = vpop.permute.xlu0 %1752
      %1754 = vrot.lane.b32.xlu0 %v1687, 48
      %v1755 = vpop.permute.xlu0 %1754
      %1756 = vrot.lane.b32.xlu0 %v1688, 48
      %v1757 = vpop.permute.xlu0 %1756
      %1758 = vrot.lane.b32.xlu0 %v1689, 48
      %v1759 = vpop.permute.xlu0 %1758
      %1760 = vrot.lane.b32.xlu0 %v1690, 48
      %v1761 = vpop.permute.xlu0 %1760
      %1762 = vrot.lane.b32.xlu0 %v1691, 48
      %v1763 = vpop.permute.xlu0 %1762
      %1764 = vrot.lane.b32.xlu0 %v1692, 48
      %v1765 = vpop.permute.xlu0 %1764
      %1766 = vrot.lane.b32.xlu0 %v1693, 48
      %v1767 = vpop.permute.xlu0 %1766
      %1768 = vrot.lane.b32.xlu0 %v1694, 48
      %v1769 = vpop.permute.xlu0 %1768
      %1770 = vrot.lane.b32.xlu0 %v1695, 48
      %v1771 = vpop.permute.xlu0 %1770
      %1772 = vrot.lane.b32.xlu0 %v1696, 48
      %v1773 = vpop.permute.xlu0 %1772
      %1774 = vrot.lane.b32.xlu0 %v1697, 48
      %v1775 = vpop.permute.xlu0 %1774
      %1776 = vrot.lane.b32.xlu0 %v1698, 48
      %v1777 = vpop.permute.xlu0 %1776
      %1778 = vrot.lane.b32.xlu0 %v1699, 48
      %v1779 = vpop.permute.xlu0 %1778
      %1780 = vrot.lane.b32.xlu0 %v1700, 48
      %v1781 = vpop.permute.xlu0 %1780
      %1782 = vrot.lane.b32.xlu0 %v1701, 48
      %v1783 = vpop.permute.xlu0 %1782
      %1784 = vrot.lane.b32.xlu0 %v1702, 48
      %v1785 = vpop.permute.xlu0 %1784
      %1786 = vrot.lane.b32.xlu0 %v1703, 48
      %v1787 = vpop.permute.xlu0 %1786
      %1788 = vrot.lane.b32.xlu0 %v1704, 48
      %v1789 = vpop.permute.xlu0 %1788
      %1790 = vrot.lane.b32.xlu0 %v1705, 48
      %v1791 = vpop.permute.xlu0 %1790
      %1792 = vrot.lane.b32.xlu0 %v1706, 48
      %v1793 = vpop.permute.xlu0 %1792
      %1794 = vrot.lane.b32.xlu0 %v1707, 48
      %v1795 = vpop.permute.xlu0 %1794
      %1796 = vrot.lane.b32.xlu0 %v1708, 48
      %v1797 = vpop.permute.xlu0 %1796
      %1798 = vrot.lane.b32.xlu0 %v1709, 48
      %v1799 = vpop.permute.xlu0 %1798
      %1800 = vrot.lane.b32.xlu0 %v1710, 48
      %v1801 = vpop.permute.xlu0 %1800
      %1802 = vrot.lane.b32.xlu0 %v1711, 48
      %v1803 = vpop.permute.xlu0 %1802
      %1804 = vrot.lane.b32.xlu0 %v1712, 48
      %v1805 = vpop.permute.xlu0 %1804
      %1806 = vrot.lane.b32.xlu0 %v1713, 48
      %v1807 = vpop.permute.xlu0 %1806
      %1808 = vrot.lane.b32.xlu0 %v1714, 48
      %v1809 = vpop.permute.xlu0 %1808
      %1810 = vrot.lane.b32.xlu0 %v1715, 48
      %v1811 = vpop.permute.xlu0 %1810
      %vm1844 = vcmask 458112
      %1845 = vst.msk [vmem:[#allocation3] sm:$0xff] %vm1844, %v1749
      %1846 = vst.msk [vmem:[#allocation3 + $0x8] sm:$0xff] %vm1844, %v1751
      %1847 = vst.msk [vmem:[#allocation3 + $0x10] sm:$0xff] %vm1844, %v1753
      %1848 = vst.msk [vmem:[#allocation3 + $0x18] sm:$0xff] %vm1844, %v1755
      %1849 = vst.msk [vmem:[#allocation3 + $0x20] sm:$0xff] %vm1844, %v1757
      %1850 = vst.msk [vmem:[#allocation3 + $0x28] sm:$0xff] %vm1844, %v1759
      %1851 = vst.msk [vmem:[#allocation3 + $0x30] sm:$0xff] %vm1844, %v1761
      %1852 = vst.msk [vmem:[#allocation3 + $0x38] sm:$0xff] %vm1844, %v1763
      %1853 = vst.msk [vmem:[#allocation3 + $0x40] sm:$0xff] %vm1844, %v1765
      %1854 = vst.msk [vmem:[#allocation3 + $0x48] sm:$0xff] %vm1844, %v1767
      %1855 = vst.msk [vmem:[#allocation3 + $0x50] sm:$0xff] %vm1844, %v1769
      %1856 = vst.msk [vmem:[#allocation3 + $0x58] sm:$0xff] %vm1844, %v1771
      %1857 = vst.msk [vmem:[#allocation3 + $0x60] sm:$0xff] %vm1844, %v1773
      %1858 = vst.msk [vmem:[#allocation3 + $0x68] sm:$0xff] %vm1844, %v1775
      %1859 = vst.msk [vmem:[#allocation3 + $0x70] sm:$0xff] %vm1844, %v1777
      %1860 = vst.msk [vmem:[#allocation3 + $0x78] sm:$0xff] %vm1844, %v1779
      %1861 = vst.msk [vmem:[#allocation3 + $0x80] sm:$0xff] %vm1844, %v1781
      %1862 = vst.msk [vmem:[#allocation3 + $0x88] sm:$0xff] %vm1844, %v1783
      %1863 = vst.msk [vmem:[#allocation3 + $0x90] sm:$0xff] %vm1844, %v1785
      %1864 = vst.msk [vmem:[#allocation3 + $0x98] sm:$0xff] %vm1844, %v1787
      %1865 = vst.msk [vmem:[#allocation3 + $0xa0] sm:$0xff] %vm1844, %v1789
      %1866 = vst.msk [vmem:[#allocation3 + $0xa8] sm:$0xff] %vm1844, %v1791
      %1867 = vst.msk [vmem:[#allocation3 + $0xb0] sm:$0xff] %vm1844, %v1793
      %1868 = vst.msk [vmem:[#allocation3 + $0xb8] sm:$0xff] %vm1844, %v1795
      %1869 = vst.msk [vmem:[#allocation3 + $0xc0] sm:$0xff] %vm1844, %v1797
      %1870 = vst.msk [vmem:[#allocation3 + $0xc8] sm:$0xff] %vm1844, %v1799
      %1871 = vst.msk [vmem:[#allocation3 + $0xd0] sm:$0xff] %vm1844, %v1801
      %1872 = vst.msk [vmem:[#allocation3 + $0xd8] sm:$0xff] %vm1844, %v1803
      %1873 = vst.msk [vmem:[#allocation3 + $0xe0] sm:$0xff] %vm1844, %v1805
      %1874 = vst.msk [vmem:[#allocation3 + $0xe8] sm:$0xff] %vm1844, %v1807
      %1875 = vst.msk [vmem:[#allocation3 + $0xf0] sm:$0xff] %vm1844, %v1809
      %1876 = vst.msk [vmem:[#allocation3 + $0xf8] sm:$0xff] %vm1844, %v1811
      %v1877 = vld [vmem:[%s596 + $0x1] sm:$0xff]
      %v1878 = vld [vmem:[%s596 + $0x9] sm:$0xff]
      %v1879 = vld [vmem:[%s596 + $0x19] sm:$0xff]
      %v1880 = vld [vmem:[%s596 + $0x21] sm:$0xff]
      %v1881 = vld [vmem:[%s596 + $0x31] sm:$0xff]
      %v1882 = vld [vmem:[%s596 + $0x39] sm:$0xff]
      %v1883 = vld [vmem:[%s596 + $0x49] sm:$0xff]
      %v1884 = vld [vmem:[%s596 + $0x51] sm:$0xff]
      %v1885 = vld [vmem:[%s596 + $0x61] sm:$0xff]
      %v1886 = vld [vmem:[%s596 + $0x69] sm:$0xff]
      %v1887 = vld [vmem:[%s596 + $0x79] sm:$0xff]
      %v1888 = vld [vmem:[%s596 + $0x81] sm:$0xff]
      %v1889 = vld [vmem:[%s596 + $0x91] sm:$0xff]
      %v1890 = vld [vmem:[%s596 + $0x99] sm:$0xff]
      %v1891 = vld [vmem:[%s596 + $0xa9] sm:$0xff]
      %v1892 = vld [vmem:[%s596 + $0xb1] sm:$0xff]
      %v1893 = vld [vmem:[%s596 + $0xc1] sm:$0xff]
      %v1894 = vld [vmem:[%s596 + $0xc9] sm:$0xff]
      %v1895 = vld [vmem:[%s596 + $0xd9] sm:$0xff]
      %v1896 = vld [vmem:[%s596 + $0xe1] sm:$0xff]
      %v1897 = vld [vmem:[%s596 + $0xf1] sm:$0xff]
      %v1898 = vld [vmem:[%s596 + $0xf9] sm:$0xff]
      %v1899 = vld [vmem:[%s596 + $0x109] sm:$0xff]
      %v1900 = vld [vmem:[%s596 + $0x111] sm:$0xff]
      %v1901 = vld [vmem:[%s596 + $0x121] sm:$0xff]
      %v1902 = vld [vmem:[%s596 + $0x129] sm:$0xff]
      %v1903 = vld [vmem:[%s596 + $0x139] sm:$0xff]
      %v1904 = vld [vmem:[%s596 + $0x141] sm:$0xff]
      %v1905 = vld [vmem:[%s596 + $0x151] sm:$0xff]
      %v1906 = vld [vmem:[%s596 + $0x159] sm:$0xff]
      %v1907 = vld [vmem:[%s596 + $0x169] sm:$0xff]
      %v1908 = vld [vmem:[%s596 + $0x171] sm:$0xff]
      %1941 = vrot.lane.b32.xlu0 %v1877, 56
      %v1942 = vpop.permute.xlu0 %1941
      %1943 = vrot.lane.b32.xlu0 %v1878, 56
      %v1944 = vpop.permute.xlu0 %1943
      %1945 = vrot.lane.b32.xlu0 %v1879, 56
      %v1946 = vpop.permute.xlu0 %1945
      %1947 = vrot.lane.b32.xlu0 %v1880, 56
      %v1948 = vpop.permute.xlu0 %1947
      %1949 = vrot.lane.b32.xlu0 %v1881, 56
      %v1950 = vpop.permute.xlu0 %1949
      %1951 = vrot.lane.b32.xlu0 %v1882, 56
      %v1952 = vpop.permute.xlu0 %1951
      %1953 = vrot.lane.b32.xlu0 %v1883, 56
      %v1954 = vpop.permute.xlu0 %1953
      %1955 = vrot.lane.b32.xlu0 %v1884, 56
      %v1956 = vpop.permute.xlu0 %1955
      %1957 = vrot.lane.b32.xlu0 %v1885, 56
      %v1958 = vpop.permute.xlu0 %1957
      %1959 = vrot.lane.b32.xlu0 %v1886, 56
      %v1960 = vpop.permute.xlu0 %1959
      %1961 = vrot.lane.b32.xlu0 %v1887, 56
      %v1962 = vpop.permute.xlu0 %1961
      %1963 = vrot.lane.b32.xlu0 %v1888, 56
      %v1964 = vpop.permute.xlu0 %1963
      %1965 = vrot.lane.b32.xlu0 %v1889, 56
      %v1966 = vpop.permute.xlu0 %1965
      %1967 = vrot.lane.b32.xlu0 %v1890, 56
      %v1968 = vpop.permute.xlu0 %1967
      %1969 = vrot.lane.b32.xlu0 %v1891, 56
      %v1970 = vpop.permute.xlu0 %1969
      %1971 = vrot.lane.b32.xlu0 %v1892, 56
      %v1972 = vpop.permute.xlu0 %1971
      %1973 = vrot.lane.b32.xlu0 %v1893, 56
      %v1974 = vpop.permute.xlu0 %1973
      %1975 = vrot.lane.b32.xlu0 %v1894, 56
      %v1976 = vpop.permute.xlu0 %1975
      %1977 = vrot.lane.b32.xlu0 %v1895, 56
      %v1978 = vpop.permute.xlu0 %1977
      %1979 = vrot.lane.b32.xlu0 %v1896, 56
      %v1980 = vpop.permute.xlu0 %1979
      %1981 = vrot.lane.b32.xlu0 %v1897, 56
      %v1982 = vpop.permute.xlu0 %1981
      %1983 = vrot.lane.b32.xlu0 %v1898, 56
      %v1984 = vpop.permute.xlu0 %1983
      %1985 = vrot.lane.b32.xlu0 %v1899, 56
      %v1986 = vpop.permute.xlu0 %1985
      %1987 = vrot.lane.b32.xlu0 %v1900, 56
      %v1988 = vpop.permute.xlu0 %1987
      %1989 = vrot.lane.b32.xlu0 %v1901, 56
      %v1990 = vpop.permute.xlu0 %1989
      %1991 = vrot.lane.b32.xlu0 %v1902, 56
      %v1992 = vpop.permute.xlu0 %1991
      %1993 = vrot.lane.b32.xlu0 %v1903, 56
      %v1994 = vpop.permute.xlu0 %1993
      %1995 = vrot.lane.b32.xlu0 %v1904, 56
      %v1996 = vpop.permute.xlu0 %1995
      %1997 = vrot.lane.b32.xlu0 %v1905, 56
      %v1998 = vpop.permute.xlu0 %1997
      %1999 = vrot.lane.b32.xlu0 %v1906, 56
      %v2000 = vpop.permute.xlu0 %1999
      %2001 = vrot.lane.b32.xlu0 %v1907, 56
      %v2002 = vpop.permute.xlu0 %2001
      %2003 = vrot.lane.b32.xlu0 %v1908, 56
      %v2004 = vpop.permute.xlu0 %2003
      %vm2037 = vcmask 523712
      %2038 = vst.msk [vmem:[#allocation3] sm:$0xff] %vm2037, %v1942
      %2039 = vst.msk [vmem:[#allocation3 + $0x8] sm:$0xff] %vm2037, %v1944
      %2040 = vst.msk [vmem:[#allocation3 + $0x10] sm:$0xff] %vm2037, %v1946
      %2041 = vst.msk [vmem:[#allocation3 + $0x18] sm:$0xff] %vm2037, %v1948
      %2042 = vst.msk [vmem:[#allocation3 + $0x20] sm:$0xff] %vm2037, %v1950
      %2043 = vst.msk [vmem:[#allocation3 + $0x28] sm:$0xff] %vm2037, %v1952
      %2044 = vst.msk [vmem:[#allocation3 + $0x30] sm:$0xff] %vm2037, %v1954
      %2045 = vst.msk [vmem:[#allocation3 + $0x38] sm:$0xff] %vm2037, %v1956
      %2046 = vst.msk [vmem:[#allocation3 + $0x40] sm:$0xff] %vm2037, %v1958
      %2047 = vst.msk [vmem:[#allocation3 + $0x48] sm:$0xff] %vm2037, %v1960
      %2048 = vst.msk [vmem:[#allocation3 + $0x50] sm:$0xff] %vm2037, %v1962
      %2049 = vst.msk [vmem:[#allocation3 + $0x58] sm:$0xff] %vm2037, %v1964
      %2050 = vst.msk [vmem:[#allocation3 + $0x60] sm:$0xff] %vm2037, %v1966
      %2051 = vst.msk [vmem:[#allocation3 + $0x68] sm:$0xff] %vm2037, %v1968
      %2052 = vst.msk [vmem:[#allocation3 + $0x70] sm:$0xff] %vm2037, %v1970
      %2053 = vst.msk [vmem:[#allocation3 + $0x78] sm:$0xff] %vm2037, %v1972
      %2054 = vst.msk [vmem:[#allocation3 + $0x80] sm:$0xff] %vm2037, %v1974
      %2055 = vst.msk [vmem:[#allocation3 + $0x88] sm:$0xff] %vm2037, %v1976
      %2056 = vst.msk [vmem:[#allocation3 + $0x90] sm:$0xff] %vm2037, %v1978
      %2057 = vst.msk [vmem:[#allocation3 + $0x98] sm:$0xff] %vm2037, %v1980
      %2058 = vst.msk [vmem:[#allocation3 + $0xa0] sm:$0xff] %vm2037, %v1982
      %2059 = vst.msk [vmem:[#allocation3 + $0xa8] sm:$0xff] %vm2037, %v1984
      %2060 = vst.msk [vmem:[#allocation3 + $0xb0] sm:$0xff] %vm2037, %v1986
      %2061 = vst.msk [vmem:[#allocation3 + $0xb8] sm:$0xff] %vm2037, %v1988
      %2062 = vst.msk [vmem:[#allocation3 + $0xc0] sm:$0xff] %vm2037, %v1990
      %2063 = vst.msk [vmem:[#allocation3 + $0xc8] sm:$0xff] %vm2037, %v1992
      %2064 = vst.msk [vmem:[#allocation3 + $0xd0] sm:$0xff] %vm2037, %v1994
      %2065 = vst.msk [vmem:[#allocation3 + $0xd8] sm:$0xff] %vm2037, %v1996
      %2066 = vst.msk [vmem:[#allocation3 + $0xe0] sm:$0xff] %vm2037, %v1998
      %2067 = vst.msk [vmem:[#allocation3 + $0xe8] sm:$0xff] %vm2037, %v2000
      %2068 = vst.msk [vmem:[#allocation3 + $0xf0] sm:$0xff] %vm2037, %v2002
      %2069 = vst.msk [vmem:[#allocation3 + $0xf8] sm:$0xff] %vm2037, %v2004
      %v2070 = vld [vmem:[%s596 + $0x2] sm:$0xff]
      %v2071 = vld [vmem:[%s596 + $0xa] sm:$0xff]
      %v2072 = vld [vmem:[%s596 + $0x1a] sm:$0xff]
      %v2073 = vld [vmem:[%s596 + $0x22] sm:$0xff]
      %v2074 = vld [vmem:[%s596 + $0x32] sm:$0xff]
      %v2075 = vld [vmem:[%s596 + $0x3a] sm:$0xff]
      %v2076 = vld [vmem:[%s596 + $0x4a] sm:$0xff]
      %v2077 = vld [vmem:[%s596 + $0x52] sm:$0xff]
      %v2078 = vld [vmem:[%s596 + $0x62] sm:$0xff]
      %v2079 = vld [vmem:[%s596 + $0x6a] sm:$0xff]
      %v2080 = vld [vmem:[%s596 + $0x7a] sm:$0xff]
      %v2081 = vld [vmem:[%s596 + $0x82] sm:$0xff]
      %v2082 = vld [vmem:[%s596 + $0x92] sm:$0xff]
      %v2083 = vld [vmem:[%s596 + $0x9a] sm:$0xff]
      %v2084 = vld [vmem:[%s596 + $0xaa] sm:$0xff]
      %v2085 = vld [vmem:[%s596 + $0xb2] sm:$0xff]
      %v2086 = vld [vmem:[%s596 + $0xc2] sm:$0xff]
      %v2087 = vld [vmem:[%s596 + $0xca] sm:$0xff]
      %v2088 = vld [vmem:[%s596 + $0xda] sm:$0xff]
      %v2089 = vld [vmem:[%s596 + $0xe2] sm:$0xff]
      %v2090 = vld [vmem:[%s596 + $0xf2] sm:$0xff]
      %v2091 = vld [vmem:[%s596 + $0xfa] sm:$0xff]
      %v2092 = vld [vmem:[%s596 + $0x10a] sm:$0xff]
      %v2093 = vld [vmem:[%s596 + $0x112] sm:$0xff]
      %v2094 = vld [vmem:[%s596 + $0x122] sm:$0xff]
      %v2095 = vld [vmem:[%s596 + $0x12a] sm:$0xff]
      %v2096 = vld [vmem:[%s596 + $0x13a] sm:$0xff]
      %v2097 = vld [vmem:[%s596 + $0x142] sm:$0xff]
      %v2098 = vld [vmem:[%s596 + $0x152] sm:$0xff]
      %v2099 = vld [vmem:[%s596 + $0x15a] sm:$0xff]
      %v2100 = vld [vmem:[%s596 + $0x16a] sm:$0xff]
      %v2101 = vld [vmem:[%s596 + $0x172] sm:$0xff]
      %2134 = vrot.lane.b32.xlu0 %v2070, 64
      %v2135 = vpop.permute.xlu0 %2134
      %2136 = vrot.lane.b32.xlu0 %v2071, 64
      %v2137 = vpop.permute.xlu0 %2136
      %2138 = vrot.lane.b32.xlu0 %v2072, 64
      %v2139 = vpop.permute.xlu0 %2138
      %2140 = vrot.lane.b32.xlu0 %v2073, 64
      %v2141 = vpop.permute.xlu0 %2140
      %2142 = vrot.lane.b32.xlu0 %v2074, 64
      %v2143 = vpop.permute.xlu0 %2142
      %2144 = vrot.lane.b32.xlu0 %v2075, 64
      %v2145 = vpop.permute.xlu0 %2144
      %2146 = vrot.lane.b32.xlu0 %v2076, 64
      %v2147 = vpop.permute.xlu0 %2146
      %2148 = vrot.lane.b32.xlu0 %v2077, 64
      %v2149 = vpop.permute.xlu0 %2148
      %2150 = vrot.lane.b32.xlu0 %v2078, 64
      %v2151 = vpop.permute.xlu0 %2150
      %2152 = vrot.lane.b32.xlu0 %v2079, 64
      %v2153 = vpop.permute.xlu0 %2152
      %2154 = vrot.lane.b32.xlu0 %v2080, 64
      %v2155 = vpop.permute.xlu0 %2154
      %2156 = vrot.lane.b32.xlu0 %v2081, 64
      %v2157 = vpop.permute.xlu0 %2156
      %2158 = vrot.lane.b32.xlu0 %v2082, 64
      %v2159 = vpop.permute.xlu0 %2158
      %2160 = vrot.lane.b32.xlu0 %v2083, 64
      %v2161 = vpop.permute.xlu0 %2160
      %2162 = vrot.lane.b32.xlu0 %v2084, 64
      %v2163 = vpop.permute.xlu0 %2162
      %2164 = vrot.lane.b32.xlu0 %v2085, 64
      %v2165 = vpop.permute.xlu0 %2164
      %2166 = vrot.lane.b32.xlu0 %v2086, 64
      %v2167 = vpop.permute.xlu0 %2166
      %2168 = vrot.lane.b32.xlu0 %v2087, 64
      %v2169 = vpop.permute.xlu0 %2168
      %2170 = vrot.lane.b32.xlu0 %v2088, 64
      %v2171 = vpop.permute.xlu0 %2170
      %2172 = vrot.lane.b32.xlu0 %v2089, 64
      %v2173 = vpop.permute.xlu0 %2172
      %2174 = vrot.lane.b32.xlu0 %v2090, 64
      %v2175 = vpop.permute.xlu0 %2174
      %2176 = vrot.lane.b32.xlu0 %v2091, 64
      %v2177 = vpop.permute.xlu0 %2176
      %2178 = vrot.lane.b32.xlu0 %v2092, 64
      %v2179 = vpop.permute.xlu0 %2178
      %2180 = vrot.lane.b32.xlu0 %v2093, 64
      %v2181 = vpop.permute.xlu0 %2180
      %2182 = vrot.lane.b32.xlu0 %v2094, 64
      %v2183 = vpop.permute.xlu0 %2182
      %2184 = vrot.lane.b32.xlu0 %v2095, 64
      %v2185 = vpop.permute.xlu0 %2184
      %2186 = vrot.lane.b32.xlu0 %v2096, 64
      %v2187 = vpop.permute.xlu0 %2186
      %2188 = vrot.lane.b32.xlu0 %v2097, 64
      %v2189 = vpop.permute.xlu0 %2188
      %2190 = vrot.lane.b32.xlu0 %v2098, 64
      %v2191 = vpop.permute.xlu0 %2190
      %2192 = vrot.lane.b32.xlu0 %v2099, 64
      %v2193 = vpop.permute.xlu0 %2192
      %2194 = vrot.lane.b32.xlu0 %v2100, 64
      %v2195 = vpop.permute.xlu0 %2194
      %2196 = vrot.lane.b32.xlu0 %v2101, 64
      %v2197 = vpop.permute.xlu0 %2196
      %vm2230 = vcmask 589312
      %2231 = vst.msk [vmem:[#allocation3] sm:$0xff] %vm2230, %v2135
      %2232 = vst.msk [vmem:[#allocation3 + $0x8] sm:$0xff] %vm2230, %v2137
      %2233 = vst.msk [vmem:[#allocation3 + $0x10] sm:$0xff] %vm2230, %v2139
      %2234 = vst.msk [vmem:[#allocation3 + $0x18] sm:$0xff] %vm2230, %v2141
      %2235 = vst.msk [vmem:[#allocation3 + $0x20] sm:$0xff] %vm2230, %v2143
      %2236 = vst.msk [vmem:[#allocation3 + $0x28] sm:$0xff] %vm2230, %v2145
      %2237 = vst.msk [vmem:[#allocation3 + $0x30] sm:$0xff] %vm2230, %v2147
      %2238 = vst.msk [vmem:[#allocation3 + $0x38] sm:$0xff] %vm2230, %v2149
      %2239 = vst.msk [vmem:[#allocation3 + $0x40] sm:$0xff] %vm2230, %v2151
      %2240 = vst.msk [vmem:[#allocation3 + $0x48] sm:$0xff] %vm2230, %v2153
      %2241 = vst.msk [vmem:[#allocation3 + $0x50] sm:$0xff] %vm2230, %v2155
      %2242 = vst.msk [vmem:[#allocation3 + $0x58] sm:$0xff] %vm2230, %v2157
      %2243 = vst.msk [vmem:[#allocation3 + $0x60] sm:$0xff] %vm2230, %v2159
      %2244 = vst.msk [vmem:[#allocation3 + $0x68] sm:$0xff] %vm2230, %v2161
      %2245 = vst.msk [vmem:[#allocation3 + $0x70] sm:$0xff] %vm2230, %v2163
      %2246 = vst.msk [vmem:[#allocation3 + $0x78] sm:$0xff] %vm2230, %v2165
      %2247 = vst.msk [vmem:[#allocation3 + $0x80] sm:$0xff] %vm2230, %v2167
      %2248 = vst.msk [vmem:[#allocation3 + $0x88] sm:$0xff] %vm2230, %v2169
      %2249 = vst.msk [vmem:[#allocation3 + $0x90] sm:$0xff] %vm2230, %v2171
      %2250 = vst.msk [vmem:[#allocation3 + $0x98] sm:$0xff] %vm2230, %v2173
      %2251 = vst.msk [vmem:[#allocation3 + $0xa0] sm:$0xff] %vm2230, %v2175
      %2252 = vst.msk [vmem:[#allocation3 + $0xa8] sm:$0xff] %vm2230, %v2177
      %2253 = vst.msk [vmem:[#allocation3 + $0xb0] sm:$0xff] %vm2230, %v2179
      %2254 = vst.msk [vmem:[#allocation3 + $0xb8] sm:$0xff] %vm2230, %v2181
      %2255 = vst.msk [vmem:[#allocation3 + $0xc0] sm:$0xff] %vm2230, %v2183
      %2256 = vst.msk [vmem:[#allocation3 + $0xc8] sm:$0xff] %vm2230, %v2185
      %2257 = vst.msk [vmem:[#allocation3 + $0xd0] sm:$0xff] %vm2230, %v2187
      %2258 = vst.msk [vmem:[#allocation3 + $0xd8] sm:$0xff] %vm2230, %v2189
      %2259 = vst.msk [vmem:[#allocation3 + $0xe0] sm:$0xff] %vm2230, %v2191
      %2260 = vst.msk [vmem:[#allocation3 + $0xe8] sm:$0xff] %vm2230, %v2193
      %2261 = vst.msk [vmem:[#allocation3 + $0xf0] sm:$0xff] %vm2230, %v2195
      %2262 = vst.msk [vmem:[#allocation3 + $0xf8] sm:$0xff] %vm2230, %v2197
      %v2263 = vld [vmem:[#allocation3] sm:$0xff]
      %v2264 = vld [vmem:[#allocation3 + $0x8] sm:$0xff]
      %v2265 = vld [vmem:[#allocation3 + $0x10] sm:$0xff]
      %v2266 = vld [vmem:[#allocation3 + $0x18] sm:$0xff]
      %v2267 = vld [vmem:[#allocation3 + $0x20] sm:$0xff]
      %v2268 = vld [vmem:[#allocation3 + $0x28] sm:$0xff]
      %v2269 = vld [vmem:[#allocation3 + $0x30] sm:$0xff]
      %v2270 = vld [vmem:[#allocation3 + $0x38] sm:$0xff]
      %v2271 = vld [vmem:[#allocation3 + $0x40] sm:$0xff]
      %v2272 = vld [vmem:[#allocation3 + $0x48] sm:$0xff]
      %v2273 = vld [vmem:[#allocation3 + $0x50] sm:$0xff]
      %v2274 = vld [vmem:[#allocation3 + $0x58] sm:$0xff]
      %v2275 = vld [vmem:[#allocation3 + $0x60] sm:$0xff]
      %v2276 = vld [vmem:[#allocation3 + $0x68] sm:$0xff]
      %v2277 = vld [vmem:[#allocation3 + $0x70] sm:$0xff]
      %v2278 = vld [vmem:[#allocation3 + $0x78] sm:$0xff]
      %v2279 = vld [vmem:[#allocation3 + $0x80] sm:$0xff]
      %v2280 = vld [vmem:[#allocation3 + $0x88] sm:$0xff]
      %v2281 = vld [vmem:[#allocation3 + $0x90] sm:$0xff]
      %v2282 = vld [vmem:[#allocation3 + $0x98] sm:$0xff]
      %v2283 = vld [vmem:[#allocation3 + $0xa0] sm:$0xff]
      %v2284 = vld [vmem:[#allocation3 + $0xa8] sm:$0xff]
      %v2285 = vld [vmem:[#allocation3 + $0xb0] sm:$0xff]
      %v2286 = vld [vmem:[#allocation3 + $0xb8] sm:$0xff]
      %v2287 = vld [vmem:[#allocation3 + $0xc0] sm:$0xff]
      %v2288 = vld [vmem:[#allocation3 + $0xc8] sm:$0xff]
      %v2289 = vld [vmem:[#allocation3 + $0xd0] sm:$0xff]
      %v2290 = vld [vmem:[#allocation3 + $0xd8] sm:$0xff]
      %v2291 = vld [vmem:[#allocation3 + $0xe0] sm:$0xff]
      %v2292 = vld [vmem:[#allocation3 + $0xe8] sm:$0xff]
      %v2293 = vld [vmem:[#allocation3 + $0xf0] sm:$0xff]
      %v2294 = vld [vmem:[#allocation3 + $0xf8] sm:$0xff]
      %v2296 = vlaneseq
      %v2297 = vshrl.u32 %v2296, 7
      %v2298 = vsub.s32 0, %v2297
      %v2299 = vrot.slane %v654, %v2298
      %vm2301 = vcmask 588800
      %v2303 = vsel %vm2301, %v2263, 0
      %v2306 = vsel %vm2301, %v2264, 0
      %v2309 = vsel %vm2301, %v2265, 0
      %v2312 = vsel %vm2301, %v2266, 0
      %v2315 = vsel %vm2301, %v2267, 0
      %v2318 = vsel %vm2301, %v2268, 0
      %v2321 = vsel %vm2301, %v2269, 0
      %v2324 = vsel %vm2301, %v2270, 0
      %v2327 = vsel %vm2301, %v2271, 0
      %v2330 = vsel %vm2301, %v2272, 0
      %v2333 = vsel %vm2301, %v2273, 0
      %v2336 = vsel %vm2301, %v2274, 0
      %v2339 = vsel %vm2301, %v2275, 0
      %v2342 = vsel %vm2301, %v2276, 0
      %v2345 = vsel %vm2301, %v2277, 0
      %v2348 = vsel %vm2301, %v2278, 0
      %v2351 = vsel %vm2301, %v2279, 0
      %v2354 = vsel %vm2301, %v2280, 0
      %v2357 = vsel %vm2301, %v2281, 0
      %v2360 = vsel %vm2301, %v2282, 0
      %v2363 = vsel %vm2301, %v2283, 0
      %v2366 = vsel %vm2301, %v2284, 0
      %v2369 = vsel %vm2301, %v2285, 0
      %v2372 = vsel %vm2301, %v2286, 0
      %v2375 = vsel %vm2301, %v2287, 0
      %v2378 = vsel %vm2301, %v2288, 0
      %v2381 = vsel %vm2301, %v2289, 0
      %v2384 = vsel %vm2301, %v2290, 0
      %v2387 = vsel %vm2301, %v2291, 0
      %v2390 = vsel %vm2301, %v2292, 0
      %v2393 = vsel %vm2301, %v2293, 0
      %v2396 = vsel %vm2301, %v2294, 0
      %2398 = vmatprep.subr.mxu0 0.0
      %2399 = vmatpush1.msra.mxu0 0.0
      %2400 = vmatprep.subr.mxu0 0.0
      %2401 = vmatpush1.msra.mxu0 0.0
      %2402 = vmatprep.subr.mxu0 0.0
      %2403 = vmatpush1.msra.mxu0 0.0
      %2404 = vmatprep.subr.mxu0 0.0
      %2405 = vmatpush1.msra.mxu0 0.0
      %2406 = vmatprep.subr.mxu0 0.0
      %2407 = vmatpush1.msra.mxu0 0.0
      %2408 = vmatprep.subr.mxu0 0.0
      %2409 = vmatpush1.msra.mxu0 0.0
      %2410 = vmatprep.subr.mxu0 0.0
      %2411 = vmatpush1.msra.mxu0 0.0
      %2412 = vmatprep.subr.mxu0 0.0
      %2413 = vmatpush1.msra.mxu0 %v653
      %2414 = vmatprep.subr.mxu0 0.0
      %2415 = vmatpush1.msra.mxu0 %v652
      %2416 = vmatprep.subr.mxu0 0.0
      %2417 = vmatpush1.msra.mxu0 %v651
      %2418 = vmatprep.subr.mxu0 0.0
      %2419 = vmatpush1.msra.mxu0 %v650
      %2420 = vmatprep.subr.mxu0 0.0
      %2421 = vmatpush1.msra.mxu0 %v649
      %2422 = vmatprep.subr.mxu0 0.0
      %2423 = vmatpush1.msra.mxu0 %v648
      %2424 = vmatprep.subr.mxu0 0.0
      %2425 = vmatpush1.msra.mxu0 %v647
      %2426 = vmatprep.subr.mxu0 0.0
      %2427 = vmatpush1.msra.mxu0 %v646
      %2428 = vmatprep.subr.mxu0 0.0
      %2429 = vmatpush1.msra.mxu0 %v645
      %2430 = vmatprep.subr.mxu0 0.0
      %2431 = vmatpush2.msra.mxu0 0.0
      %2432 = vmatprep.subr.mxu0 0.0
      %2433 = vmatpush2.msra.mxu0 0.0
      %2434 = vmatprep.subr.mxu0 0.0
      %2435 = vmatpush2.msra.mxu0 0.0
      %2436 = vmatprep.subr.mxu0 0.0
      %2437 = vmatpush2.msra.mxu0 0.0
      %2438 = vmatprep.subr.mxu0 0.0
      %2439 = vmatpush2.msra.mxu0 0.0
      %2440 = vmatprep.subr.mxu0 0.0
      %2441 = vmatpush2.msra.mxu0 0.0
      %2442 = vmatprep.subr.mxu0 0.0
      %2443 = vmatpush2.msra.mxu0 0.0
      %2444 = vmatprep.subr.mxu0 0.0
      %2445 = vmatpush2.msra.mxu0 0.0
      %2446 = vmatprep.subr.mxu0 0.0
      %2447 = vmatpush2.msra.mxu0 0.0
      %2448 = vmatprep.subr.mxu0 0.0
      %2449 = vmatpush2.msra.mxu0 0.0
      %2450 = vmatprep.subr.mxu0 0.0
      %2451 = vmatpush2.msra.mxu0 0.0
      %2452 = vmatprep.subr.mxu0 0.0
      %2453 = vmatpush2.msra.mxu0 0.0
      %2454 = vmatprep.subr.mxu0 0.0
      %2455 = vmatpush2.msra.mxu0 0.0
      %2456 = vmatprep.subr.mxu0 0.0
      %2457 = vmatpush2.msra.mxu0 0.0
      %2458 = vmatprep.subr.mxu0 0.0
      %2459 = vmatpush2.msra.mxu0 0.0
      %2460 = vmatprep.subr.mxu0 0.0
      %2461 = vmatpush2.msra.mxu0 0.0
      %2462 = vmatprep.mubr.f32.mxu0 0.0
      %2463 = vmatmul.mubr.f32.gmra.mxu0 %v2303
      %v2464 = vpop.f32.mrf.mxu0
      %v2465 = vadd.f32 %v2299, %v2464
      %v2466 = vpop.f32.mrf.mxu0
      %2467 = vmatprep.mubr.f32.mxu0 0.0
      %2468 = vmatmul.mubr.f32.gmra.mxu0 %v2306
      %v2469 = vpop.f32.mrf.mxu0
      %v2470 = vadd.f32 %v2299, %v2469
      %v2471 = vpop.f32.mrf.mxu0
      %2472 = vmatprep.mubr.f32.mxu0 0.0
      %2473 = vmatmul.mubr.f32.gmra.mxu0 %v2309
      %v2474 = vpop.f32.mrf.mxu0
      %v2475 = vadd.f32 %v2299, %v2474
      %v2476 = vpop.f32.mrf.mxu0
      %2477 = vmatprep.mubr.f32.mxu0 0.0
      %2478 = vmatmul.mubr.f32.gmra.mxu0 %v2312
      %v2479 = vpop.f32.mrf.mxu0
      %v2480 = vadd.f32 %v2299, %v2479
      %v2481 = vpop.f32.mrf.mxu0
      %2482 = vmatprep.mubr.f32.mxu0 0.0
      %2483 = vmatmul.mubr.f32.gmra.mxu0 %v2315
      %v2484 = vpop.f32.mrf.mxu0
      %v2485 = vadd.f32 %v2299, %v2484
      %v2486 = vpop.f32.mrf.mxu0
      %2487 = vmatprep.mubr.f32.mxu0 0.0
      %2488 = vmatmul.mubr.f32.gmra.mxu0 %v2318
      %v2489 = vpop.f32.mrf.mxu0
      %v2490 = vadd.f32 %v2299, %v2489
      %v2491 = vpop.f32.mrf.mxu0
      %2492 = vmatprep.mubr.f32.mxu0 0.0
      %2493 = vmatmul.mubr.f32.gmra.mxu0 %v2321
      %v2494 = vpop.f32.mrf.mxu0
      %v2495 = vadd.f32 %v2299, %v2494
      %v2496 = vpop.f32.mrf.mxu0
      %2497 = vmatprep.mubr.f32.mxu0 0.0
      %2498 = vmatmul.mubr.f32.gmra.mxu0 %v2324
      %v2499 = vpop.f32.mrf.mxu0
      %v2500 = vadd.f32 %v2299, %v2499
      %v2501 = vpop.f32.mrf.mxu0
      %2502 = vmatprep.mubr.f32.mxu0 0.0
      %2503 = vmatmul.mubr.f32.gmra.mxu0 %v2327
      %v2504 = vpop.f32.mrf.mxu0
      %v2505 = vadd.f32 %v2299, %v2504
      %v2506 = vpop.f32.mrf.mxu0
      %2507 = vmatprep.mubr.f32.mxu0 0.0
      %2508 = vmatmul.mubr.f32.gmra.mxu0 %v2330
      %v2509 = vpop.f32.mrf.mxu0
      %v2510 = vadd.f32 %v2299, %v2509
      %v2511 = vpop.f32.mrf.mxu0
      %2512 = vmatprep.mubr.f32.mxu0 0.0
      %2513 = vmatmul.mubr.f32.gmra.mxu0 %v2333
      %v2514 = vpop.f32.mrf.mxu0
      %v2515 = vadd.f32 %v2299, %v2514
      %v2516 = vpop.f32.mrf.mxu0
      %2517 = vmatprep.mubr.f32.mxu0 0.0
      %2518 = vmatmul.mubr.f32.gmra.mxu0 %v2336
      %v2519 = vpop.f32.mrf.mxu0
      %v2520 = vadd.f32 %v2299, %v2519
      %v2521 = vpop.f32.mrf.mxu0
      %2522 = vmatprep.mubr.f32.mxu0 0.0
      %2523 = vmatmul.mubr.f32.gmra.mxu0 %v2339
      %v2524 = vpop.f32.mrf.mxu0
      %v2525 = vadd.f32 %v2299, %v2524
      %v2526 = vpop.f32.mrf.mxu0
      %2527 = vmatprep.mubr.f32.mxu0 0.0
      %2528 = vmatmul.mubr.f32.gmra.mxu0 %v2342
      %v2529 = vpop.f32.mrf.mxu0
      %v2530 = vadd.f32 %v2299, %v2529
      %v2531 = vpop.f32.mrf.mxu0
      %2532 = vmatprep.mubr.f32.mxu0 0.0
      %2533 = vmatmul.mubr.f32.gmra.mxu0 %v2345
      %v2534 = vpop.f32.mrf.mxu0
      %v2535 = vadd.f32 %v2299, %v2534
      %v2536 = vpop.f32.mrf.mxu0
      %2537 = vmatprep.mubr.f32.mxu0 0.0
      %2538 = vmatmul.mubr.f32.gmra.mxu0 %v2348
      %v2539 = vpop.f32.mrf.mxu0
      %v2540 = vadd.f32 %v2299, %v2539
      %v2541 = vpop.f32.mrf.mxu0
      %2542 = vmatprep.mubr.f32.mxu0 0.0
      %2543 = vmatmul.mubr.f32.gmra.mxu0 %v2351
      %v2544 = vpop.f32.mrf.mxu0
      %v2545 = vadd.f32 %v2299, %v2544
      %v2546 = vpop.f32.mrf.mxu0
      %2547 = vmatprep.mubr.f32.mxu0 0.0
      %2548 = vmatmul.mubr.f32.gmra.mxu0 %v2354
      %v2549 = vpop.f32.mrf.mxu0
      %v2550 = vadd.f32 %v2299, %v2549
      %v2551 = vpop.f32.mrf.mxu0
      %2552 = vmatprep.mubr.f32.mxu0 0.0
      %2553 = vmatmul.mubr.f32.gmra.mxu0 %v2357
      %v2554 = vpop.f32.mrf.mxu0
      %v2555 = vadd.f32 %v2299, %v2554
      %v2556 = vpop.f32.mrf.mxu0
      %2557 = vmatprep.mubr.f32.mxu0 0.0
      %2558 = vmatmul.mubr.f32.gmra.mxu0 %v2360
      %v2559 = vpop.f32.mrf.mxu0
      %v2560 = vadd.f32 %v2299, %v2559
      %v2561 = vpop.f32.mrf.mxu0
      %2562 = vmatprep.mubr.f32.mxu0 0.0
      %2563 = vmatmul.mubr.f32.gmra.mxu0 %v2363
      %v2564 = vpop.f32.mrf.mxu0
      %v2565 = vadd.f32 %v2299, %v2564
      %v2566 = vpop.f32.mrf.mxu0
      %2567 = vmatprep.mubr.f32.mxu0 0.0
      %2568 = vmatmul.mubr.f32.gmra.mxu0 %v2366
      %v2569 = vpop.f32.mrf.mxu0
      %v2570 = vadd.f32 %v2299, %v2569
      %v2571 = vpop.f32.mrf.mxu0
      %2572 = vmatprep.mubr.f32.mxu0 0.0
      %2573 = vmatmul.mubr.f32.gmra.mxu0 %v2369
      %v2574 = vpop.f32.mrf.mxu0
      %v2575 = vadd.f32 %v2299, %v2574
      %v2576 = vpop.f32.mrf.mxu0
      %2577 = vmatprep.mubr.f32.mxu0 0.0
      %2578 = vmatmul.mubr.f32.gmra.mxu0 %v2372
      %v2579 = vpop.f32.mrf.mxu0
      %v2580 = vadd.f32 %v2299, %v2579
      %v2581 = vpop.f32.mrf.mxu0
      %2582 = vmatprep.mubr.f32.mxu0 0.0
      %2583 = vmatmul.mubr.f32.gmra.mxu0 %v2375
      %v2584 = vpop.f32.mrf.mxu0
      %v2585 = vadd.f32 %v2299, %v2584
      %v2586 = vpop.f32.mrf.mxu0
      %2587 = vmatprep.mubr.f32.mxu0 0.0
      %2588 = vmatmul.mubr.f32.gmra.mxu0 %v2378
      %v2589 = vpop.f32.mrf.mxu0
      %v2590 = vadd.f32 %v2299, %v2589
      %v2591 = vpop.f32.mrf.mxu0
      %2592 = vmatprep.mubr.f32.mxu0 0.0
      %2593 = vmatmul.mubr.f32.gmra.mxu0 %v2381
      %v2594 = vpop.f32.mrf.mxu0
      %v2595 = vadd.f32 %v2299, %v2594
      %v2596 = vpop.f32.mrf.mxu0
      %2597 = vmatprep.mubr.f32.mxu0 0.0
      %2598 = vmatmul.mubr.f32.gmra.mxu0 %v2384
      %v2599 = vpop.f32.mrf.mxu0
      %v2600 = vadd.f32 %v2299, %v2599
      %v2601 = vpop.f32.mrf.mxu0
      %2602 = vmatprep.mubr.f32.mxu0 0.0
      %2603 = vmatmul.mubr.f32.gmra.mxu0 %v2387
      %v2604 = vpop.f32.mrf.mxu0
      %v2605 = vadd.f32 %v2299, %v2604
      %v2606 = vpop.f32.mrf.mxu0
      %2607 = vmatprep.mubr.f32.mxu0 0.0
      %2608 = vmatmul.mubr.f32.gmra.mxu0 %v2390
      %v2609 = vpop.f32.mrf.mxu0
      %v2610 = vadd.f32 %v2299, %v2609
      %v2611 = vpop.f32.mrf.mxu0
      %2612 = vmatprep.mubr.f32.mxu0 0.0
      %2613 = vmatmul.mubr.f32.gmra.mxu0 %v2393
      %v2614 = vpop.f32.mrf.mxu0
      %v2615 = vadd.f32 %v2299, %v2614
      %v2616 = vpop.f32.mrf.mxu0
      %2617 = vmatprep.mubr.f32.mxu0 0.0
      %2618 = vmatmul.mubr.f32.gmra.mxu0 %v2396
      %v2619 = vpop.f32.mrf.mxu0
      %v2620 = vadd.f32 %v2299, %v2619
      %v2621 = vpop.f32.mrf.mxu0
      %2622 = vdwg.mxu0
      %v2623 = vmax.f32 %v2465, 0.0
      %v2624 = vmax.f32 %v2470, 0.0
      %v2625 = vmax.f32 %v2475, 0.0
      %v2626 = vmax.f32 %v2480, 0.0
      %v2627 = vmax.f32 %v2485, 0.0
      %v2628 = vmax.f32 %v2490, 0.0
      %v2629 = vmax.f32 %v2495, 0.0
      %v2630 = vmax.f32 %v2500, 0.0
      %v2631 = vmax.f32 %v2505, 0.0
      %v2632 = vmax.f32 %v2510, 0.0
      %v2633 = vmax.f32 %v2515, 0.0
      %v2634 = vmax.f32 %v2520, 0.0
      %v2635 = vmax.f32 %v2525, 0.0
      %v2636 = vmax.f32 %v2530, 0.0
      %v2637 = vmax.f32 %v2535, 0.0
      %v2638 = vmax.f32 %v2540, 0.0
      %v2639 = vmax.f32 %v2545, 0.0
      %v2640 = vmax.f32 %v2550, 0.0
      %v2641 = vmax.f32 %v2555, 0.0
      %v2642 = vmax.f32 %v2560, 0.0
      %v2643 = vmax.f32 %v2565, 0.0
      %v2644 = vmax.f32 %v2570, 0.0
      %v2645 = vmax.f32 %v2575, 0.0
      %v2646 = vmax.f32 %v2580, 0.0
      %v2647 = vmax.f32 %v2585, 0.0
      %v2648 = vmax.f32 %v2590, 0.0
      %v2649 = vmax.f32 %v2595, 0.0
      %v2650 = vmax.f32 %v2600, 0.0
      %v2651 = vmax.f32 %v2605, 0.0
      %v2652 = vmax.f32 %v2610, 0.0
      %v2653 = vmax.f32 %v2615, 0.0
      %v2654 = vmax.f32 %v2620, 0.0
      %v2655 = vadd.f32 %v2623, %v613
      %v2656 = vadd.f32 %v2624, %v614
      %v2657 = vadd.f32 %v2625, %v615
      %v2658 = vadd.f32 %v2626, %v616
      %v2659 = vadd.f32 %v2627, %v617
      %v2660 = vadd.f32 %v2628, %v618
      %v2661 = vadd.f32 %v2629, %v619
      %v2662 = vadd.f32 %v2630, %v620
      %v2663 = vadd.f32 %v2631, %v621
      %v2664 = vadd.f32 %v2632, %v622
      %v2665 = vadd.f32 %v2633, %v623
      %v2666 = vadd.f32 %v2634, %v624
      %v2667 = vadd.f32 %v2635, %v625
      %v2668 = vadd.f32 %v2636, %v626
      %v2669 = vadd.f32 %v2637, %v627
      %v2670 = vadd.f32 %v2638, %v628
      %v2671 = vadd.f32 %v2639, %v629
      %v2672 = vadd.f32 %v2640, %v630
      %v2673 = vadd.f32 %v2641, %v631
      %v2674 = vadd.f32 %v2642, %v632
      %v2675 = vadd.f32 %v2643, %v633
      %v2676 = vadd.f32 %v2644, %v634
      %v2677 = vadd.f32 %v2645, %v635
      %v2678 = vadd.f32 %v2646, %v636
      %v2679 = vadd.f32 %v2647, %v637
      %v2680 = vadd.f32 %v2648, %v638
      %v2681 = vadd.f32 %v2649, %v639
      %v2682 = vadd.f32 %v2650, %v640
      %v2683 = vadd.f32 %v2651, %v641
      %v2684 = vadd.f32 %v2652, %v642
      %v2685 = vadd.f32 %v2653, %v643
      %v2686 = vadd.f32 %v2654, %v644
      %2687 = vst.msk [vmem:[%s304 + $0x1] sm:$0xff] %vm600, %v2655
      %2688 = vst.msk [vmem:[%s304 + $0x9] sm:$0xff] %vm600, %v2656
      %2689 = vst.msk [vmem:[%s304 + $0x19] sm:$0xff] %vm600, %v2657
      %2690 = vst.msk [vmem:[%s304 + $0x21] sm:$0xff] %vm600, %v2658
      %2691 = vst.msk [vmem:[%s304 + $0x31] sm:$0xff] %vm600, %v2659
      %2692 = vst.msk [vmem:[%s304 + $0x39] sm:$0xff] %vm600, %v2660
      %2693 = vst.msk [vmem:[%s304 + $0x49] sm:$0xff] %vm600, %v2661
      %2694 = vst.msk [vmem:[%s304 + $0x51] sm:$0xff] %vm600, %v2662
      %2695 = vst.msk [vmem:[%s304 + $0x61] sm:$0xff] %vm600, %v2663
      %2696 = vst.msk [vmem:[%s304 + $0x69] sm:$0xff] %vm600, %v2664
      %2697 = vst.msk [vmem:[%s304 + $0x79] sm:$0xff] %vm600, %v2665
      %2698 = vst.msk [vmem:[%s304 + $0x81] sm:$0xff] %vm600, %v2666
      %2699 = vst.msk [vmem:[%s304 + $0x91] sm:$0xff] %vm600, %v2667
      %2700 = vst.msk [vmem:[%s304 + $0x99] sm:$0xff] %vm600, %v2668
      %2701 = vst.msk [vmem:[%s304 + $0xa9] sm:$0xff] %vm600, %v2669
      %2702 = vst.msk [vmem:[%s304 + $0xb1] sm:$0xff] %vm600, %v2670
      %2703 = vst.msk [vmem:[%s304 + $0xc1] sm:$0xff] %vm600, %v2671
      %2704 = vst.msk [vmem:[%s304 + $0xc9] sm:$0xff] %vm600, %v2672
      %2705 = vst.msk [vmem:[%s304 + $0xd9] sm:$0xff] %vm600, %v2673
      %2706 = vst.msk [vmem:[%s304 + $0xe1] sm:$0xff] %vm600, %v2674
      %2707 = vst.msk [vmem:[%s304 + $0xf1] sm:$0xff] %vm600, %v2675
      %2708 = vst.msk [vmem:[%s304 + $0xf9] sm:$0xff] %vm600, %v2676
      %2709 = vst.msk [vmem:[%s304 + $0x109] sm:$0xff] %vm600, %v2677
      %2710 = vst.msk [vmem:[%s304 + $0x111] sm:$0xff] %vm600, %v2678
      %2711 = vst.msk [vmem:[%s304 + $0x121] sm:$0xff] %vm600, %v2679
      %2712 = vst.msk [vmem:[%s304 + $0x129] sm:$0xff] %vm600, %v2680
      %2713 = vst.msk [vmem:[%s304 + $0x139] sm:$0xff] %vm600, %v2681
      %2714 = vst.msk [vmem:[%s304 + $0x141] sm:$0xff] %vm600, %v2682
      %2715 = vst.msk [vmem:[%s304 + $0x151] sm:$0xff] %vm600, %v2683
      %2716 = vst.msk [vmem:[%s304 + $0x159] sm:$0xff] %vm600, %v2684
      %2717 = vst.msk [vmem:[%s304 + $0x169] sm:$0xff] %vm600, %v2685
      %2718 = vst.msk [vmem:[%s304 + $0x171] sm:$0xff] %vm600, %v2686
      %v2719 = vld [vmem:[%s304 + $0x2] sm:$0x1]
      %v2720 = vld [vmem:[%s304 + $0x1a] sm:$0x1]
      %v2721 = vld [vmem:[%s304 + $0x32] sm:$0x1]
      %v2722 = vld [vmem:[%s304 + $0x4a] sm:$0x1]
      %v2723 = vld [vmem:[%s304 + $0x62] sm:$0x1]
      %v2724 = vld [vmem:[%s304 + $0x7a] sm:$0x1]
      %v2725 = vld [vmem:[%s304 + $0x92] sm:$0x1]
      %v2726 = vld [vmem:[%s304 + $0xaa] sm:$0x1]
      %v2727 = vld [vmem:[%s304 + $0xc2] sm:$0x1]
      %v2728 = vld [vmem:[%s304 + $0xda] sm:$0x1]
      %v2729 = vld [vmem:[%s304 + $0xf2] sm:$0x1]
      %v2730 = vld [vmem:[%s304 + $0x10a] sm:$0x1]
      %v2731 = vld [vmem:[%s304 + $0x122] sm:$0x1]
      %v2732 = vld [vmem:[%s304 + $0x13a] sm:$0x1]
      %v2733 = vld [vmem:[%s304 + $0x152] sm:$0x1]
      %v2734 = vld [vmem:[%s304 + $0x16a] sm:$0x1]
      %2735 = vst.msk [vmem:[%s304] sm:$0x1] %vm547, %v2719
      %2736 = vst.msk [vmem:[%s304 + $0x18] sm:$0x1] %vm547, %v2720
      %2737 = vst.msk [vmem:[%s304 + $0x30] sm:$0x1] %vm547, %v2721
      %2738 = vst.msk [vmem:[%s304 + $0x48] sm:$0x1] %vm547, %v2722
      %2739 = vst.msk [vmem:[%s304 + $0x60] sm:$0x1] %vm547, %v2723
      %2740 = vst.msk [vmem:[%s304 + $0x78] sm:$0x1] %vm547, %v2724
      %2741 = vst.msk [vmem:[%s304 + $0x90] sm:$0x1] %vm547, %v2725
      %2742 = vst.msk [vmem:[%s304 + $0xa8] sm:$0x1] %vm547, %v2726
      %2743 = vst.msk [vmem:[%s304 + $0xc0] sm:$0x1] %vm547, %v2727
      %2744 = vst.msk [vmem:[%s304 + $0xd8] sm:$0x1] %vm547, %v2728
      %2745 = vst.msk [vmem:[%s304 + $0xf0] sm:$0x1] %vm547, %v2729
      %2746 = vst.msk [vmem:[%s304 + $0x108] sm:$0x1] %vm547, %v2730
      %2747 = vst.msk [vmem:[%s304 + $0x120] sm:$0x1] %vm547, %v2731
      %2748 = vst.msk [vmem:[%s304 + $0x138] sm:$0x1] %vm547, %v2732
      %2749 = vst.msk [vmem:[%s304 + $0x150] sm:$0x1] %vm547, %v2733
      %2750 = vst.msk [vmem:[%s304 + $0x168] sm:$0x1] %vm547, %v2734
      %v2751 = vld [vmem:[%s304 + $0xf] sm:$0x1]
      %v2752 = vld [vmem:[%s304 + $0x27] sm:$0x1]
      %v2753 = vld [vmem:[%s304 + $0x3f] sm:$0x1]
      %v2754 = vld [vmem:[%s304 + $0x57] sm:$0x1]
      %v2755 = vld [vmem:[%s304 + $0x6f] sm:$0x1]
      %v2756 = vld [vmem:[%s304 + $0x87] sm:$0x1]
      %v2757 = vld [vmem:[%s304 + $0x9f] sm:$0x1]
      %v2758 = vld [vmem:[%s304 + $0xb7] sm:$0x1]
      %v2759 = vld [vmem:[%s304 + $0xcf] sm:$0x1]
      %v2760 = vld [vmem:[%s304 + $0xe7] sm:$0x1]
      %v2761 = vld [vmem:[%s304 + $0xff] sm:$0x1]
      %v2762 = vld [vmem:[%s304 + $0x117] sm:$0x1]
      %v2763 = vld [vmem:[%s304 + $0x12f] sm:$0x1]
      %v2764 = vld [vmem:[%s304 + $0x147] sm:$0x1]
      %v2765 = vld [vmem:[%s304 + $0x15f] sm:$0x1]
      %v2766 = vld [vmem:[%s304 + $0x177] sm:$0x1]
      %2767 = vst.msk [vmem:[%s304 + $0x11] sm:$0x1] %vm547, %v2751
      %2768 = vst.msk [vmem:[%s304 + $0x29] sm:$0x1] %vm547, %v2752
      %2769 = vst.msk [vmem:[%s304 + $0x41] sm:$0x1] %vm547, %v2753
      %2770 = vst.msk [vmem:[%s304 + $0x59] sm:$0x1] %vm547, %v2754
      %2771 = vst.msk [vmem:[%s304 + $0x71] sm:$0x1] %vm547, %v2755
      %2772 = vst.msk [vmem:[%s304 + $0x89] sm:$0x1] %vm547, %v2756
      %2773 = vst.msk [vmem:[%s304 + $0xa1] sm:$0x1] %vm547, %v2757
      %2774 = vst.msk [vmem:[%s304 + $0xb9] sm:$0x1] %vm547, %v2758
      %2775 = vst.msk [vmem:[%s304 + $0xd1] sm:$0x1] %vm547, %v2759
      %2776 = vst.msk [vmem:[%s304 + $0xe9] sm:$0x1] %vm547, %v2760
      %2777 = vst.msk [vmem:[%s304 + $0x101] sm:$0x1] %vm547, %v2761
      %2778 = vst.msk [vmem:[%s304 + $0x119] sm:$0x1] %vm547, %v2762
      %2779 = vst.msk [vmem:[%s304 + $0x131] sm:$0x1] %vm547, %v2763
      %2780 = vst.msk [vmem:[%s304 + $0x149] sm:$0x1] %vm547, %v2764
      %2781 = vst.msk [vmem:[%s304 + $0x161] sm:$0x1] %vm547, %v2765
      %2782 = vst.msk [vmem:[%s304 + $0x179] sm:$0x1] %vm547, %v2766
      %v2783 = vld [vmem:[%s596] sm:$0xff]
      %v2784 = vld [vmem:[%s596 + $0x8] sm:$0xff]
      %v2785 = vld [vmem:[%s596 + $0x10] sm:$0x3]
      %2786 = vst.msk [vmem:[#allocation2] sm:$0xff] %vm600, %v2783
      %2787 = vst.msk [vmem:[#allocation2 + $0x8] sm:$0xff] %vm600, %v2784
      %2788 = vst.msk [vmem:[#allocation2 + $0x10] sm:$0x3] %vm603, %v2785
      %v2789 = vld [vmem:[%s605] sm:$0xff]
      %v2790 = vld [vmem:[%s605 + $0x8] sm:$0xff]
      %v2791 = vld [vmem:[%s605 + $0x10] sm:$0x3]
      %2792 = vst.msk [vmem:[%s609] sm:$0xff] %vm600, %v2789
      %2793 = vst.msk [vmem:[%s609 + $0x8] sm:$0xff] %vm600, %v2790
      %2794 = vst.msk [vmem:[%s609 + $0x10] sm:$0x3] %vm603, %v2791
      %v2795 = vld [vmem:[%s4] sm:$0xff]
      %v2796 = vld [vmem:[%s4 + $0x8] sm:$0xff]
      %v2797 = vld [vmem:[%s4 + $0x10] sm:$0xff]
      %v2798 = vld [vmem:[%s4 + $0x18] sm:$0xff]
      %v2799 = vld [vmem:[%s4 + $0x20] sm:$0xff]
      %v2800 = vld [vmem:[%s4 + $0x28] sm:$0xff]
      %v2801 = vld [vmem:[%s4 + $0x30] sm:$0xff]
      %v2802 = vld [vmem:[%s4 + $0x38] sm:$0xff]
      %v2803 = vld [vmem:[%s4 + $0x40] sm:$0xff]
      %v2804 = vld [vmem:[%s5] sm:$0x1]
      %v2805 = vld [vmem:[#allocation2] sm:$0xff]
      %v2806 = vld [vmem:[#allocation2 + $0x8] sm:$0xff]
      %v2807 = vld [vmem:[#allocation2 + $0x18] sm:$0xff]
      %v2808 = vld [vmem:[#allocation2 + $0x20] sm:$0xff]
      %v2809 = vld [vmem:[#allocation2 + $0x30] sm:$0xff]
      %v2810 = vld [vmem:[#allocation2 + $0x38] sm:$0xff]
      %v2811 = vld [vmem:[#allocation2 + $0x48] sm:$0xff]
      %v2812 = vld [vmem:[#allocation2 + $0x50] sm:$0xff]
      %v2813 = vld [vmem:[#allocation2 + $0x60] sm:$0xff]
      %v2814 = vld [vmem:[#allocation2 + $0x68] sm:$0xff]
      %v2815 = vld [vmem:[#allocation2 + $0x78] sm:$0xff]
      %v2816 = vld [vmem:[#allocation2 + $0x80] sm:$0xff]
      %v2817 = vld [vmem:[#allocation2 + $0x90] sm:$0xff]
      %v2818 = vld [vmem:[#allocation2 + $0x98] sm:$0xff]
      %v2819 = vld [vmem:[#allocation2 + $0xa8] sm:$0xff]
      %v2820 = vld [vmem:[#allocation2 + $0xb0] sm:$0xff]
      %v2821 = vld [vmem:[#allocation2 + $0xc0] sm:$0xff]
      %v2822 = vld [vmem:[#allocation2 + $0xc8] sm:$0xff]
      %v2823 = vld [vmem:[#allocation2 + $0xd8] sm:$0xff]
      %v2824 = vld [vmem:[#allocation2 + $0xe0] sm:$0xff]
      %v2825 = vld [vmem:[#allocation2 + $0xf0] sm:$0xff]
      %v2826 = vld [vmem:[#allocation2 + $0xf8] sm:$0xff]
      %v2827 = vld [vmem:[#allocation2 + $0x108] sm:$0xff]
      %v2828 = vld [vmem:[#allocation2 + $0x110] sm:$0xff]
      %v2829 = vld [vmem:[#allocation2 + $0x120] sm:$0xff]
      %v2830 = vld [vmem:[#allocation2 + $0x128] sm:$0xff]
      %v2831 = vld [vmem:[#allocation2 + $0x138] sm:$0xff]
      %v2832 = vld [vmem:[#allocation2 + $0x140] sm:$0xff]
      %v2833 = vld [vmem:[#allocation2 + $0x150] sm:$0xff]
      %v2834 = vld [vmem:[#allocation2 + $0x158] sm:$0xff]
      %v2835 = vld [vmem:[#allocation2 + $0x168] sm:$0xff]
      %v2836 = vld [vmem:[#allocation2 + $0x170] sm:$0xff]
      %2837 = vst.msk [vmem:[#allocation3] sm:$0xff] %vm600, %v2805
      %2838 = vst.msk [vmem:[#allocation3 + $0x8] sm:$0xff] %vm600, %v2806
      %2839 = vst.msk [vmem:[#allocation3 + $0x10] sm:$0xff] %vm600, %v2807
      %2840 = vst.msk [vmem:[#allocation3 + $0x18] sm:$0xff] %vm600, %v2808
      %2841 = vst.msk [vmem:[#allocation3 + $0x20] sm:$0xff] %vm600, %v2809
      %2842 = vst.msk [vmem:[#allocation3 + $0x28] sm:$0xff] %vm600, %v2810
      %2843 = vst.msk [vmem:[#allocation3 + $0x30] sm:$0xff] %vm600, %v2811
      %2844 = vst.msk [vmem:[#allocation3 + $0x38] sm:$0xff] %vm600, %v2812
      %2845 = vst.msk [vmem:[#allocation3 + $0x40] sm:$0xff] %vm600, %v2813
      %2846 = vst.msk [vmem:[#allocation3 + $0x48] sm:$0xff] %vm600, %v2814
      %2847 = vst.msk [vmem:[#allocation3 + $0x50] sm:$0xff] %vm600, %v2815
      %2848 = vst.msk [vmem:[#allocation3 + $0x58] sm:$0xff] %vm600, %v2816
      %2849 = vst.msk [vmem:[#allocation3 + $0x60] sm:$0xff] %vm600, %v2817
      %2850 = vst.msk [vmem:[#allocation3 + $0x68] sm:$0xff] %vm600, %v2818
      %2851 = vst.msk [vmem:[#allocation3 + $0x70] sm:$0xff] %vm600, %v2819
      %2852 = vst.msk [vmem:[#allocation3 + $0x78] sm:$0xff] %vm600, %v2820
      %2853 = vst.msk [vmem:[#allocation3 + $0x80] sm:$0xff] %vm600, %v2821
      %2854 = vst.msk [vmem:[#allocation3 + $0x88] sm:$0xff] %vm600, %v2822
      %2855 = vst.msk [vmem:[#allocation3 + $0x90] sm:$0xff] %vm600, %v2823
      %2856 = vst.msk [vmem:[#allocation3 + $0x98] sm:$0xff] %vm600, %v2824
      %2857 = vst.msk [vmem:[#allocation3 + $0xa0] sm:$0xff] %vm600, %v2825
      %2858 = vst.msk [vmem:[#allocation3 + $0xa8] sm:$0xff] %vm600, %v2826
      %2859 = vst.msk [vmem:[#allocation3 + $0xb0] sm:$0xff] %vm600, %v2827
      %2860 = vst.msk [vmem:[#allocation3 + $0xb8] sm:$0xff] %vm600, %v2828
      %2861 = vst.msk [vmem:[#allocation3 + $0xc0] sm:$0xff] %vm600, %v2829
      %2862 = vst.msk [vmem:[#allocation3 + $0xc8] sm:$0xff] %vm600, %v2830
      %2863 = vst.msk [vmem:[#allocation3 + $0xd0] sm:$0xff] %vm600, %v2831
      %2864 = vst.msk [vmem:[#allocation3 + $0xd8] sm:$0xff] %vm600, %v2832
      %2865 = vst.msk [vmem:[#allocation3 + $0xe0] sm:$0xff] %vm600, %v2833
      %2866 = vst.msk [vmem:[#allocation3 + $0xe8] sm:$0xff] %vm600, %v2834
      %2867 = vst.msk [vmem:[#allocation3 + $0xf0] sm:$0xff] %vm600, %v2835
      %2868 = vst.msk [vmem:[#allocation3 + $0xf8] sm:$0xff] %vm600, %v2836
      %v2869 = vld [vmem:[#allocation2 + $0x1] sm:$0xff]
      %v2870 = vld [vmem:[#allocation2 + $0x9] sm:$0xff]
      %v2871 = vld [vmem:[#allocation2 + $0x19] sm:$0xff]
      %v2872 = vld [vmem:[#allocation2 + $0x21] sm:$0xff]
      %v2873 = vld [vmem:[#allocation2 + $0x31] sm:$0xff]
      %v2874 = vld [vmem:[#allocation2 + $0x39] sm:$0xff]
      %v2875 = vld [vmem:[#allocation2 + $0x49] sm:$0xff]
      %v2876 = vld [vmem:[#allocation2 + $0x51] sm:$0xff]
      %v2877 = vld [vmem:[#allocation2 + $0x61] sm:$0xff]
      %v2878 = vld [vmem:[#allocation2 + $0x69] sm:$0xff]
      %v2879 = vld [vmem:[#allocation2 + $0x79] sm:$0xff]
      %v2880 = vld [vmem:[#allocation2 + $0x81] sm:$0xff]
      %v2881 = vld [vmem:[#allocation2 + $0x91] sm:$0xff]
      %v2882 = vld [vmem:[#allocation2 + $0x99] sm:$0xff]
      %v2883 = vld [vmem:[#allocation2 + $0xa9] sm:$0xff]
      %v2884 = vld [vmem:[#allocation2 + $0xb1] sm:$0xff]
      %v2885 = vld [vmem:[#allocation2 + $0xc1] sm:$0xff]
      %v2886 = vld [vmem:[#allocation2 + $0xc9] sm:$0xff]
      %v2887 = vld [vmem:[#allocation2 + $0xd9] sm:$0xff]
      %v2888 = vld [vmem:[#allocation2 + $0xe1] sm:$0xff]
      %v2889 = vld [vmem:[#allocation2 + $0xf1] sm:$0xff]
      %v2890 = vld [vmem:[#allocation2 + $0xf9] sm:$0xff]
      %v2891 = vld [vmem:[#allocation2 + $0x109] sm:$0xff]
      %v2892 = vld [vmem:[#allocation2 + $0x111] sm:$0xff]
      %v2893 = vld [vmem:[#allocation2 + $0x121] sm:$0xff]
      %v2894 = vld [vmem:[#allocation2 + $0x129] sm:$0xff]
      %v2895 = vld [vmem:[#allocation2 + $0x139] sm:$0xff]
      %v2896 = vld [vmem:[#allocation2 + $0x141] sm:$0xff]
      %v2897 = vld [vmem:[#allocation2 + $0x151] sm:$0xff]
      %v2898 = vld [vmem:[#allocation2 + $0x159] sm:$0xff]
      %v2899 = vld [vmem:[#allocation2 + $0x169] sm:$0xff]
      %v2900 = vld [vmem:[#allocation2 + $0x171] sm:$0xff]
      %2933 = vrot.lane.b32.xlu0 %v2869, 8
      %v2934 = vpop.permute.xlu0 %2933
      %2935 = vrot.lane.b32.xlu0 %v2870, 8
      %v2936 = vpop.permute.xlu0 %2935
      %2937 = vrot.lane.b32.xlu0 %v2871, 8
      %v2938 = vpop.permute.xlu0 %2937
      %2939 = vrot.lane.b32.xlu0 %v2872, 8
      %v2940 = vpop.permute.xlu0 %2939
      %2941 = vrot.lane.b32.xlu0 %v2873, 8
      %v2942 = vpop.permute.xlu0 %2941
      %2943 = vrot.lane.b32.xlu0 %v2874, 8
      %v2944 = vpop.permute.xlu0 %2943
      %2945 = vrot.lane.b32.xlu0 %v2875, 8
      %v2946 = vpop.permute.xlu0 %2945
      %2947 = vrot.lane.b32.xlu0 %v2876, 8
      %v2948 = vpop.permute.xlu0 %2947
      %2949 = vrot.lane.b32.xlu0 %v2877, 8
      %v2950 = vpop.permute.xlu0 %2949
      %2951 = vrot.lane.b32.xlu0 %v2878, 8
      %v2952 = vpop.permute.xlu0 %2951
      %2953 = vrot.lane.b32.xlu0 %v2879, 8
      %v2954 = vpop.permute.xlu0 %2953
      %2955 = vrot.lane.b32.xlu0 %v2880, 8
      %v2956 = vpop.permute.xlu0 %2955
      %2957 = vrot.lane.b32.xlu0 %v2881, 8
      %v2958 = vpop.permute.xlu0 %2957
      %2959 = vrot.lane.b32.xlu0 %v2882, 8
      %v2960 = vpop.permute.xlu0 %2959
      %2961 = vrot.lane.b32.xlu0 %v2883, 8
      %v2962 = vpop.permute.xlu0 %2961
      %2963 = vrot.lane.b32.xlu0 %v2884, 8
      %v2964 = vpop.permute.xlu0 %2963
      %2965 = vrot.lane.b32.xlu0 %v2885, 8
      %v2966 = vpop.permute.xlu0 %2965
      %2967 = vrot.lane.b32.xlu0 %v2886, 8
      %v2968 = vpop.permute.xlu0 %2967
      %2969 = vrot.lane.b32.xlu0 %v2887, 8
      %v2970 = vpop.permute.xlu0 %2969
      %2971 = vrot.lane.b32.xlu0 %v2888, 8
      %v2972 = vpop.permute.xlu0 %2971
      %2973 = vrot.lane.b32.xlu0 %v2889, 8
      %v2974 = vpop.permute.xlu0 %2973
      %2975 = vrot.lane.b32.xlu0 %v2890, 8
      %v2976 = vpop.permute.xlu0 %2975
      %2977 = vrot.lane.b32.xlu0 %v2891, 8
      %v2978 = vpop.permute.xlu0 %2977
      %2979 = vrot.lane.b32.xlu0 %v2892, 8
      %v2980 = vpop.permute.xlu0 %2979
      %2981 = vrot.lane.b32.xlu0 %v2893, 8
      %v2982 = vpop.permute.xlu0 %2981
      %2983 = vrot.lane.b32.xlu0 %v2894, 8
      %v2984 = vpop.permute.xlu0 %2983
      %2985 = vrot.lane.b32.xlu0 %v2895, 8
      %v2986 = vpop.permute.xlu0 %2985
      %2987 = vrot.lane.b32.xlu0 %v2896, 8
      %v2988 = vpop.permute.xlu0 %2987
      %2989 = vrot.lane.b32.xlu0 %v2897, 8
      %v2990 = vpop.permute.xlu0 %2989
      %2991 = vrot.lane.b32.xlu0 %v2898, 8
      %v2992 = vpop.permute.xlu0 %2991
      %2993 = vrot.lane.b32.xlu0 %v2899, 8
      %v2994 = vpop.permute.xlu0 %2993
      %2995 = vrot.lane.b32.xlu0 %v2900, 8
      %v2996 = vpop.permute.xlu0 %2995
      %3029 = vst.msk [vmem:[#allocation3] sm:$0xff] %vm879, %v2934
      %3030 = vst.msk [vmem:[#allocation3 + $0x8] sm:$0xff] %vm879, %v2936
      %3031 = vst.msk [vmem:[#allocation3 + $0x10] sm:$0xff] %vm879, %v2938
      %3032 = vst.msk [vmem:[#allocation3 + $0x18] sm:$0xff] %vm879, %v2940
      %3033 = vst.msk [vmem:[#allocation3 + $0x20] sm:$0xff] %vm879, %v2942
      %3034 = vst.msk [vmem:[#allocation3 + $0x28] sm:$0xff] %vm879, %v2944
      %3035 = vst.msk [vmem:[#allocation3 + $0x30] sm:$0xff] %vm879, %v2946
      %3036 = vst.msk [vmem:[#allocation3 + $0x38] sm:$0xff] %vm879, %v2948
      %3037 = vst.msk [vmem:[#allocation3 + $0x40] sm:$0xff] %vm879, %v2950
      %3038 = vst.msk [vmem:[#allocation3 + $0x48] sm:$0xff] %vm879, %v2952
      %3039 = vst.msk [vmem:[#allocation3 + $0x50] sm:$0xff] %vm879, %v2954
      %3040 = vst.msk [vmem:[#allocation3 + $0x58] sm:$0xff] %vm879, %v2956
      %3041 = vst.msk [vmem:[#allocation3 + $0x60] sm:$0xff] %vm879, %v2958
      %3042 = vst.msk [vmem:[#allocation3 + $0x68] sm:$0xff] %vm879, %v2960
      %3043 = vst.msk [vmem:[#allocation3 + $0x70] sm:$0xff] %vm879, %v2962
      %3044 = vst.msk [vmem:[#allocation3 + $0x78] sm:$0xff] %vm879, %v2964
      %3045 = vst.msk [vmem:[#allocation3 + $0x80] sm:$0xff] %vm879, %v2966
      %3046 = vst.msk [vmem:[#allocation3 + $0x88] sm:$0xff] %vm879, %v2968
      %3047 = vst.msk [vmem:[#allocation3 + $0x90] sm:$0xff] %vm879, %v2970
      %3048 = vst.msk [vmem:[#allocation3 + $0x98] sm:$0xff] %vm879, %v2972
      %3049 = vst.msk [vmem:[#allocation3 + $0xa0] sm:$0xff] %vm879, %v2974
      %3050 = vst.msk [vmem:[#allocation3 + $0xa8] sm:$0xff] %vm879, %v2976
      %3051 = vst.msk [vmem:[#allocation3 + $0xb0] sm:$0xff] %vm879, %v2978
      %3052 = vst.msk [vmem:[#allocation3 + $0xb8] sm:$0xff] %vm879, %v2980
      %3053 = vst.msk [vmem:[#allocation3 + $0xc0] sm:$0xff] %vm879, %v2982
      %3054 = vst.msk [vmem:[#allocation3 + $0xc8] sm:$0xff] %vm879, %v2984
      %3055 = vst.msk [vmem:[#allocation3 + $0xd0] sm:$0xff] %vm879, %v2986
      %3056 = vst.msk [vmem:[#allocation3 + $0xd8] sm:$0xff] %vm879, %v2988
      %3057 = vst.msk [vmem:[#allocation3 + $0xe0] sm:$0xff] %vm879, %v2990
      %3058 = vst.msk [vmem:[#allocation3 + $0xe8] sm:$0xff] %vm879, %v2992
      %3059 = vst.msk [vmem:[#allocation3 + $0xf0] sm:$0xff] %vm879, %v2994
      %3060 = vst.msk [vmem:[#allocation3 + $0xf8] sm:$0xff] %vm879, %v2996
      %v3061 = vld [vmem:[#allocation2 + $0x2] sm:$0xff]
      %v3062 = vld [vmem:[#allocation2 + $0xa] sm:$0xff]
      %v3063 = vld [vmem:[#allocation2 + $0x1a] sm:$0xff]
      %v3064 = vld [vmem:[#allocation2 + $0x22] sm:$0xff]
      %v3065 = vld [vmem:[#allocation2 + $0x32] sm:$0xff]
      %v3066 = vld [vmem:[#allocation2 + $0x3a] sm:$0xff]
      %v3067 = vld [vmem:[#allocation2 + $0x4a] sm:$0xff]
      %v3068 = vld [vmem:[#allocation2 + $0x52] sm:$0xff]
      %v3069 = vld [vmem:[#allocation2 + $0x62] sm:$0xff]
      %v3070 = vld [vmem:[#allocation2 + $0x6a] sm:$0xff]
      %v3071 = vld [vmem:[#allocation2 + $0x7a] sm:$0xff]
      %v3072 = vld [vmem:[#allocation2 + $0x82] sm:$0xff]
      %v3073 = vld [vmem:[#allocation2 + $0x92] sm:$0xff]
      %v3074 = vld [vmem:[#allocation2 + $0x9a] sm:$0xff]
      %v3075 = vld [vmem:[#allocation2 + $0xaa] sm:$0xff]
      %v3076 = vld [vmem:[#allocation2 + $0xb2] sm:$0xff]
      %v3077 = vld [vmem:[#allocation2 + $0xc2] sm:$0xff]
      %v3078 = vld [vmem:[#allocation2 + $0xca] sm:$0xff]
      %v3079 = vld [vmem:[#allocation2 + $0xda] sm:$0xff]
      %v3080 = vld [vmem:[#allocation2 + $0xe2] sm:$0xff]
      %v3081 = vld [vmem:[#allocation2 + $0xf2] sm:$0xff]
      %v3082 = vld [vmem:[#allocation2 + $0xfa] sm:$0xff]
      %v3083 = vld [vmem:[#allocation2 + $0x10a] sm:$0xff]
      %v3084 = vld [vmem:[#allocation2 + $0x112] sm:$0xff]
      %v3085 = vld [vmem:[#allocation2 + $0x122] sm:$0xff]
      %v3086 = vld [vmem:[#allocation2 + $0x12a] sm:$0xff]
      %v3087 = vld [vmem:[#allocation2 + $0x13a] sm:$0xff]
      %v3088 = vld [vmem:[#allocation2 + $0x142] sm:$0xff]
      %v3089 = vld [vmem:[#allocation2 + $0x152] sm:$0xff]
      %v3090 = vld [vmem:[#allocation2 + $0x15a] sm:$0xff]
      %v3091 = vld [vmem:[#allocation2 + $0x16a] sm:$0xff]
      %v3092 = vld [vmem:[#allocation2 + $0x172] sm:$0xff]
      %3125 = vrot.lane.b32.xlu0 %v3061, 16
      %v3126 = vpop.permute.xlu0 %3125
      %3127 = vrot.lane.b32.xlu0 %v3062, 16
      %v3128 = vpop.permute.xlu0 %3127
      %3129 = vrot.lane.b32.xlu0 %v3063, 16
      %v3130 = vpop.permute.xlu0 %3129
      %3131 = vrot.lane.b32.xlu0 %v3064, 16
      %v3132 = vpop.permute.xlu0 %3131
      %3133 = vrot.lane.b32.xlu0 %v3065, 16
      %v3134 = vpop.permute.xlu0 %3133
      %3135 = vrot.lane.b32.xlu0 %v3066, 16
      %v3136 = vpop.permute.xlu0 %3135
      %3137 = vrot.lane.b32.xlu0 %v3067, 16
      %v3138 = vpop.permute.xlu0 %3137
      %3139 = vrot.lane.b32.xlu0 %v3068, 16
      %v3140 = vpop.permute.xlu0 %3139
      %3141 = vrot.lane.b32.xlu0 %v3069, 16
      %v3142 = vpop.permute.xlu0 %3141
      %3143 = vrot.lane.b32.xlu0 %v3070, 16
      %v3144 = vpop.permute.xlu0 %3143
      %3145 = vrot.lane.b32.xlu0 %v3071, 16
      %v3146 = vpop.permute.xlu0 %3145
      %3147 = vrot.lane.b32.xlu0 %v3072, 16
      %v3148 = vpop.permute.xlu0 %3147
      %3149 = vrot.lane.b32.xlu0 %v3073, 16
      %v3150 = vpop.permute.xlu0 %3149
      %3151 = vrot.lane.b32.xlu0 %v3074, 16
      %v3152 = vpop.permute.xlu0 %3151
      %3153 = vrot.lane.b32.xlu0 %v3075, 16
      %v3154 = vpop.permute.xlu0 %3153
      %3155 = vrot.lane.b32.xlu0 %v3076, 16
      %v3156 = vpop.permute.xlu0 %3155
      %3157 = vrot.lane.b32.xlu0 %v3077, 16
      %v3158 = vpop.permute.xlu0 %3157
      %3159 = vrot.lane.b32.xlu0 %v3078, 16
      %v3160 = vpop.permute.xlu0 %3159
      %3161 = vrot.lane.b32.xlu0 %v3079, 16
      %v3162 = vpop.permute.xlu0 %3161
      %3163 = vrot.lane.b32.xlu0 %v3080, 16
      %v3164 = vpop.permute.xlu0 %3163
      %3165 = vrot.lane.b32.xlu0 %v3081, 16
      %v3166 = vpop.permute.xlu0 %3165
      %3167 = vrot.lane.b32.xlu0 %v3082, 16
      %v3168 = vpop.permute.xlu0 %3167
      %3169 = vrot.lane.b32.xlu0 %v3083, 16
      %v3170 = vpop.permute.xlu0 %3169
      %3171 = vrot.lane.b32.xlu0 %v3084, 16
      %v3172 = vpop.permute.xlu0 %3171
      %3173 = vrot.lane.b32.xlu0 %v3085, 16
      %v3174 = vpop.permute.xlu0 %3173
      %3175 = vrot.lane.b32.xlu0 %v3086, 16
      %v3176 = vpop.permute.xlu0 %3175
      %3177 = vrot.lane.b32.xlu0 %v3087, 16
      %v3178 = vpop.permute.xlu0 %3177
      %3179 = vrot.lane.b32.xlu0 %v3088, 16
      %v3180 = vpop.permute.xlu0 %3179
      %3181 = vrot.lane.b32.xlu0 %v3089, 16
      %v3182 = vpop.permute.xlu0 %3181
      %3183 = vrot.lane.b32.xlu0 %v3090, 16
      %v3184 = vpop.permute.xlu0 %3183
      %3185 = vrot.lane.b32.xlu0 %v3091, 16
      %v3186 = vpop.permute.xlu0 %3185
      %3187 = vrot.lane.b32.xlu0 %v3092, 16
      %v3188 = vpop.permute.xlu0 %3187
      %3221 = vst.msk [vmem:[#allocation3] sm:$0xff] %vm1072, %v3126
      %3222 = vst.msk [vmem:[#allocation3 + $0x8] sm:$0xff] %vm1072, %v3128
      %3223 = vst.msk [vmem:[#allocation3 + $0x10] sm:$0xff] %vm1072, %v3130
      %3224 = vst.msk [vmem:[#allocation3 + $0x18] sm:$0xff] %vm1072, %v3132
      %3225 = vst.msk [vmem:[#allocation3 + $0x20] sm:$0xff] %vm1072, %v3134
      %3226 = vst.msk [vmem:[#allocation3 + $0x28] sm:$0xff] %vm1072, %v3136
      %3227 = vst.msk [vmem:[#allocation3 + $0x30] sm:$0xff] %vm1072, %v3138
      %3228 = vst.msk [vmem:[#allocation3 + $0x38] sm:$0xff] %vm1072, %v3140
      %3229 = vst.msk [vmem:[#allocation3 + $0x40] sm:$0xff] %vm1072, %v3142
      %3230 = vst.msk [vmem:[#allocation3 + $0x48] sm:$0xff] %vm1072, %v3144
      %3231 = vst.msk [vmem:[#allocation3 + $0x50] sm:$0xff] %vm1072, %v3146
      %3232 = vst.msk [vmem:[#allocation3 + $0x58] sm:$0xff] %vm1072, %v3148
      %3233 = vst.msk [vmem:[#allocation3 + $0x60] sm:$0xff] %vm1072, %v3150
      %3234 = vst.msk [vmem:[#allocation3 + $0x68] sm:$0xff] %vm1072, %v3152
      %3235 = vst.msk [vmem:[#allocation3 + $0x70] sm:$0xff] %vm1072, %v3154
      %3236 = vst.msk [vmem:[#allocation3 + $0x78] sm:$0xff] %vm1072, %v3156
      %3237 = vst.msk [vmem:[#allocation3 + $0x80] sm:$0xff] %vm1072, %v3158
      %3238 = vst.msk [vmem:[#allocation3 + $0x88] sm:$0xff] %vm1072, %v3160
      %3239 = vst.msk [vmem:[#allocation3 + $0x90] sm:$0xff] %vm1072, %v3162
      %3240 = vst.msk [vmem:[#allocation3 + $0x98] sm:$0xff] %vm1072, %v3164
      %3241 = vst.msk [vmem:[#allocation3 + $0xa0] sm:$0xff] %vm1072, %v3166
      %3242 = vst.msk [vmem:[#allocation3 + $0xa8] sm:$0xff] %vm1072, %v3168
      %3243 = vst.msk [vmem:[#allocation3 + $0xb0] sm:$0xff] %vm1072, %v3170
      %3244 = vst.msk [vmem:[#allocation3 + $0xb8] sm:$0xff] %vm1072, %v3172
      %3245 = vst.msk [vmem:[#allocation3 + $0xc0] sm:$0xff] %vm1072, %v3174
      %3246 = vst.msk [vmem:[#allocation3 + $0xc8] sm:$0xff] %vm1072, %v3176
      %3247 = vst.msk [vmem:[#allocation3 + $0xd0] sm:$0xff] %vm1072, %v3178
      %3248 = vst.msk [vmem:[#allocation3 + $0xd8] sm:$0xff] %vm1072, %v3180
      %3249 = vst.msk [vmem:[#allocation3 + $0xe0] sm:$0xff] %vm1072, %v3182
      %3250 = vst.msk [vmem:[#allocation3 + $0xe8] sm:$0xff] %vm1072, %v3184
      %3251 = vst.msk [vmem:[#allocation3 + $0xf0] sm:$0xff] %vm1072, %v3186
      %3252 = vst.msk [vmem:[#allocation3 + $0xf8] sm:$0xff] %vm1072, %v3188
      %v3253 = vld [vmem:[%s304] sm:$0xff]
      %v3254 = vld [vmem:[%s304 + $0x8] sm:$0xff]
      %v3255 = vld [vmem:[%s304 + $0x18] sm:$0xff]
      %v3256 = vld [vmem:[%s304 + $0x20] sm:$0xff]
      %v3257 = vld [vmem:[%s304 + $0x30] sm:$0xff]
      %v3258 = vld [vmem:[%s304 + $0x38] sm:$0xff]
      %v3259 = vld [vmem:[%s304 + $0x48] sm:$0xff]
      %v3260 = vld [vmem:[%s304 + $0x50] sm:$0xff]
      %v3261 = vld [vmem:[%s304 + $0x60] sm:$0xff]
      %v3262 = vld [vmem:[%s304 + $0x68] sm:$0xff]
      %v3263 = vld [vmem:[%s304 + $0x78] sm:$0xff]
      %v3264 = vld [vmem:[%s304 + $0x80] sm:$0xff]
      %v3265 = vld [vmem:[%s304 + $0x90] sm:$0xff]
      %v3266 = vld [vmem:[%s304 + $0x98] sm:$0xff]
      %v3267 = vld [vmem:[%s304 + $0xa8] sm:$0xff]
      %v3268 = vld [vmem:[%s304 + $0xb0] sm:$0xff]
      %v3269 = vld [vmem:[%s304 + $0xc0] sm:$0xff]
      %v3270 = vld [vmem:[%s304 + $0xc8] sm:$0xff]
      %v3271 = vld [vmem:[%s304 + $0xd8] sm:$0xff]
      %v3272 = vld [vmem:[%s304 + $0xe0] sm:$0xff]
      %v3273 = vld [vmem:[%s304 + $0xf0] sm:$0xff]
      %v3274 = vld [vmem:[%s304 + $0xf8] sm:$0xff]
      %v3275 = vld [vmem:[%s304 + $0x108] sm:$0xff]
      %v3276 = vld [vmem:[%s304 + $0x110] sm:$0xff]
      %v3277 = vld [vmem:[%s304 + $0x120] sm:$0xff]
      %v3278 = vld [vmem:[%s304 + $0x128] sm:$0xff]
      %v3279 = vld [vmem:[%s304 + $0x138] sm:$0xff]
      %v3280 = vld [vmem:[%s304 + $0x140] sm:$0xff]
      %v3281 = vld [vmem:[%s304 + $0x150] sm:$0xff]
      %v3282 = vld [vmem:[%s304 + $0x158] sm:$0xff]
      %v3283 = vld [vmem:[%s304 + $0x168] sm:$0xff]
      %v3284 = vld [vmem:[%s304 + $0x170] sm:$0xff]
      %3317 = vrot.lane.b32.xlu0 %v3253, 24
      %v3318 = vpop.permute.xlu0 %3317
      %3319 = vrot.lane.b32.xlu0 %v3254, 24
      %v3320 = vpop.permute.xlu0 %3319
      %3321 = vrot.lane.b32.xlu0 %v3255, 24
      %v3322 = vpop.permute.xlu0 %3321
      %3323 = vrot.lane.b32.xlu0 %v3256, 24
      %v3324 = vpop.permute.xlu0 %3323
      %3325 = vrot.lane.b32.xlu0 %v3257, 24
      %v3326 = vpop.permute.xlu0 %3325
      %3327 = vrot.lane.b32.xlu0 %v3258, 24
      %v3328 = vpop.permute.xlu0 %3327
      %3329 = vrot.lane.b32.xlu0 %v3259, 24
      %v3330 = vpop.permute.xlu0 %3329
      %3331 = vrot.lane.b32.xlu0 %v3260, 24
      %v3332 = vpop.permute.xlu0 %3331
      %3333 = vrot.lane.b32.xlu0 %v3261, 24
      %v3334 = vpop.permute.xlu0 %3333
      %3335 = vrot.lane.b32.xlu0 %v3262, 24
      %v3336 = vpop.permute.xlu0 %3335
      %3337 = vrot.lane.b32.xlu0 %v3263, 24
      %v3338 = vpop.permute.xlu0 %3337
      %3339 = vrot.lane.b32.xlu0 %v3264, 24
      %v3340 = vpop.permute.xlu0 %3339
      %3341 = vrot.lane.b32.xlu0 %v3265, 24
      %v3342 = vpop.permute.xlu0 %3341
      %3343 = vrot.lane.b32.xlu0 %v3266, 24
      %v3344 = vpop.permute.xlu0 %3343
      %3345 = vrot.lane.b32.xlu0 %v3267, 24
      %v3346 = vpop.permute.xlu0 %3345
      %3347 = vrot.lane.b32.xlu0 %v3268, 24
      %v3348 = vpop.permute.xlu0 %3347
      %3349 = vrot.lane.b32.xlu0 %v3269, 24
      %v3350 = vpop.permute.xlu0 %3349
      %3351 = vrot.lane.b32.xlu0 %v3270, 24
      %v3352 = vpop.permute.xlu0 %3351
      %3353 = vrot.lane.b32.xlu0 %v3271, 24
      %v3354 = vpop.permute.xlu0 %3353
      %3355 = vrot.lane.b32.xlu0 %v3272, 24
      %v3356 = vpop.permute.xlu0 %3355
      %3357 = vrot.lane.b32.xlu0 %v3273, 24
      %v3358 = vpop.permute.xlu0 %3357
      %3359 = vrot.lane.b32.xlu0 %v3274, 24
      %v3360 = vpop.permute.xlu0 %3359
      %3361 = vrot.lane.b32.xlu0 %v3275, 24
      %v3362 = vpop.permute.xlu0 %3361
      %3363 = vrot.lane.b32.xlu0 %v3276, 24
      %v3364 = vpop.permute.xlu0 %3363
      %3365 = vrot.lane.b32.xlu0 %v3277, 24
      %v3366 = vpop.permute.xlu0 %3365
      %3367 = vrot.lane.b32.xlu0 %v3278, 24
      %v3368 = vpop.permute.xlu0 %3367
      %3369 = vrot.lane.b32.xlu0 %v3279, 24
      %v3370 = vpop.permute.xlu0 %3369
      %3371 = vrot.lane.b32.xlu0 %v3280, 24
      %v3372 = vpop.permute.xlu0 %3371
      %3373 = vrot.lane.b32.xlu0 %v3281, 24
      %v3374 = vpop.permute.xlu0 %3373
      %3375 = vrot.lane.b32.xlu0 %v3282, 24
      %v3376 = vpop.permute.xlu0 %3375
      %3377 = vrot.lane.b32.xlu0 %v3283, 24
      %v3378 = vpop.permute.xlu0 %3377
      %3379 = vrot.lane.b32.xlu0 %v3284, 24
      %v3380 = vpop.permute.xlu0 %3379
      %3413 = vst.msk [vmem:[#allocation3] sm:$0xff] %vm1265, %v3318
      %3414 = vst.msk [vmem:[#allocation3 + $0x8] sm:$0xff] %vm1265, %v3320
      %3415 = vst.msk [vmem:[#allocation3 + $0x10] sm:$0xff] %vm1265, %v3322
      %3416 = vst.msk [vmem:[#allocation3 + $0x18] sm:$0xff] %vm1265, %v3324
      %3417 = vst.msk [vmem:[#allocation3 + $0x20] sm:$0xff] %vm1265, %v3326
      %3418 = vst.msk [vmem:[#allocation3 + $0x28] sm:$0xff] %vm1265, %v3328
      %3419 = vst.msk [vmem:[#allocation3 + $0x30] sm:$0xff] %vm1265, %v3330
      %3420 = vst.msk [vmem:[#allocation3 + $0x38] sm:$0xff] %vm1265, %v3332
      %3421 = vst.msk [vmem:[#allocation3 + $0x40] sm:$0xff] %vm1265, %v3334
      %3422 = vst.msk [vmem:[#allocation3 + $0x48] sm:$0xff] %vm1265, %v3336
      %3423 = vst.msk [vmem:[#allocation3 + $0x50] sm:$0xff] %vm1265, %v3338
      %3424 = vst.msk [vmem:[#allocation3 + $0x58] sm:$0xff] %vm1265, %v3340
      %3425 = vst.msk [vmem:[#allocation3 + $0x60] sm:$0xff] %vm1265, %v3342
      %3426 = vst.msk [vmem:[#allocation3 + $0x68] sm:$0xff] %vm1265, %v3344
      %3427 = vst.msk [vmem:[#allocation3 + $0x70] sm:$0xff] %vm1265, %v3346
      %3428 = vst.msk [vmem:[#allocation3 + $0x78] sm:$0xff] %vm1265, %v3348
      %3429 = vst.msk [vmem:[#allocation3 + $0x80] sm:$0xff] %vm1265, %v3350
      %3430 = vst.msk [vmem:[#allocation3 + $0x88] sm:$0xff] %vm1265, %v3352
      %3431 = vst.msk [vmem:[#allocation3 + $0x90] sm:$0xff] %vm1265, %v3354
      %3432 = vst.msk [vmem:[#allocation3 + $0x98] sm:$0xff] %vm1265, %v3356
      %3433 = vst.msk [vmem:[#allocation3 + $0xa0] sm:$0xff] %vm1265, %v3358
      %3434 = vst.msk [vmem:[#allocation3 + $0xa8] sm:$0xff] %vm1265, %v3360
      %3435 = vst.msk [vmem:[#allocation3 + $0xb0] sm:$0xff] %vm1265, %v3362
      %3436 = vst.msk [vmem:[#allocation3 + $0xb8] sm:$0xff] %vm1265, %v3364
      %3437 = vst.msk [vmem:[#allocation3 + $0xc0] sm:$0xff] %vm1265, %v3366
      %3438 = vst.msk [vmem:[#allocation3 + $0xc8] sm:$0xff] %vm1265, %v3368
      %3439 = vst.msk [vmem:[#allocation3 + $0xd0] sm:$0xff] %vm1265, %v3370
      %3440 = vst.msk [vmem:[#allocation3 + $0xd8] sm:$0xff] %vm1265, %v3372
      %3441 = vst.msk [vmem:[#allocation3 + $0xe0] sm:$0xff] %vm1265, %v3374
      %3442 = vst.msk [vmem:[#allocation3 + $0xe8] sm:$0xff] %vm1265, %v3376
      %3443 = vst.msk [vmem:[#allocation3 + $0xf0] sm:$0xff] %vm1265, %v3378
      %3444 = vst.msk [vmem:[#allocation3 + $0xf8] sm:$0xff] %vm1265, %v3380
      %v3445 = vld [vmem:[%s304 + $0x1] sm:$0xff]
      %v3446 = vld [vmem:[%s304 + $0x9] sm:$0xff]
      %v3447 = vld [vmem:[%s304 + $0x19] sm:$0xff]
      %v3448 = vld [vmem:[%s304 + $0x21] sm:$0xff]
      %v3449 = vld [vmem:[%s304 + $0x31] sm:$0xff]
      %v3450 = vld [vmem:[%s304 + $0x39] sm:$0xff]
      %v3451 = vld [vmem:[%s304 + $0x49] sm:$0xff]
      %v3452 = vld [vmem:[%s304 + $0x51] sm:$0xff]
      %v3453 = vld [vmem:[%s304 + $0x61] sm:$0xff]
      %v3454 = vld [vmem:[%s304 + $0x69] sm:$0xff]
      %v3455 = vld [vmem:[%s304 + $0x79] sm:$0xff]
      %v3456 = vld [vmem:[%s304 + $0x81] sm:$0xff]
      %v3457 = vld [vmem:[%s304 + $0x91] sm:$0xff]
      %v3458 = vld [vmem:[%s304 + $0x99] sm:$0xff]
      %v3459 = vld [vmem:[%s304 + $0xa9] sm:$0xff]
      %v3460 = vld [vmem:[%s304 + $0xb1] sm:$0xff]
      %v3461 = vld [vmem:[%s304 + $0xc1] sm:$0xff]
      %v3462 = vld [vmem:[%s304 + $0xc9] sm:$0xff]
      %v3463 = vld [vmem:[%s304 + $0xd9] sm:$0xff]
      %v3464 = vld [vmem:[%s304 + $0xe1] sm:$0xff]
      %v3465 = vld [vmem:[%s304 + $0xf1] sm:$0xff]
      %v3466 = vld [vmem:[%s304 + $0xf9] sm:$0xff]
      %v3467 = vld [vmem:[%s304 + $0x109] sm:$0xff]
      %v3468 = vld [vmem:[%s304 + $0x111] sm:$0xff]
      %v3469 = vld [vmem:[%s304 + $0x121] sm:$0xff]
      %v3470 = vld [vmem:[%s304 + $0x129] sm:$0xff]
      %v3471 = vld [vmem:[%s304 + $0x139] sm:$0xff]
      %v3472 = vld [vmem:[%s304 + $0x141] sm:$0xff]
      %v3473 = vld [vmem:[%s304 + $0x151] sm:$0xff]
      %v3474 = vld [vmem:[%s304 + $0x159] sm:$0xff]
      %v3475 = vld [vmem:[%s304 + $0x169] sm:$0xff]
      %v3476 = vld [vmem:[%s304 + $0x171] sm:$0xff]
      %3509 = vrot.lane.b32.xlu0 %v3445, 32
      %v3510 = vpop.permute.xlu0 %3509
      %3511 = vrot.lane.b32.xlu0 %v3446, 32
      %v3512 = vpop.permute.xlu0 %3511
      %3513 = vrot.lane.b32.xlu0 %v3447, 32
      %v3514 = vpop.permute.xlu0 %3513
      %3515 = vrot.lane.b32.xlu0 %v3448, 32
      %v3516 = vpop.permute.xlu0 %3515
      %3517 = vrot.lane.b32.xlu0 %v3449, 32
      %v3518 = vpop.permute.xlu0 %3517
      %3519 = vrot.lane.b32.xlu0 %v3450, 32
      %v3520 = vpop.permute.xlu0 %3519
      %3521 = vrot.lane.b32.xlu0 %v3451, 32
      %v3522 = vpop.permute.xlu0 %3521
      %3523 = vrot.lane.b32.xlu0 %v3452, 32
      %v3524 = vpop.permute.xlu0 %3523
      %3525 = vrot.lane.b32.xlu0 %v3453, 32
      %v3526 = vpop.permute.xlu0 %3525
      %3527 = vrot.lane.b32.xlu0 %v3454, 32
      %v3528 = vpop.permute.xlu0 %3527
      %3529 = vrot.lane.b32.xlu0 %v3455, 32
      %v3530 = vpop.permute.xlu0 %3529
      %3531 = vrot.lane.b32.xlu0 %v3456, 32
      %v3532 = vpop.permute.xlu0 %3531
      %3533 = vrot.lane.b32.xlu0 %v3457, 32
      %v3534 = vpop.permute.xlu0 %3533
      %3535 = vrot.lane.b32.xlu0 %v3458, 32
      %v3536 = vpop.permute.xlu0 %3535
      %3537 = vrot.lane.b32.xlu0 %v3459, 32
      %v3538 = vpop.permute.xlu0 %3537
      %3539 = vrot.lane.b32.xlu0 %v3460, 32
      %v3540 = vpop.permute.xlu0 %3539
      %3541 = vrot.lane.b32.xlu0 %v3461, 32
      %v3542 = vpop.permute.xlu0 %3541
      %3543 = vrot.lane.b32.xlu0 %v3462, 32
      %v3544 = vpop.permute.xlu0 %3543
      %3545 = vrot.lane.b32.xlu0 %v3463, 32
      %v3546 = vpop.permute.xlu0 %3545
      %3547 = vrot.lane.b32.xlu0 %v3464, 32
      %v3548 = vpop.permute.xlu0 %3547
      %3549 = vrot.lane.b32.xlu0 %v3465, 32
      %v3550 = vpop.permute.xlu0 %3549
      %3551 = vrot.lane.b32.xlu0 %v3466, 32
      %v3552 = vpop.permute.xlu0 %3551
      %3553 = vrot.lane.b32.xlu0 %v3467, 32
      %v3554 = vpop.permute.xlu0 %3553
      %3555 = vrot.lane.b32.xlu0 %v3468, 32
      %v3556 = vpop.permute.xlu0 %3555
      %3557 = vrot.lane.b32.xlu0 %v3469, 32
      %v3558 = vpop.permute.xlu0 %3557
      %3559 = vrot.lane.b32.xlu0 %v3470, 32
      %v3560 = vpop.permute.xlu0 %3559
      %3561 = vrot.lane.b32.xlu0 %v3471, 32
      %v3562 = vpop.permute.xlu0 %3561
      %3563 = vrot.lane.b32.xlu0 %v3472, 32
      %v3564 = vpop.permute.xlu0 %3563
      %3565 = vrot.lane.b32.xlu0 %v3473, 32
      %v3566 = vpop.permute.xlu0 %3565
      %3567 = vrot.lane.b32.xlu0 %v3474, 32
      %v3568 = vpop.permute.xlu0 %3567
      %3569 = vrot.lane.b32.xlu0 %v3475, 32
      %v3570 = vpop.permute.xlu0 %3569
      %3571 = vrot.lane.b32.xlu0 %v3476, 32
      %v3572 = vpop.permute.xlu0 %3571
      %3605 = vst.msk [vmem:[#allocation3] sm:$0xff] %vm1458, %v3510
      %3606 = vst.msk [vmem:[#allocation3 + $0x8] sm:$0xff] %vm1458, %v3512
      %3607 = vst.msk [vmem:[#allocation3 + $0x10] sm:$0xff] %vm1458, %v3514
      %3608 = vst.msk [vmem:[#allocation3 + $0x18] sm:$0xff] %vm1458, %v3516
      %3609 = vst.msk [vmem:[#allocation3 + $0x20] sm:$0xff] %vm1458, %v3518
      %3610 = vst.msk [vmem:[#allocation3 + $0x28] sm:$0xff] %vm1458, %v3520
      %3611 = vst.msk [vmem:[#allocation3 + $0x30] sm:$0xff] %vm1458, %v3522
      %3612 = vst.msk [vmem:[#allocation3 + $0x38] sm:$0xff] %vm1458, %v3524
      %3613 = vst.msk [vmem:[#allocation3 + $0x40] sm:$0xff] %vm1458, %v3526
      %3614 = vst.msk [vmem:[#allocation3 + $0x48] sm:$0xff] %vm1458, %v3528
      %3615 = vst.msk [vmem:[#allocation3 + $0x50] sm:$0xff] %vm1458, %v3530
      %3616 = vst.msk [vmem:[#allocation3 + $0x58] sm:$0xff] %vm1458, %v3532
      %3617 = vst.msk [vmem:[#allocation3 + $0x60] sm:$0xff] %vm1458, %v3534
      %3618 = vst.msk [vmem:[#allocation3 + $0x68] sm:$0xff] %vm1458, %v3536
      %3619 = vst.msk [vmem:[#allocation3 + $0x70] sm:$0xff] %vm1458, %v3538
      %3620 = vst.msk [vmem:[#allocation3 + $0x78] sm:$0xff] %vm1458, %v3540
      %3621 = vst.msk [vmem:[#allocation3 + $0x80] sm:$0xff] %vm1458, %v3542
      %3622 = vst.msk [vmem:[#allocation3 + $0x88] sm:$0xff] %vm1458, %v3544
      %3623 = vst.msk [vmem:[#allocation3 + $0x90] sm:$0xff] %vm1458, %v3546
      %3624 = vst.msk [vmem:[#allocation3 + $0x98] sm:$0xff] %vm1458, %v3548
      %3625 = vst.msk [vmem:[#allocation3 + $0xa0] sm:$0xff] %vm1458, %v3550
      %3626 = vst.msk [vmem:[#allocation3 + $0xa8] sm:$0xff] %vm1458, %v3552
      %3627 = vst.msk [vmem:[#allocation3 + $0xb0] sm:$0xff] %vm1458, %v3554
      %3628 = vst.msk [vmem:[#allocation3 + $0xb8] sm:$0xff] %vm1458, %v3556
      %3629 = vst.msk [vmem:[#allocation3 + $0xc0] sm:$0xff] %vm1458, %v3558
      %3630 = vst.msk [vmem:[#allocation3 + $0xc8] sm:$0xff] %vm1458, %v3560
      %3631 = vst.msk [vmem:[#allocation3 + $0xd0] sm:$0xff] %vm1458, %v3562
      %3632 = vst.msk [vmem:[#allocation3 + $0xd8] sm:$0xff] %vm1458, %v3564
      %3633 = vst.msk [vmem:[#allocation3 + $0xe0] sm:$0xff] %vm1458, %v3566
      %3634 = vst.msk [vmem:[#allocation3 + $0xe8] sm:$0xff] %vm1458, %v3568
      %3635 = vst.msk [vmem:[#allocation3 + $0xf0] sm:$0xff] %vm1458, %v3570
      %3636 = vst.msk [vmem:[#allocation3 + $0xf8] sm:$0xff] %vm1458, %v3572
      %v3637 = vld [vmem:[%s304 + $0x2] sm:$0xff]
      %v3638 = vld [vmem:[%s304 + $0xa] sm:$0xff]
      %v3639 = vld [vmem:[%s304 + $0x1a] sm:$0xff]
      %v3640 = vld [vmem:[%s304 + $0x22] sm:$0xff]
      %v3641 = vld [vmem:[%s304 + $0x32] sm:$0xff]
      %v3642 = vld [vmem:[%s304 + $0x3a] sm:$0xff]
      %v3643 = vld [vmem:[%s304 + $0x4a] sm:$0xff]
      %v3644 = vld [vmem:[%s304 + $0x52] sm:$0xff]
      %v3645 = vld [vmem:[%s304 + $0x62] sm:$0xff]
      %v3646 = vld [vmem:[%s304 + $0x6a] sm:$0xff]
      %v3647 = vld [vmem:[%s304 + $0x7a] sm:$0xff]
      %v3648 = vld [vmem:[%s304 + $0x82] sm:$0xff]
      %v3649 = vld [vmem:[%s304 + $0x92] sm:$0xff]
      %v3650 = vld [vmem:[%s304 + $0x9a] sm:$0xff]
      %v3651 = vld [vmem:[%s304 + $0xaa] sm:$0xff]
      %v3652 = vld [vmem:[%s304 + $0xb2] sm:$0xff]
      %v3653 = vld [vmem:[%s304 + $0xc2] sm:$0xff]
      %v3654 = vld [vmem:[%s304 + $0xca] sm:$0xff]
      %v3655 = vld [vmem:[%s304 + $0xda] sm:$0xff]
      %v3656 = vld [vmem:[%s304 + $0xe2] sm:$0xff]
      %v3657 = vld [vmem:[%s304 + $0xf2] sm:$0xff]
      %v3658 = vld [vmem:[%s304 + $0xfa] sm:$0xff]
      %v3659 = vld [vmem:[%s304 + $0x10a] sm:$0xff]
      %v3660 = vld [vmem:[%s304 + $0x112] sm:$0xff]
      %v3661 = vld [vmem:[%s304 + $0x122] sm:$0xff]
      %v3662 = vld [vmem:[%s304 + $0x12a] sm:$0xff]
      %v3663 = vld [vmem:[%s304 + $0x13a] sm:$0xff]
      %v3664 = vld [vmem:[%s304 + $0x142] sm:$0xff]
      %v3665 = vld [vmem:[%s304 + $0x152] sm:$0xff]
      %v3666 = vld [vmem:[%s304 + $0x15a] sm:$0xff]
      %v3667 = vld [vmem:[%s304 + $0x16a] sm:$0xff]
      %v3668 = vld [vmem:[%s304 + $0x172] sm:$0xff]
      %3701 = vrot.lane.b32.xlu0 %v3637, 40
      %v3702 = vpop.permute.xlu0 %3701
      %3703 = vrot.lane.b32.xlu0 %v3638, 40
      %v3704 = vpop.permute.xlu0 %3703
      %3705 = vrot.lane.b32.xlu0 %v3639, 40
      %v3706 = vpop.permute.xlu0 %3705
      %3707 = vrot.lane.b32.xlu0 %v3640, 40
      %v3708 = vpop.permute.xlu0 %3707
      %3709 = vrot.lane.b32.xlu0 %v3641, 40
      %v3710 = vpop.permute.xlu0 %3709
      %3711 = vrot.lane.b32.xlu0 %v3642, 40
      %v3712 = vpop.permute.xlu0 %3711
      %3713 = vrot.lane.b32.xlu0 %v3643, 40
      %v3714 = vpop.permute.xlu0 %3713
      %3715 = vrot.lane.b32.xlu0 %v3644, 40
      %v3716 = vpop.permute.xlu0 %3715
      %3717 = vrot.lane.b32.xlu0 %v3645, 40
      %v3718 = vpop.permute.xlu0 %3717
      %3719 = vrot.lane.b32.xlu0 %v3646, 40
      %v3720 = vpop.permute.xlu0 %3719
      %3721 = vrot.lane.b32.xlu0 %v3647, 40
      %v3722 = vpop.permute.xlu0 %3721
      %3723 = vrot.lane.b32.xlu0 %v3648, 40
      %v3724 = vpop.permute.xlu0 %3723
      %3725 = vrot.lane.b32.xlu0 %v3649, 40
      %v3726 = vpop.permute.xlu0 %3725
      %3727 = vrot.lane.b32.xlu0 %v3650, 40
      %v3728 = vpop.permute.xlu0 %3727
      %3729 = vrot.lane.b32.xlu0 %v3651, 40
      %v3730 = vpop.permute.xlu0 %3729
      %3731 = vrot.lane.b32.xlu0 %v3652, 40
      %v3732 = vpop.permute.xlu0 %3731
      %3733 = vrot.lane.b32.xlu0 %v3653, 40
      %v3734 = vpop.permute.xlu0 %3733
      %3735 = vrot.lane.b32.xlu0 %v3654, 40
      %v3736 = vpop.permute.xlu0 %3735
      %3737 = vrot.lane.b32.xlu0 %v3655, 40
      %v3738 = vpop.permute.xlu0 %3737
      %3739 = vrot.lane.b32.xlu0 %v3656, 40
      %v3740 = vpop.permute.xlu0 %3739
      %3741 = vrot.lane.b32.xlu0 %v3657, 40
      %v3742 = vpop.permute.xlu0 %3741
      %3743 = vrot.lane.b32.xlu0 %v3658, 40
      %v3744 = vpop.permute.xlu0 %3743
      %3745 = vrot.lane.b32.xlu0 %v3659, 40
      %v3746 = vpop.permute.xlu0 %3745
      %3747 = vrot.lane.b32.xlu0 %v3660, 40
      %v3748 = vpop.permute.xlu0 %3747
      %3749 = vrot.lane.b32.xlu0 %v3661, 40
      %v3750 = vpop.permute.xlu0 %3749
      %3751 = vrot.lane.b32.xlu0 %v3662, 40
      %v3752 = vpop.permute.xlu0 %3751
      %3753 = vrot.lane.b32.xlu0 %v3663, 40
      %v3754 = vpop.permute.xlu0 %3753
      %3755 = vrot.lane.b32.xlu0 %v3664, 40
      %v3756 = vpop.permute.xlu0 %3755
      %3757 = vrot.lane.b32.xlu0 %v3665, 40
      %v3758 = vpop.permute.xlu0 %3757
      %3759 = vrot.lane.b32.xlu0 %v3666, 40
      %v3760 = vpop.permute.xlu0 %3759
      %3761 = vrot.lane.b32.xlu0 %v3667, 40
      %v3762 = vpop.permute.xlu0 %3761
      %3763 = vrot.lane.b32.xlu0 %v3668, 40
      %v3764 = vpop.permute.xlu0 %3763
      %3797 = vst.msk [vmem:[#allocation3] sm:$0xff] %vm1651, %v3702
      %3798 = vst.msk [vmem:[#allocation3 + $0x8] sm:$0xff] %vm1651, %v3704
      %3799 = vst.msk [vmem:[#allocation3 + $0x10] sm:$0xff] %vm1651, %v3706
      %3800 = vst.msk [vmem:[#allocation3 + $0x18] sm:$0xff] %vm1651, %v3708
      %3801 = vst.msk [vmem:[#allocation3 + $0x20] sm:$0xff] %vm1651, %v3710
      %3802 = vst.msk [vmem:[#allocation3 + $0x28] sm:$0xff] %vm1651, %v3712
      %3803 = vst.msk [vmem:[#allocation3 + $0x30] sm:$0xff] %vm1651, %v3714
      %3804 = vst.msk [vmem:[#allocation3 + $0x38] sm:$0xff] %vm1651, %v3716
      %3805 = vst.msk [vmem:[#allocation3 + $0x40] sm:$0xff] %vm1651, %v3718
      %3806 = vst.msk [vmem:[#allocation3 + $0x48] sm:$0xff] %vm1651, %v3720
      %3807 = vst.msk [vmem:[#allocation3 + $0x50] sm:$0xff] %vm1651, %v3722
      %3808 = vst.msk [vmem:[#allocation3 + $0x58] sm:$0xff] %vm1651, %v3724
      %3809 = vst.msk [vmem:[#allocation3 + $0x60] sm:$0xff] %vm1651, %v3726
      %3810 = vst.msk [vmem:[#allocation3 + $0x68] sm:$0xff] %vm1651, %v3728
      %3811 = vst.msk [vmem:[#allocation3 + $0x70] sm:$0xff] %vm1651, %v3730
      %3812 = vst.msk [vmem:[#allocation3 + $0x78] sm:$0xff] %vm1651, %v3732
      %3813 = vst.msk [vmem:[#allocation3 + $0x80] sm:$0xff] %vm1651, %v3734
      %3814 = vst.msk [vmem:[#allocation3 + $0x88] sm:$0xff] %vm1651, %v3736
      %3815 = vst.msk [vmem:[#allocation3 + $0x90] sm:$0xff] %vm1651, %v3738
      %3816 = vst.msk [vmem:[#allocation3 + $0x98] sm:$0xff] %vm1651, %v3740
      %3817 = vst.msk [vmem:[#allocation3 + $0xa0] sm:$0xff] %vm1651, %v3742
      %3818 = vst.msk [vmem:[#allocation3 + $0xa8] sm:$0xff] %vm1651, %v3744
      %3819 = vst.msk [vmem:[#allocation3 + $0xb0] sm:$0xff] %vm1651, %v3746
      %3820 = vst.msk [vmem:[#allocation3 + $0xb8] sm:$0xff] %vm1651, %v3748
      %3821 = vst.msk [vmem:[#allocation3 + $0xc0] sm:$0xff] %vm1651, %v3750
      %3822 = vst.msk [vmem:[#allocation3 + $0xc8] sm:$0xff] %vm1651, %v3752
      %3823 = vst.msk [vmem:[#allocation3 + $0xd0] sm:$0xff] %vm1651, %v3754
      %3824 = vst.msk [vmem:[#allocation3 + $0xd8] sm:$0xff] %vm1651, %v3756
      %3825 = vst.msk [vmem:[#allocation3 + $0xe0] sm:$0xff] %vm1651, %v3758
      %3826 = vst.msk [vmem:[#allocation3 + $0xe8] sm:$0xff] %vm1651, %v3760
      %3827 = vst.msk [vmem:[#allocation3 + $0xf0] sm:$0xff] %vm1651, %v3762
      %3828 = vst.msk [vmem:[#allocation3 + $0xf8] sm:$0xff] %vm1651, %v3764
      %v3829 = vld [vmem:[%s596] sm:$0xff]
      %v3830 = vld [vmem:[%s596 + $0x8] sm:$0xff]
      %v3831 = vld [vmem:[%s596 + $0x18] sm:$0xff]
      %v3832 = vld [vmem:[%s596 + $0x20] sm:$0xff]
      %v3833 = vld [vmem:[%s596 + $0x30] sm:$0xff]
      %v3834 = vld [vmem:[%s596 + $0x38] sm:$0xff]
      %v3835 = vld [vmem:[%s596 + $0x48] sm:$0xff]
      %v3836 = vld [vmem:[%s596 + $0x50] sm:$0xff]
      %v3837 = vld [vmem:[%s596 + $0x60] sm:$0xff]
      %v3838 = vld [vmem:[%s596 + $0x68] sm:$0xff]
      %v3839 = vld [vmem:[%s596 + $0x78] sm:$0xff]
      %v3840 = vld [vmem:[%s596 + $0x80] sm:$0xff]
      %v3841 = vld [vmem:[%s596 + $0x90] sm:$0xff]
      %v3842 = vld [vmem:[%s596 + $0x98] sm:$0xff]
      %v3843 = vld [vmem:[%s596 + $0xa8] sm:$0xff]
      %v3844 = vld [vmem:[%s596 + $0xb0] sm:$0xff]
      %v3845 = vld [vmem:[%s596 + $0xc0] sm:$0xff]
      %v3846 = vld [vmem:[%s596 + $0xc8] sm:$0xff]
      %v3847 = vld [vmem:[%s596 + $0xd8] sm:$0xff]
      %v3848 = vld [vmem:[%s596 + $0xe0] sm:$0xff]
      %v3849 = vld [vmem:[%s596 + $0xf0] sm:$0xff]
      %v3850 = vld [vmem:[%s596 + $0xf8] sm:$0xff]
      %v3851 = vld [vmem:[%s596 + $0x108] sm:$0xff]
      %v3852 = vld [vmem:[%s596 + $0x110] sm:$0xff]
      %v3853 = vld [vmem:[%s596 + $0x120] sm:$0xff]
      %v3854 = vld [vmem:[%s596 + $0x128] sm:$0xff]
      %v3855 = vld [vmem:[%s596 + $0x138] sm:$0xff]
      %v3856 = vld [vmem:[%s596 + $0x140] sm:$0xff]
      %v3857 = vld [vmem:[%s596 + $0x150] sm:$0xff]
      %v3858 = vld [vmem:[%s596 + $0x158] sm:$0xff]
      %v3859 = vld [vmem:[%s596 + $0x168] sm:$0xff]
      %v3860 = vld [vmem:[%s596 + $0x170] sm:$0xff]
      %3893 = vrot.lane.b32.xlu0 %v3829, 48
      %v3894 = vpop.permute.xlu0 %3893
      %3895 = vrot.lane.b32.xlu0 %v3830, 48
      %v3896 = vpop.permute.xlu0 %3895
      %3897 = vrot.lane.b32.xlu0 %v3831, 48
      %v3898 = vpop.permute.xlu0 %3897
      %3899 = vrot.lane.b32.xlu0 %v3832, 48
      %v3900 = vpop.permute.xlu0 %3899
      %3901 = vrot.lane.b32.xlu0 %v3833, 48
      %v3902 = vpop.permute.xlu0 %3901
      %3903 = vrot.lane.b32.xlu0 %v3834, 48
      %v3904 = vpop.permute.xlu0 %3903
      %3905 = vrot.lane.b32.xlu0 %v3835, 48
      %v3906 = vpop.permute.xlu0 %3905
      %3907 = vrot.lane.b32.xlu0 %v3836, 48
      %v3908 = vpop.permute.xlu0 %3907
      %3909 = vrot.lane.b32.xlu0 %v3837, 48
      %v3910 = vpop.permute.xlu0 %3909
      %3911 = vrot.lane.b32.xlu0 %v3838, 48
      %v3912 = vpop.permute.xlu0 %3911
      %3913 = vrot.lane.b32.xlu0 %v3839, 48
      %v3914 = vpop.permute.xlu0 %3913
      %3915 = vrot.lane.b32.xlu0 %v3840, 48
      %v3916 = vpop.permute.xlu0 %3915
      %3917 = vrot.lane.b32.xlu0 %v3841, 48
      %v3918 = vpop.permute.xlu0 %3917
      %3919 = vrot.lane.b32.xlu0 %v3842, 48
      %v3920 = vpop.permute.xlu0 %3919
      %3921 = vrot.lane.b32.xlu0 %v3843, 48
      %v3922 = vpop.permute.xlu0 %3921
      %3923 = vrot.lane.b32.xlu0 %v3844, 48
      %v3924 = vpop.permute.xlu0 %3923
      %3925 = vrot.lane.b32.xlu0 %v3845, 48
      %v3926 = vpop.permute.xlu0 %3925
      %3927 = vrot.lane.b32.xlu0 %v3846, 48
      %v3928 = vpop.permute.xlu0 %3927
      %3929 = vrot.lane.b32.xlu0 %v3847, 48
      %v3930 = vpop.permute.xlu0 %3929
      %3931 = vrot.lane.b32.xlu0 %v3848, 48
      %v3932 = vpop.permute.xlu0 %3931
      %3933 = vrot.lane.b32.xlu0 %v3849, 48
      %v3934 = vpop.permute.xlu0 %3933
      %3935 = vrot.lane.b32.xlu0 %v3850, 48
      %v3936 = vpop.permute.xlu0 %3935
      %3937 = vrot.lane.b32.xlu0 %v3851, 48
      %v3938 = vpop.permute.xlu0 %3937
      %3939 = vrot.lane.b32.xlu0 %v3852, 48
      %v3940 = vpop.permute.xlu0 %3939
      %3941 = vrot.lane.b32.xlu0 %v3853, 48
      %v3942 = vpop.permute.xlu0 %3941
      %3943 = vrot.lane.b32.xlu0 %v3854, 48
      %v3944 = vpop.permute.xlu0 %3943
      %3945 = vrot.lane.b32.xlu0 %v3855, 48
      %v3946 = vpop.permute.xlu0 %3945
      %3947 = vrot.lane.b32.xlu0 %v3856, 48
      %v3948 = vpop.permute.xlu0 %3947
      %3949 = vrot.lane.b32.xlu0 %v3857, 48
      %v3950 = vpop.permute.xlu0 %3949
      %3951 = vrot.lane.b32.xlu0 %v3858, 48
      %v3952 = vpop.permute.xlu0 %3951
      %3953 = vrot.lane.b32.xlu0 %v3859, 48
      %v3954 = vpop.permute.xlu0 %3953
      %3955 = vrot.lane.b32.xlu0 %v3860, 48
      %v3956 = vpop.permute.xlu0 %3955
      %3989 = vst.msk [vmem:[#allocation3] sm:$0xff] %vm1844, %v3894
      %3990 = vst.msk [vmem:[#allocation3 + $0x8] sm:$0xff] %vm1844, %v3896
      %3991 = vst.msk [vmem:[#allocation3 + $0x10] sm:$0xff] %vm1844, %v3898
      %3992 = vst.msk [vmem:[#allocation3 + $0x18] sm:$0xff] %vm1844, %v3900
      %3993 = vst.msk [vmem:[#allocation3 + $0x20] sm:$0xff] %vm1844, %v3902
      %3994 = vst.msk [vmem:[#allocation3 + $0x28] sm:$0xff] %vm1844, %v3904
      %3995 = vst.msk [vmem:[#allocation3 + $0x30] sm:$0xff] %vm1844, %v3906
      %3996 = vst.msk [vmem:[#allocation3 + $0x38] sm:$0xff] %vm1844, %v3908
      %3997 = vst.msk [vmem:[#allocation3 + $0x40] sm:$0xff] %vm1844, %v3910
      %3998 = vst.msk [vmem:[#allocation3 + $0x48] sm:$0xff] %vm1844, %v3912
      %3999 = vst.msk [vmem:[#allocation3 + $0x50] sm:$0xff] %vm1844, %v3914
      %4000 = vst.msk [vmem:[#allocation3 + $0x58] sm:$0xff] %vm1844, %v3916
      %4001 = vst.msk [vmem:[#allocation3 + $0x60] sm:$0xff] %vm1844, %v3918
      %4002 = vst.msk [vmem:[#allocation3 + $0x68] sm:$0xff] %vm1844, %v3920
      %4003 = vst.msk [vmem:[#allocation3 + $0x70] sm:$0xff] %vm1844, %v3922
      %4004 = vst.msk [vmem:[#allocation3 + $0x78] sm:$0xff] %vm1844, %v3924
      %4005 = vst.msk [vmem:[#allocation3 + $0x80] sm:$0xff] %vm1844, %v3926
      %4006 = vst.msk [vmem:[#allocation3 + $0x88] sm:$0xff] %vm1844, %v3928
      %4007 = vst.msk [vmem:[#allocation3 + $0x90] sm:$0xff] %vm1844, %v3930
      %4008 = vst.msk [vmem:[#allocation3 + $0x98] sm:$0xff] %vm1844, %v3932
      %4009 = vst.msk [vmem:[#allocation3 + $0xa0] sm:$0xff] %vm1844, %v3934
      %4010 = vst.msk [vmem:[#allocation3 + $0xa8] sm:$0xff] %vm1844, %v3936
      %4011 = vst.msk [vmem:[#allocation3 + $0xb0] sm:$0xff] %vm1844, %v3938
      %4012 = vst.msk [vmem:[#allocation3 + $0xb8] sm:$0xff] %vm1844, %v3940
      %4013 = vst.msk [vmem:[#allocation3 + $0xc0] sm:$0xff] %vm1844, %v3942
      %4014 = vst.msk [vmem:[#allocation3 + $0xc8] sm:$0xff] %vm1844, %v3944
      %4015 = vst.msk [vmem:[#allocation3 + $0xd0] sm:$0xff] %vm1844, %v3946
      %4016 = vst.msk [vmem:[#allocation3 + $0xd8] sm:$0xff] %vm1844, %v3948
      %4017 = vst.msk [vmem:[#allocation3 + $0xe0] sm:$0xff] %vm1844, %v3950
      %4018 = vst.msk [vmem:[#allocation3 + $0xe8] sm:$0xff] %vm1844, %v3952
      %4019 = vst.msk [vmem:[#allocation3 + $0xf0] sm:$0xff] %vm1844, %v3954
      %4020 = vst.msk [vmem:[#allocation3 + $0xf8] sm:$0xff] %vm1844, %v3956
      %v4021 = vld [vmem:[%s596 + $0x1] sm:$0xff]
      %v4022 = vld [vmem:[%s596 + $0x9] sm:$0xff]
      %v4023 = vld [vmem:[%s596 + $0x19] sm:$0xff]
      %v4024 = vld [vmem:[%s596 + $0x21] sm:$0xff]
      %v4025 = vld [vmem:[%s596 + $0x31] sm:$0xff]
      %v4026 = vld [vmem:[%s596 + $0x39] sm:$0xff]
      %v4027 = vld [vmem:[%s596 + $0x49] sm:$0xff]
      %v4028 = vld [vmem:[%s596 + $0x51] sm:$0xff]
      %v4029 = vld [vmem:[%s596 + $0x61] sm:$0xff]
      %v4030 = vld [vmem:[%s596 + $0x69] sm:$0xff]
      %v4031 = vld [vmem:[%s596 + $0x79] sm:$0xff]
      %v4032 = vld [vmem:[%s596 + $0x81] sm:$0xff]
      %v4033 = vld [vmem:[%s596 + $0x91] sm:$0xff]
      %v4034 = vld [vmem:[%s596 + $0x99] sm:$0xff]
      %v4035 = vld [vmem:[%s596 + $0xa9] sm:$0xff]
      %v4036 = vld [vmem:[%s596 + $0xb1] sm:$0xff]
      %v4037 = vld [vmem:[%s596 + $0xc1] sm:$0xff]
      %v4038 = vld [vmem:[%s596 + $0xc9] sm:$0xff]
      %v4039 = vld [vmem:[%s596 + $0xd9] sm:$0xff]
      %v4040 = vld [vmem:[%s596 + $0xe1] sm:$0xff]
      %v4041 = vld [vmem:[%s596 + $0xf1] sm:$0xff]
      %v4042 = vld [vmem:[%s596 + $0xf9] sm:$0xff]
      %v4043 = vld [vmem:[%s596 + $0x109] sm:$0xff]
      %v4044 = vld [vmem:[%s596 + $0x111] sm:$0xff]
      %v4045 = vld [vmem:[%s596 + $0x121] sm:$0xff]
      %v4046 = vld [vmem:[%s596 + $0x129] sm:$0xff]
      %v4047 = vld [vmem:[%s596 + $0x139] sm:$0xff]
      %v4048 = vld [vmem:[%s596 + $0x141] sm:$0xff]
      %v4049 = vld [vmem:[%s596 + $0x151] sm:$0xff]
      %v4050 = vld [vmem:[%s596 + $0x159] sm:$0xff]
      %v4051 = vld [vmem:[%s596 + $0x169] sm:$0xff]
      %v4052 = vld [vmem:[%s596 + $0x171] sm:$0xff]
      %4085 = vrot.lane.b32.xlu0 %v4021, 56
      %v4086 = vpop.permute.xlu0 %4085
      %4087 = vrot.lane.b32.xlu0 %v4022, 56
      %v4088 = vpop.permute.xlu0 %4087
      %4089 = vrot.lane.b32.xlu0 %v4023, 56
      %v4090 = vpop.permute.xlu0 %4089
      %4091 = vrot.lane.b32.xlu0 %v4024, 56
      %v4092 = vpop.permute.xlu0 %4091
      %4093 = vrot.lane.b32.xlu0 %v4025, 56
      %v4094 = vpop.permute.xlu0 %4093
      %4095 = vrot.lane.b32.xlu0 %v4026, 56
      %v4096 = vpop.permute.xlu0 %4095
      %4097 = vrot.lane.b32.xlu0 %v4027, 56
      %v4098 = vpop.permute.xlu0 %4097
      %4099 = vrot.lane.b32.xlu0 %v4028, 56
      %v4100 = vpop.permute.xlu0 %4099
      %4101 = vrot.lane.b32.xlu0 %v4029, 56
      %v4102 = vpop.permute.xlu0 %4101
      %4103 = vrot.lane.b32.xlu0 %v4030, 56
      %v4104 = vpop.permute.xlu0 %4103
      %4105 = vrot.lane.b32.xlu0 %v4031, 56
      %v4106 = vpop.permute.xlu0 %4105
      %4107 = vrot.lane.b32.xlu0 %v4032, 56
      %v4108 = vpop.permute.xlu0 %4107
      %4109 = vrot.lane.b32.xlu0 %v4033, 56
      %v4110 = vpop.permute.xlu0 %4109
      %4111 = vrot.lane.b32.xlu0 %v4034, 56
      %v4112 = vpop.permute.xlu0 %4111
      %4113 = vrot.lane.b32.xlu0 %v4035, 56
      %v4114 = vpop.permute.xlu0 %4113
      %4115 = vrot.lane.b32.xlu0 %v4036, 56
      %v4116 = vpop.permute.xlu0 %4115
      %4117 = vrot.lane.b32.xlu0 %v4037, 56
      %v4118 = vpop.permute.xlu0 %4117
      %4119 = vrot.lane.b32.xlu0 %v4038, 56
      %v4120 = vpop.permute.xlu0 %4119
      %4121 = vrot.lane.b32.xlu0 %v4039, 56
      %v4122 = vpop.permute.xlu0 %4121
      %4123 = vrot.lane.b32.xlu0 %v4040, 56
      %v4124 = vpop.permute.xlu0 %4123
      %4125 = vrot.lane.b32.xlu0 %v4041, 56
      %v4126 = vpop.permute.xlu0 %4125
      %4127 = vrot.lane.b32.xlu0 %v4042, 56
      %v4128 = vpop.permute.xlu0 %4127
      %4129 = vrot.lane.b32.xlu0 %v4043, 56
      %v4130 = vpop.permute.xlu0 %4129
      %4131 = vrot.lane.b32.xlu0 %v4044, 56
      %v4132 = vpop.permute.xlu0 %4131
      %4133 = vrot.lane.b32.xlu0 %v4045, 56
      %v4134 = vpop.permute.xlu0 %4133
      %4135 = vrot.lane.b32.xlu0 %v4046, 56
      %v4136 = vpop.permute.xlu0 %4135
      %4137 = vrot.lane.b32.xlu0 %v4047, 56
      %v4138 = vpop.permute.xlu0 %4137
      %4139 = vrot.lane.b32.xlu0 %v4048, 56
      %v4140 = vpop.permute.xlu0 %4139
      %4141 = vrot.lane.b32.xlu0 %v4049, 56
      %v4142 = vpop.permute.xlu0 %4141
      %4143 = vrot.lane.b32.xlu0 %v4050, 56
      %v4144 = vpop.permute.xlu0 %4143
      %4145 = vrot.lane.b32.xlu0 %v4051, 56
      %v4146 = vpop.permute.xlu0 %4145
      %4147 = vrot.lane.b32.xlu0 %v4052, 56
      %v4148 = vpop.permute.xlu0 %4147
      %4181 = vst.msk [vmem:[#allocation3] sm:$0xff] %vm2037, %v4086
      %4182 = vst.msk [vmem:[#allocation3 + $0x8] sm:$0xff] %vm2037, %v4088
      %4183 = vst.msk [vmem:[#allocation3 + $0x10] sm:$0xff] %vm2037, %v4090
      %4184 = vst.msk [vmem:[#allocation3 + $0x18] sm:$0xff] %vm2037, %v4092
      %4185 = vst.msk [vmem:[#allocation3 + $0x20] sm:$0xff] %vm2037, %v4094
      %4186 = vst.msk [vmem:[#allocation3 + $0x28] sm:$0xff] %vm2037, %v4096
      %4187 = vst.msk [vmem:[#allocation3 + $0x30] sm:$0xff] %vm2037, %v4098
      %4188 = vst.msk [vmem:[#allocation3 + $0x38] sm:$0xff] %vm2037, %v4100
      %4189 = vst.msk [vmem:[#allocation3 + $0x40] sm:$0xff] %vm2037, %v4102
      %4190 = vst.msk [vmem:[#allocation3 + $0x48] sm:$0xff] %vm2037, %v4104
      %4191 = vst.msk [vmem:[#allocation3 + $0x50] sm:$0xff] %vm2037, %v4106
      %4192 = vst.msk [vmem:[#allocation3 + $0x58] sm:$0xff] %vm2037, %v4108
      %4193 = vst.msk [vmem:[#allocation3 + $0x60] sm:$0xff] %vm2037, %v4110
      %4194 = vst.msk [vmem:[#allocation3 + $0x68] sm:$0xff] %vm2037, %v4112
      %4195 = vst.msk [vmem:[#allocation3 + $0x70] sm:$0xff] %vm2037, %v4114
      %4196 = vst.msk [vmem:[#allocation3 + $0x78] sm:$0xff] %vm2037, %v4116
      %4197 = vst.msk [vmem:[#allocation3 + $0x80] sm:$0xff] %vm2037, %v4118
      %4198 = vst.msk [vmem:[#allocation3 + $0x88] sm:$0xff] %vm2037, %v4120
      %4199 = vst.msk [vmem:[#allocation3 + $0x90] sm:$0xff] %vm2037, %v4122
      %4200 = vst.msk [vmem:[#allocation3 + $0x98] sm:$0xff] %vm2037, %v4124
      %4201 = vst.msk [vmem:[#allocation3 + $0xa0] sm:$0xff] %vm2037, %v4126
      %4202 = vst.msk [vmem:[#allocation3 + $0xa8] sm:$0xff] %vm2037, %v4128
      %4203 = vst.msk [vmem:[#allocation3 + $0xb0] sm:$0xff] %vm2037, %v4130
      %4204 = vst.msk [vmem:[#allocation3 + $0xb8] sm:$0xff] %vm2037, %v4132
      %4205 = vst.msk [vmem:[#allocation3 + $0xc0] sm:$0xff] %vm2037, %v4134
      %4206 = vst.msk [vmem:[#allocation3 + $0xc8] sm:$0xff] %vm2037, %v4136
      %4207 = vst.msk [vmem:[#allocation3 + $0xd0] sm:$0xff] %vm2037, %v4138
      %4208 = vst.msk [vmem:[#allocation3 + $0xd8] sm:$0xff] %vm2037, %v4140
      %4209 = vst.msk [vmem:[#allocation3 + $0xe0] sm:$0xff] %vm2037, %v4142
      %4210 = vst.msk [vmem:[#allocation3 + $0xe8] sm:$0xff] %vm2037, %v4144
      %4211 = vst.msk [vmem:[#allocation3 + $0xf0] sm:$0xff] %vm2037, %v4146
      %4212 = vst.msk [vmem:[#allocation3 + $0xf8] sm:$0xff] %vm2037, %v4148
      %v4213 = vld [vmem:[%s596 + $0x2] sm:$0xff]
      %v4214 = vld [vmem:[%s596 + $0xa] sm:$0xff]
      %v4215 = vld [vmem:[%s596 + $0x1a] sm:$0xff]
      %v4216 = vld [vmem:[%s596 + $0x22] sm:$0xff]
      %v4217 = vld [vmem:[%s596 + $0x32] sm:$0xff]
      %v4218 = vld [vmem:[%s596 + $0x3a] sm:$0xff]
      %v4219 = vld [vmem:[%s596 + $0x4a] sm:$0xff]
      %v4220 = vld [vmem:[%s596 + $0x52] sm:$0xff]
      %v4221 = vld [vmem:[%s596 + $0x62] sm:$0xff]
      %v4222 = vld [vmem:[%s596 + $0x6a] sm:$0xff]
      %v4223 = vld [vmem:[%s596 + $0x7a] sm:$0xff]
      %v4224 = vld [vmem:[%s596 + $0x82] sm:$0xff]
      %v4225 = vld [vmem:[%s596 + $0x92] sm:$0xff]
      %v4226 = vld [vmem:[%s596 + $0x9a] sm:$0xff]
      %v4227 = vld [vmem:[%s596 + $0xaa] sm:$0xff]
      %v4228 = vld [vmem:[%s596 + $0xb2] sm:$0xff]
      %v4229 = vld [vmem:[%s596 + $0xc2] sm:$0xff]
      %v4230 = vld [vmem:[%s596 + $0xca] sm:$0xff]
      %v4231 = vld [vmem:[%s596 + $0xda] sm:$0xff]
      %v4232 = vld [vmem:[%s596 + $0xe2] sm:$0xff]
      %v4233 = vld [vmem:[%s596 + $0xf2] sm:$0xff]
      %v4234 = vld [vmem:[%s596 + $0xfa] sm:$0xff]
      %v4235 = vld [vmem:[%s596 + $0x10a] sm:$0xff]
      %v4236 = vld [vmem:[%s596 + $0x112] sm:$0xff]
      %v4237 = vld [vmem:[%s596 + $0x122] sm:$0xff]
      %v4238 = vld [vmem:[%s596 + $0x12a] sm:$0xff]
      %v4239 = vld [vmem:[%s596 + $0x13a] sm:$0xff]
      %v4240 = vld [vmem:[%s596 + $0x142] sm:$0xff]
      %v4241 = vld [vmem:[%s596 + $0x152] sm:$0xff]
      %v4242 = vld [vmem:[%s596 + $0x15a] sm:$0xff]
      %v4243 = vld [vmem:[%s596 + $0x16a] sm:$0xff]
      %v4244 = vld [vmem:[%s596 + $0x172] sm:$0xff]
      %4277 = vrot.lane.b32.xlu0 %v4213, 64
      %v4278 = vpop.permute.xlu0 %4277
      %4279 = vrot.lane.b32.xlu0 %v4214, 64
      %v4280 = vpop.permute.xlu0 %4279
      %4281 = vrot.lane.b32.xlu0 %v4215, 64
      %v4282 = vpop.permute.xlu0 %4281
      %4283 = vrot.lane.b32.xlu0 %v4216, 64
      %v4284 = vpop.permute.xlu0 %4283
      %4285 = vrot.lane.b32.xlu0 %v4217, 64
      %v4286 = vpop.permute.xlu0 %4285
      %4287 = vrot.lane.b32.xlu0 %v4218, 64
      %v4288 = vpop.permute.xlu0 %4287
      %4289 = vrot.lane.b32.xlu0 %v4219, 64
      %v4290 = vpop.permute.xlu0 %4289
      %4291 = vrot.lane.b32.xlu0 %v4220, 64
      %v4292 = vpop.permute.xlu0 %4291
      %4293 = vrot.lane.b32.xlu0 %v4221, 64
      %v4294 = vpop.permute.xlu0 %4293
      %4295 = vrot.lane.b32.xlu0 %v4222, 64
      %v4296 = vpop.permute.xlu0 %4295
      %4297 = vrot.lane.b32.xlu0 %v4223, 64
      %v4298 = vpop.permute.xlu0 %4297
      %4299 = vrot.lane.b32.xlu0 %v4224, 64
      %v4300 = vpop.permute.xlu0 %4299
      %4301 = vrot.lane.b32.xlu0 %v4225, 64
      %v4302 = vpop.permute.xlu0 %4301
      %4303 = vrot.lane.b32.xlu0 %v4226, 64
      %v4304 = vpop.permute.xlu0 %4303
      %4305 = vrot.lane.b32.xlu0 %v4227, 64
      %v4306 = vpop.permute.xlu0 %4305
      %4307 = vrot.lane.b32.xlu0 %v4228, 64
      %v4308 = vpop.permute.xlu0 %4307
      %4309 = vrot.lane.b32.xlu0 %v4229, 64
      %v4310 = vpop.permute.xlu0 %4309
      %4311 = vrot.lane.b32.xlu0 %v4230, 64
      %v4312 = vpop.permute.xlu0 %4311
      %4313 = vrot.lane.b32.xlu0 %v4231, 64
      %v4314 = vpop.permute.xlu0 %4313
      %4315 = vrot.lane.b32.xlu0 %v4232, 64
      %v4316 = vpop.permute.xlu0 %4315
      %4317 = vrot.lane.b32.xlu0 %v4233, 64
      %v4318 = vpop.permute.xlu0 %4317
      %4319 = vrot.lane.b32.xlu0 %v4234, 64
      %v4320 = vpop.permute.xlu0 %4319
      %4321 = vrot.lane.b32.xlu0 %v4235, 64
      %v4322 = vpop.permute.xlu0 %4321
      %4323 = vrot.lane.b32.xlu0 %v4236, 64
      %v4324 = vpop.permute.xlu0 %4323
      %4325 = vrot.lane.b32.xlu0 %v4237, 64
      %v4326 = vpop.permute.xlu0 %4325
      %4327 = vrot.lane.b32.xlu0 %v4238, 64
      %v4328 = vpop.permute.xlu0 %4327
      %4329 = vrot.lane.b32.xlu0 %v4239, 64
      %v4330 = vpop.permute.xlu0 %4329
      %4331 = vrot.lane.b32.xlu0 %v4240, 64
      %v4332 = vpop.permute.xlu0 %4331
      %4333 = vrot.lane.b32.xlu0 %v4241, 64
      %v4334 = vpop.permute.xlu0 %4333
      %4335 = vrot.lane.b32.xlu0 %v4242, 64
      %v4336 = vpop.permute.xlu0 %4335
      %4337 = vrot.lane.b32.xlu0 %v4243, 64
      %v4338 = vpop.permute.xlu0 %4337
      %4339 = vrot.lane.b32.xlu0 %v4244, 64
      %v4340 = vpop.permute.xlu0 %4339
      %4373 = vst.msk [vmem:[#allocation3] sm:$0xff] %vm2230, %v4278
      %4374 = vst.msk [vmem:[#allocation3 + $0x8] sm:$0xff] %vm2230, %v4280
      %4375 = vst.msk [vmem:[#allocation3 + $0x10] sm:$0xff] %vm2230, %v4282
      %4376 = vst.msk [vmem:[#allocation3 + $0x18] sm:$0xff] %vm2230, %v4284
      %4377 = vst.msk [vmem:[#allocation3 + $0x20] sm:$0xff] %vm2230, %v4286
      %4378 = vst.msk [vmem:[#allocation3 + $0x28] sm:$0xff] %vm2230, %v4288
      %4379 = vst.msk [vmem:[#allocation3 + $0x30] sm:$0xff] %vm2230, %v4290
      %4380 = vst.msk [vmem:[#allocation3 + $0x38] sm:$0xff] %vm2230, %v4292
      %4381 = vst.msk [vmem:[#allocation3 + $0x40] sm:$0xff] %vm2230, %v4294
      %4382 = vst.msk [vmem:[#allocation3 + $0x48] sm:$0xff] %vm2230, %v4296
      %4383 = vst.msk [vmem:[#allocation3 + $0x50] sm:$0xff] %vm2230, %v4298
      %4384 = vst.msk [vmem:[#allocation3 + $0x58] sm:$0xff] %vm2230, %v4300
      %4385 = vst.msk [vmem:[#allocation3 + $0x60] sm:$0xff] %vm2230, %v4302
      %4386 = vst.msk [vmem:[#allocation3 + $0x68] sm:$0xff] %vm2230, %v4304
      %4387 = vst.msk [vmem:[#allocation3 + $0x70] sm:$0xff] %vm2230, %v4306
      %4388 = vst.msk [vmem:[#allocation3 + $0x78] sm:$0xff] %vm2230, %v4308
      %4389 = vst.msk [vmem:[#allocation3 + $0x80] sm:$0xff] %vm2230, %v4310
      %4390 = vst.msk [vmem:[#allocation3 + $0x88] sm:$0xff] %vm2230, %v4312
      %4391 = vst.msk [vmem:[#allocation3 + $0x90] sm:$0xff] %vm2230, %v4314
      %4392 = vst.msk [vmem:[#allocation3 + $0x98] sm:$0xff] %vm2230, %v4316
      %4393 = vst.msk [vmem:[#allocation3 + $0xa0] sm:$0xff] %vm2230, %v4318
      %4394 = vst.msk [vmem:[#allocation3 + $0xa8] sm:$0xff] %vm2230, %v4320
      %4395 = vst.msk [vmem:[#allocation3 + $0xb0] sm:$0xff] %vm2230, %v4322
      %4396 = vst.msk [vmem:[#allocation3 + $0xb8] sm:$0xff] %vm2230, %v4324
      %4397 = vst.msk [vmem:[#allocation3 + $0xc0] sm:$0xff] %vm2230, %v4326
      %4398 = vst.msk [vmem:[#allocation3 + $0xc8] sm:$0xff] %vm2230, %v4328
      %4399 = vst.msk [vmem:[#allocation3 + $0xd0] sm:$0xff] %vm2230, %v4330
      %4400 = vst.msk [vmem:[#allocation3 + $0xd8] sm:$0xff] %vm2230, %v4332
      %4401 = vst.msk [vmem:[#allocation3 + $0xe0] sm:$0xff] %vm2230, %v4334
      %4402 = vst.msk [vmem:[#allocation3 + $0xe8] sm:$0xff] %vm2230, %v4336
      %4403 = vst.msk [vmem:[#allocation3 + $0xf0] sm:$0xff] %vm2230, %v4338
      %4404 = vst.msk [vmem:[#allocation3 + $0xf8] sm:$0xff] %vm2230, %v4340
      %v4405 = vld [vmem:[#allocation3] sm:$0xff]
      %v4406 = vld [vmem:[#allocation3 + $0x8] sm:$0xff]
      %v4407 = vld [vmem:[#allocation3 + $0x10] sm:$0xff]
      %v4408 = vld [vmem:[#allocation3 + $0x18] sm:$0xff]
      %v4409 = vld [vmem:[#allocation3 + $0x20] sm:$0xff]
      %v4410 = vld [vmem:[#allocation3 + $0x28] sm:$0xff]
      %v4411 = vld [vmem:[#allocation3 + $0x30] sm:$0xff]
      %v4412 = vld [vmem:[#allocation3 + $0x38] sm:$0xff]
      %v4413 = vld [vmem:[#allocation3 + $0x40] sm:$0xff]
      %v4414 = vld [vmem:[#allocation3 + $0x48] sm:$0xff]
      %v4415 = vld [vmem:[#allocation3 + $0x50] sm:$0xff]
      %v4416 = vld [vmem:[#allocation3 + $0x58] sm:$0xff]
      %v4417 = vld [vmem:[#allocation3 + $0x60] sm:$0xff]
      %v4418 = vld [vmem:[#allocation3 + $0x68] sm:$0xff]
      %v4419 = vld [vmem:[#allocation3 + $0x70] sm:$0xff]
      %v4420 = vld [vmem:[#allocation3 + $0x78] sm:$0xff]
      %v4421 = vld [vmem:[#allocation3 + $0x80] sm:$0xff]
      %v4422 = vld [vmem:[#allocation3 + $0x88] sm:$0xff]
      %v4423 = vld [vmem:[#allocation3 + $0x90] sm:$0xff]
      %v4424 = vld [vmem:[#allocation3 + $0x98] sm:$0xff]
      %v4425 = vld [vmem:[#allocation3 + $0xa0] sm:$0xff]
      %v4426 = vld [vmem:[#allocation3 + $0xa8] sm:$0xff]
      %v4427 = vld [vmem:[#allocation3 + $0xb0] sm:$0xff]
      %v4428 = vld [vmem:[#allocation3 + $0xb8] sm:$0xff]
      %v4429 = vld [vmem:[#allocation3 + $0xc0] sm:$0xff]
      %v4430 = vld [vmem:[#allocation3 + $0xc8] sm:$0xff]
      %v4431 = vld [vmem:[#allocation3 + $0xd0] sm:$0xff]
      %v4432 = vld [vmem:[#allocation3 + $0xd8] sm:$0xff]
      %v4433 = vld [vmem:[#allocation3 + $0xe0] sm:$0xff]
      %v4434 = vld [vmem:[#allocation3 + $0xe8] sm:$0xff]
      %v4435 = vld [vmem:[#allocation3 + $0xf0] sm:$0xff]
      %v4436 = vld [vmem:[#allocation3 + $0xf8] sm:$0xff]
      %v4438 = vlaneseq
      %v4439 = vshrl.u32 %v4438, 7
      %v4440 = vsub.s32 0, %v4439
      %v4441 = vrot.slane %v2804, %v4440
      %v4444 = vsel %vm2301, %v4405, 0
      %v4447 = vsel %vm2301, %v4406, 0
      %v4450 = vsel %vm2301, %v4407, 0
      %v4453 = vsel %vm2301, %v4408, 0
      %v4456 = vsel %vm2301, %v4409, 0
      %v4459 = vsel %vm2301, %v4410, 0
      %v4462 = vsel %vm2301, %v4411, 0
      %v4465 = vsel %vm2301, %v4412, 0
      %v4468 = vsel %vm2301, %v4413, 0
      %v4471 = vsel %vm2301, %v4414, 0
      %v4474 = vsel %vm2301, %v4415, 0
      %v4477 = vsel %vm2301, %v4416, 0
      %v4480 = vsel %vm2301, %v4417, 0
      %v4483 = vsel %vm2301, %v4418, 0
      %v4486 = vsel %vm2301, %v4419, 0
      %v4489 = vsel %vm2301, %v4420, 0
      %v4492 = vsel %vm2301, %v4421, 0
      %v4495 = vsel %vm2301, %v4422, 0
      %v4498 = vsel %vm2301, %v4423, 0
      %v4501 = vsel %vm2301, %v4424, 0
      %v4504 = vsel %vm2301, %v4425, 0
      %v4507 = vsel %vm2301, %v4426, 0
      %v4510 = vsel %vm2301, %v4427, 0
      %v4513 = vsel %vm2301, %v4428, 0
      %v4516 = vsel %vm2301, %v4429, 0
      %v4519 = vsel %vm2301, %v4430, 0
      %v4522 = vsel %vm2301, %v4431, 0
      %v4525 = vsel %vm2301, %v4432, 0
      %v4528 = vsel %vm2301, %v4433, 0
      %v4531 = vsel %vm2301, %v4434, 0
      %v4534 = vsel %vm2301, %v4435, 0
      %v4537 = vsel %vm2301, %v4436, 0
      %4539 = vmatprep.subr.mxu0 0.0
      %4540 = vmatpush1.msra.mxu0 0.0
      %4541 = vmatprep.subr.mxu0 0.0
      %4542 = vmatpush1.msra.mxu0 0.0
      %4543 = vmatprep.subr.mxu0 0.0
      %4544 = vmatpush1.msra.mxu0 0.0
      %4545 = vmatprep.subr.mxu0 0.0
      %4546 = vmatpush1.msra.mxu0 0.0
      %4547 = vmatprep.subr.mxu0 0.0
      %4548 = vmatpush1.msra.mxu0 0.0
      %4549 = vmatprep.subr.mxu0 0.0
      %4550 = vmatpush1.msra.mxu0 0.0
      %4551 = vmatprep.subr.mxu0 0.0
      %4552 = vmatpush1.msra.mxu0 0.0
      %4553 = vmatprep.subr.mxu0 0.0
      %4554 = vmatpush1.msra.mxu0 %v2803
      %4555 = vmatprep.subr.mxu0 0.0
      %4556 = vmatpush1.msra.mxu0 %v2802
      %4557 = vmatprep.subr.mxu0 0.0
      %4558 = vmatpush1.msra.mxu0 %v2801
      %4559 = vmatprep.subr.mxu0 0.0
      %4560 = vmatpush1.msra.mxu0 %v2800
      %4561 = vmatprep.subr.mxu0 0.0
      %4562 = vmatpush1.msra.mxu0 %v2799
      %4563 = vmatprep.subr.mxu0 0.0
      %4564 = vmatpush1.msra.mxu0 %v2798
      %4565 = vmatprep.subr.mxu0 0.0
      %4566 = vmatpush1.msra.mxu0 %v2797
      %4567 = vmatprep.subr.mxu0 0.0
      %4568 = vmatpush1.msra.mxu0 %v2796
      %4569 = vmatprep.subr.mxu0 0.0
      %4570 = vmatpush1.msra.mxu0 %v2795
      %4571 = vmatprep.subr.mxu0 0.0
      %4572 = vmatpush2.msra.mxu0 0.0
      %4573 = vmatprep.subr.mxu0 0.0
      %4574 = vmatpush2.msra.mxu0 0.0
      %4575 = vmatprep.subr.mxu0 0.0
      %4576 = vmatpush2.msra.mxu0 0.0
      %4577 = vmatprep.subr.mxu0 0.0
      %4578 = vmatpush2.msra.mxu0 0.0
      %4579 = vmatprep.subr.mxu0 0.0
      %4580 = vmatpush2.msra.mxu0 0.0
      %4581 = vmatprep.subr.mxu0 0.0
      %4582 = vmatpush2.msra.mxu0 0.0
      %4583 = vmatprep.subr.mxu0 0.0
      %4584 = vmatpush2.msra.mxu0 0.0
      %4585 = vmatprep.subr.mxu0 0.0
      %4586 = vmatpush2.msra.mxu0 0.0
      %4587 = vmatprep.subr.mxu0 0.0
      %4588 = vmatpush2.msra.mxu0 0.0
      %4589 = vmatprep.subr.mxu0 0.0
      %4590 = vmatpush2.msra.mxu0 0.0
      %4591 = vmatprep.subr.mxu0 0.0
      %4592 = vmatpush2.msra.mxu0 0.0
      %4593 = vmatprep.subr.mxu0 0.0
      %4594 = vmatpush2.msra.mxu0 0.0
      %4595 = vmatprep.subr.mxu0 0.0
      %4596 = vmatpush2.msra.mxu0 0.0
      %4597 = vmatprep.subr.mxu0 0.0
      %4598 = vmatpush2.msra.mxu0 0.0
      %4599 = vmatprep.subr.mxu0 0.0
      %4600 = vmatpush2.msra.mxu0 0.0
      %4601 = vmatprep.subr.mxu0 0.0
      %4602 = vmatpush2.msra.mxu0 0.0
      %4603 = vmatprep.mubr.f32.mxu0 0.0
      %4604 = vmatmul.mubr.f32.gmra.mxu0 %v4444
      %v4605 = vpop.f32.mrf.mxu0
      %v4606 = vadd.f32 %v4441, %v4605
      %v4607 = vpop.f32.mrf.mxu0
      %4608 = vmatprep.mubr.f32.mxu0 0.0
      %4609 = vmatmul.mubr.f32.gmra.mxu0 %v4447
      %v4610 = vpop.f32.mrf.mxu0
      %v4611 = vadd.f32 %v4441, %v4610
      %v4612 = vpop.f32.mrf.mxu0
      %4613 = vmatprep.mubr.f32.mxu0 0.0
      %4614 = vmatmul.mubr.f32.gmra.mxu0 %v4450
      %v4615 = vpop.f32.mrf.mxu0
      %v4616 = vadd.f32 %v4441, %v4615
      %v4617 = vpop.f32.mrf.mxu0
      %4618 = vmatprep.mubr.f32.mxu0 0.0
      %4619 = vmatmul.mubr.f32.gmra.mxu0 %v4453
      %v4620 = vpop.f32.mrf.mxu0
      %v4621 = vadd.f32 %v4441, %v4620
      %v4622 = vpop.f32.mrf.mxu0
      %4623 = vmatprep.mubr.f32.mxu0 0.0
      %4624 = vmatmul.mubr.f32.gmra.mxu0 %v4456
      %v4625 = vpop.f32.mrf.mxu0
      %v4626 = vadd.f32 %v4441, %v4625
      %v4627 = vpop.f32.mrf.mxu0
      %4628 = vmatprep.mubr.f32.mxu0 0.0
      %4629 = vmatmul.mubr.f32.gmra.mxu0 %v4459
      %v4630 = vpop.f32.mrf.mxu0
      %v4631 = vadd.f32 %v4441, %v4630
      %v4632 = vpop.f32.mrf.mxu0
      %4633 = vmatprep.mubr.f32.mxu0 0.0
      %4634 = vmatmul.mubr.f32.gmra.mxu0 %v4462
      %v4635 = vpop.f32.mrf.mxu0
      %v4636 = vadd.f32 %v4441, %v4635
      %v4637 = vpop.f32.mrf.mxu0
      %4638 = vmatprep.mubr.f32.mxu0 0.0
      %4639 = vmatmul.mubr.f32.gmra.mxu0 %v4465
      %v4640 = vpop.f32.mrf.mxu0
      %v4641 = vadd.f32 %v4441, %v4640
      %v4642 = vpop.f32.mrf.mxu0
      %4643 = vmatprep.mubr.f32.mxu0 0.0
      %4644 = vmatmul.mubr.f32.gmra.mxu0 %v4468
      %v4645 = vpop.f32.mrf.mxu0
      %v4646 = vadd.f32 %v4441, %v4645
      %v4647 = vpop.f32.mrf.mxu0
      %4648 = vmatprep.mubr.f32.mxu0 0.0
      %4649 = vmatmul.mubr.f32.gmra.mxu0 %v4471
      %v4650 = vpop.f32.mrf.mxu0
      %v4651 = vadd.f32 %v4441, %v4650
      %v4652 = vpop.f32.mrf.mxu0
      %4653 = vmatprep.mubr.f32.mxu0 0.0
      %4654 = vmatmul.mubr.f32.gmra.mxu0 %v4474
      %v4655 = vpop.f32.mrf.mxu0
      %v4656 = vadd.f32 %v4441, %v4655
      %v4657 = vpop.f32.mrf.mxu0
      %4658 = vmatprep.mubr.f32.mxu0 0.0
      %4659 = vmatmul.mubr.f32.gmra.mxu0 %v4477
      %v4660 = vpop.f32.mrf.mxu0
      %v4661 = vadd.f32 %v4441, %v4660
      %v4662 = vpop.f32.mrf.mxu0
      %4663 = vmatprep.mubr.f32.mxu0 0.0
      %4664 = vmatmul.mubr.f32.gmra.mxu0 %v4480
      %v4665 = vpop.f32.mrf.mxu0
      %v4666 = vadd.f32 %v4441, %v4665
      %v4667 = vpop.f32.mrf.mxu0
      %4668 = vmatprep.mubr.f32.mxu0 0.0
      %4669 = vmatmul.mubr.f32.gmra.mxu0 %v4483
      %v4670 = vpop.f32.mrf.mxu0
      %v4671 = vadd.f32 %v4441, %v4670
      %v4672 = vpop.f32.mrf.mxu0
      %4673 = vmatprep.mubr.f32.mxu0 0.0
      %4674 = vmatmul.mubr.f32.gmra.mxu0 %v4486
      %v4675 = vpop.f32.mrf.mxu0
      %v4676 = vadd.f32 %v4441, %v4675
      %v4677 = vpop.f32.mrf.mxu0
      %4678 = vmatprep.mubr.f32.mxu0 0.0
      %4679 = vmatmul.mubr.f32.gmra.mxu0 %v4489
      %v4680 = vpop.f32.mrf.mxu0
      %v4681 = vadd.f32 %v4441, %v4680
      %v4682 = vpop.f32.mrf.mxu0
      %4683 = vmatprep.mubr.f32.mxu0 0.0
      %4684 = vmatmul.mubr.f32.gmra.mxu0 %v4492
      %v4685 = vpop.f32.mrf.mxu0
      %v4686 = vadd.f32 %v4441, %v4685
      %v4687 = vpop.f32.mrf.mxu0
      %4688 = vmatprep.mubr.f32.mxu0 0.0
      %4689 = vmatmul.mubr.f32.gmra.mxu0 %v4495
      %v4690 = vpop.f32.mrf.mxu0
      %v4691 = vadd.f32 %v4441, %v4690
      %v4692 = vpop.f32.mrf.mxu0
      %4693 = vmatprep.mubr.f32.mxu0 0.0
      %4694 = vmatmul.mubr.f32.gmra.mxu0 %v4498
      %v4695 = vpop.f32.mrf.mxu0
      %v4696 = vadd.f32 %v4441, %v4695
      %v4697 = vpop.f32.mrf.mxu0
      %4698 = vmatprep.mubr.f32.mxu0 0.0
      %4699 = vmatmul.mubr.f32.gmra.mxu0 %v4501
      %v4700 = vpop.f32.mrf.mxu0
      %v4701 = vadd.f32 %v4441, %v4700
      %v4702 = vpop.f32.mrf.mxu0
      %4703 = vmatprep.mubr.f32.mxu0 0.0
      %4704 = vmatmul.mubr.f32.gmra.mxu0 %v4504
      %v4705 = vpop.f32.mrf.mxu0
      %v4706 = vadd.f32 %v4441, %v4705
      %v4707 = vpop.f32.mrf.mxu0
      %4708 = vmatprep.mubr.f32.mxu0 0.0
      %4709 = vmatmul.mubr.f32.gmra.mxu0 %v4507
      %v4710 = vpop.f32.mrf.mxu0
      %v4711 = vadd.f32 %v4441, %v4710
      %v4712 = vpop.f32.mrf.mxu0
      %4713 = vmatprep.mubr.f32.mxu0 0.0
      %4714 = vmatmul.mubr.f32.gmra.mxu0 %v4510
      %v4715 = vpop.f32.mrf.mxu0
      %v4716 = vadd.f32 %v4441, %v4715
      %v4717 = vpop.f32.mrf.mxu0
      %4718 = vmatprep.mubr.f32.mxu0 0.0
      %4719 = vmatmul.mubr.f32.gmra.mxu0 %v4513
      %v4720 = vpop.f32.mrf.mxu0
      %v4721 = vadd.f32 %v4441, %v4720
      %v4722 = vpop.f32.mrf.mxu0
      %4723 = vmatprep.mubr.f32.mxu0 0.0
      %4724 = vmatmul.mubr.f32.gmra.mxu0 %v4516
      %v4725 = vpop.f32.mrf.mxu0
      %v4726 = vadd.f32 %v4441, %v4725
      %v4727 = vpop.f32.mrf.mxu0
      %4728 = vmatprep.mubr.f32.mxu0 0.0
      %4729 = vmatmul.mubr.f32.gmra.mxu0 %v4519
      %v4730 = vpop.f32.mrf.mxu0
      %v4731 = vadd.f32 %v4441, %v4730
      %v4732 = vpop.f32.mrf.mxu0
      %4733 = vmatprep.mubr.f32.mxu0 0.0
      %4734 = vmatmul.mubr.f32.gmra.mxu0 %v4522
      %v4735 = vpop.f32.mrf.mxu0
      %v4736 = vadd.f32 %v4441, %v4735
      %v4737 = vpop.f32.mrf.mxu0
      %4738 = vmatprep.mubr.f32.mxu0 0.0
      %4739 = vmatmul.mubr.f32.gmra.mxu0 %v4525
      %v4740 = vpop.f32.mrf.mxu0
      %v4741 = vadd.f32 %v4441, %v4740
      %v4742 = vpop.f32.mrf.mxu0
      %4743 = vmatprep.mubr.f32.mxu0 0.0
      %4744 = vmatmul.mubr.f32.gmra.mxu0 %v4528
      %v4745 = vpop.f32.mrf.mxu0
      %v4746 = vadd.f32 %v4441, %v4745
      %v4747 = vpop.f32.mrf.mxu0
      %4748 = vmatprep.mubr.f32.mxu0 0.0
      %4749 = vmatmul.mubr.f32.gmra.mxu0 %v4531
      %v4750 = vpop.f32.mrf.mxu0
      %v4751 = vadd.f32 %v4441, %v4750
      %v4752 = vpop.f32.mrf.mxu0
      %4753 = vmatprep.mubr.f32.mxu0 0.0
      %4754 = vmatmul.mubr.f32.gmra.mxu0 %v4534
      %v4755 = vpop.f32.mrf.mxu0
      %v4756 = vadd.f32 %v4441, %v4755
      %v4757 = vpop.f32.mrf.mxu0
      %4758 = vmatprep.mubr.f32.mxu0 0.0
      %4759 = vmatmul.mubr.f32.gmra.mxu0 %v4537
      %v4760 = vpop.f32.mrf.mxu0
      %v4761 = vadd.f32 %v4441, %v4760
      %v4762 = vpop.f32.mrf.mxu0
      %4763 = vdwg.mxu0
      %v4764 = vmax.f32 %v4606, 0.0
      %v4765 = vmax.f32 %v4611, 0.0
      %v4766 = vmax.f32 %v4616, 0.0
      %v4767 = vmax.f32 %v4621, 0.0
      %v4768 = vmax.f32 %v4626, 0.0
      %v4769 = vmax.f32 %v4631, 0.0
      %v4770 = vmax.f32 %v4636, 0.0
      %v4771 = vmax.f32 %v4641, 0.0
      %v4772 = vmax.f32 %v4646, 0.0
      %v4773 = vmax.f32 %v4651, 0.0
      %v4774 = vmax.f32 %v4656, 0.0
      %v4775 = vmax.f32 %v4661, 0.0
      %v4776 = vmax.f32 %v4666, 0.0
      %v4777 = vmax.f32 %v4671, 0.0
      %v4778 = vmax.f32 %v4676, 0.0
      %v4779 = vmax.f32 %v4681, 0.0
      %v4780 = vmax.f32 %v4686, 0.0
      %v4781 = vmax.f32 %v4691, 0.0
      %v4782 = vmax.f32 %v4696, 0.0
      %v4783 = vmax.f32 %v4701, 0.0
      %v4784 = vmax.f32 %v4706, 0.0
      %v4785 = vmax.f32 %v4711, 0.0
      %v4786 = vmax.f32 %v4716, 0.0
      %v4787 = vmax.f32 %v4721, 0.0
      %v4788 = vmax.f32 %v4726, 0.0
      %v4789 = vmax.f32 %v4731, 0.0
      %v4790 = vmax.f32 %v4736, 0.0
      %v4791 = vmax.f32 %v4741, 0.0
      %v4792 = vmax.f32 %v4746, 0.0
      %v4793 = vmax.f32 %v4751, 0.0
      %v4794 = vmax.f32 %v4756, 0.0
      %v4795 = vmax.f32 %v4761, 0.0
      %4796 = vst.msk [vmem:[%s271] sm:$0xff] %vm305, %v4764
      %4797 = vst.msk [vmem:[%s271 + $0x8] sm:$0xff] %vm305, %v4765
      %4798 = vst.msk [vmem:[%s271 + $0x10] sm:$0xff] %vm305, %v4766
      %4799 = vst.msk [vmem:[%s271 + $0x18] sm:$0xff] %vm305, %v4767
      %4800 = vst.msk [vmem:[%s271 + $0x20] sm:$0xff] %vm305, %v4768
      %4801 = vst.msk [vmem:[%s271 + $0x28] sm:$0xff] %vm305, %v4769
      %4802 = vst.msk [vmem:[%s271 + $0x30] sm:$0xff] %vm305, %v4770
      %4803 = vst.msk [vmem:[%s271 + $0x38] sm:$0xff] %vm305, %v4771
      %4804 = vst.msk [vmem:[%s271 + $0x40] sm:$0xff] %vm305, %v4772
      %4805 = vst.msk [vmem:[%s271 + $0x48] sm:$0xff] %vm305, %v4773
      %4806 = vst.msk [vmem:[%s271 + $0x50] sm:$0xff] %vm305, %v4774
      %4807 = vst.msk [vmem:[%s271 + $0x58] sm:$0xff] %vm305, %v4775
      %4808 = vst.msk [vmem:[%s271 + $0x60] sm:$0xff] %vm305, %v4776
      %4809 = vst.msk [vmem:[%s271 + $0x68] sm:$0xff] %vm305, %v4777
      %4810 = vst.msk [vmem:[%s271 + $0x70] sm:$0xff] %vm305, %v4778
      %4811 = vst.msk [vmem:[%s271 + $0x78] sm:$0xff] %vm305, %v4779
      %4812 = vst.msk [vmem:[%s271 + $0x80] sm:$0xff] %vm305, %v4780
      %4813 = vst.msk [vmem:[%s271 + $0x88] sm:$0xff] %vm305, %v4781
      %4814 = vst.msk [vmem:[%s271 + $0x90] sm:$0xff] %vm305, %v4782
      %4815 = vst.msk [vmem:[%s271 + $0x98] sm:$0xff] %vm305, %v4783
      %4816 = vst.msk [vmem:[%s271 + $0xa0] sm:$0xff] %vm305, %v4784
      %4817 = vst.msk [vmem:[%s271 + $0xa8] sm:$0xff] %vm305, %v4785
      %4818 = vst.msk [vmem:[%s271 + $0xb0] sm:$0xff] %vm305, %v4786
      %4819 = vst.msk [vmem:[%s271 + $0xb8] sm:$0xff] %vm305, %v4787
      %4820 = vst.msk [vmem:[%s271 + $0xc0] sm:$0xff] %vm305, %v4788
      %4821 = vst.msk [vmem:[%s271 + $0xc8] sm:$0xff] %vm305, %v4789
      %4822 = vst.msk [vmem:[%s271 + $0xd0] sm:$0xff] %vm305, %v4790
      %4823 = vst.msk [vmem:[%s271 + $0xd8] sm:$0xff] %vm305, %v4791
      %4824 = vst.msk [vmem:[%s271 + $0xe0] sm:$0xff] %vm305, %v4792
      %4825 = vst.msk [vmem:[%s271 + $0xe8] sm:$0xff] %vm305, %v4793
      %4826 = vst.msk [vmem:[%s271 + $0xf0] sm:$0xff] %vm305, %v4794
      %4827 = vst.msk [vmem:[%s271 + $0xf8] sm:$0xff] %vm305, %v4795
      %p4828 = scmp.lt.s32.totalorder %s17, 1
      %s4829 = scalar_select %p4828, %s17, 1
      %s4830 = smul.addr %s4829, 32
      %s4831 = smul.addr %s4830, 8
      %s4832 = scalar_lea.vmem %s6, %s4831
      // Predicated region
      $region45: #{merge_forward.1} parent=43 // pred_check
        %p4833 = pneg %p171
      $region46: #{merge_forward.1} parent=43 // pred_check_branch
        %4835 = sbr.rel (%p4833) target = $region48
      $region47: #{merge_forward.1} parent=43 // pred_region
        _
      $region48: #{merge_forward.1} parent=43 // pred_fallthru
        _
    $region44: #{merge_forward.1} parent=5 // pred_fallthru
      _
    %p4836 = scmp.le.s32.totalorder 2, %s12
    // Predicated region
    $region49: #{merge_forward.1} parent=5 // pred_check
      %p4837 = pneg %p4836
    $region50: #{merge_forward.1} parent=5 // pred_check_branch
      %4839 = sbr.rel (%p4837) target = $region52
    $region51: #{merge_forward.1} parent=5 // pred_region
      %s4840 = ssub.s32 %s12, 2
      // Predicated region
      $region53: #{merge_forward.1} parent=51 // pred_check
        %p4841 = pneg %p177
      $region54: #{merge_forward.1} parent=51 // pred_check_branch
        %4843 = sbr.rel (%p4841) target = $region56
      $region55: #{merge_forward.1} parent=51 // pred_region
        %p4844 = scmp.lt.s32.totalorder %s18, 1
        %s4845 = scalar_select %p4844, %s18, 1
        %s4846 = smul.addr %s4845, 32
        %s4847 = smul.addr %s4846, 8
        %s4848 = scalar_lea.vmem %s6, %s4847
      $region56: #{merge_forward.1} parent=51 // pred_fallthru
        _
    $region52: #{merge_forward.1} parent=5 // pred_fallthru
      _
  $region6: #{merge_forward.1} parent=0 // loop_footer
    %s16 = sadd.s32 1, %s12
  $region7: #{merge_forward.1} parent=0 // loop_footer_branch
    %11 = sbr.rel target = $region3
  $region8: #{merge_forward.1} parent=0 // loop_exit
    _

</llo_original>
